<compile_context>
chip_gen: v5e
topology: v5e:2x2
jax: 0.10.0
libtpu: 0.0.40
codegen_flags: <defaults>
</compile_context>

<pallas_src>
import functools

import jax
import jax.numpy as jnp
from jax import lax
from jax.experimental import pallas as pl
from jax.experimental.pallas import tpu as pltpu


# ---------------------------------------------------------------------------
# Small helpers
# ---------------------------------------------------------------------------
def _round_up(x, m):
    return ((x + m - 1) // m) * m


@functools.lru_cache(maxsize=None)
def _vmem_limit_bytes():
    """Scoped-VMEM cap derived from the chip: 32 MiB on 64-MiB-VMEM parts (v7x),
    48 MiB on 128-MiB parts (v5e/v6e)."""
    cap = 128 * 1024 * 1024
    try:
        cap = int(getattr(pltpu.get_tpu_info(), "vmem_capacity_bytes", cap))
    except Exception:
        pass
    return (32 if cap <= 64 * 1024 * 1024 else 48) * 1024 * 1024


def _compiler_params(sem):
    return pltpu.CompilerParams(dimension_semantics=sem,
                                vmem_limit_bytes=_vmem_limit_bytes())


def _silu(y):
    # sigmoid(y) == 0.5*tanh(0.5*y) + 0.5 : one EUP op instead of exp + reciprocal.
    return y * (0.5 * jnp.tanh(0.5 * y) + 0.5)


def _choose_m_tiling(m):
    """Row tile for the 1x1 matmuls: multiple of 8, <= 512, prefer an exact divisor
    of m (no pad rows) and >= 4 grid steps for pipelining / megacore sharding."""
    cap = min(512, m)
    if m >= 32:
        cap = min(cap, _round_up((m + 3) // 4, 8))
    cap = max(8, (cap // 8) * 8)
    for t in range(cap, 7, -8):
        if m % t == 0:
            return t, m
    return cap, _round_up(m, cap)


def _choose_tn(c):
    if c <= 512:
        return c                      # full width: one lane-dense store per tile
    for t in (512, 256, 128):
        if c % t == 0:
            return t
    return c


def _choose_th(h, w):
    """Image-row tile for the 3x3: th | h, th*w ~<= 512 rows, >= 2 tiles when possible."""
    target = max(1, 512 // max(w, 1))
    best = 1
    for t in range(1, h + 1):
        if h % t == 0 and t <= target:
            best = t
    if best == h and h > 1:           # make sure the pipeline has > 1 step per image
        for t in range(h - 1, 0, -1):
            if h % t == 0:
                best = t
                break
    return best


# ---------------------------------------------------------------------------
# Pallas kernels
# ---------------------------------------------------------------------------
def _mm_bn_silu_kernel(x_ref, w_ref, s_ref, b_ref, o_ref):
    """Fused 1x1 conv (+ folded eval-mode BN) + SiLU on a (tm, tn) tile."""
    y = jnp.dot(x_ref[...], w_ref[...], preferred_element_type=jnp.float32)
    o_ref[...] = _silu(y * s_ref[...] + b_ref[...]).astype(o_ref.dtype)


def _bottleneck_kernel(y_ref, yprev_ref, ynext_ref, w1_ref, s1_ref, b1_ref,
                       w9_ref, s2_ref, b2_ref, o_ref, hid_ref, slab_ref,
                       *, th, w, c, shortcut):
    """Fused YOLOv5 Bottleneck on a th-image-row tile of the packed [y1 | y2] buffer.

    b_cv1 (1x1+BN+SiLU) is computed on the tile plus a one-row halo (never written to
    HBM), then the 3x3+BN+SiLU runs as a single K-packed (th*w, 9c) x (9c, c) dot from
    a VMEM-staged im2col slab, the y1 residual is added and y2 passes through packed.
    Zero padding of the 3x3 is emulated with row/column masks so only interior rows
    are ever computed or stored (no padded ring, no XLA slicing afterwards).
    """
    j = pl.program_id(1)
    first = j == 0
    last = j == pl.num_programs(1) - 1
    rows_out = th * w
    rows_hid = (th + 2) * w

    y_main = y_ref[...]                                   # (th*w, 2c) bf16
    y1_main = y_main[:, :c]

    # --- fused b_cv1 (1x1) over the tile rows + one halo image-row on each side ---
    rows = jnp.concatenate([yprev_ref[:, :c], y1_main, ynext_ref[:, :c]], axis=0)
    hid = jnp.dot(rows, w1_ref[...], preferred_element_type=jnp.float32)
    hid = _silu(hid * s1_ref[...] + b1_ref[...])

    # halo rows that fall outside the image must behave like true zero padding of hid
    ridx = lax.broadcasted_iota(jnp.int32, (rows_hid, 1), 0)
    keep = jnp.logical_and(
        jnp.logical_or(ridx >= w, jnp.logical_not(first)),
        jnp.logical_or(ridx < rows_hid - w, jnp.logical_not(last)))
    hid = jnp.where(keep, hid, 0.0).astype(jnp.bfloat16)

    # stage hid with one extra zero row at each end so every tap is a static in-bounds slice
    hid_ref[0:1, :] = jnp.zeros((1, c), jnp.bfloat16)
    hid_ref[rows_hid + 1:rows_hid + 2, :] = jnp.zeros((1, c), jnp.bfloat16)
    hid_ref[1:rows_hid + 1, :] = hid

    # column masks emulate the zero padding in W for the left / right taps
    xpos = lax.broadcasted_iota(jnp.int32, (rows_out, 1), 0) % w
    not_left = xpos != 0
    not_right = xpos != (w - 1)

    # --- K-packed im2col slab: one (th*w, 9c) x (9c, c) dot fills the MXU depth ---
    for kh in range(3):
        for kw in range(3):
            t = kh * 3 + kw
            tap = hid_ref[kh * w + kw: kh * w + kw + rows_out, :]
            if kw == 0:
                tap = jnp.where(not_left, tap, 0.0)
            elif kw == 2:
                tap = jnp.where(not_right, tap, 0.0)
            slab_ref[:, t * c:(t + 1) * c] = tap

    acc = jnp.dot(slab_ref[...], w9_ref[...], preferred_element_type=jnp.float32)
    ynew = _silu(acc * s2_ref[...] + b2_ref[...])
    if shortcut:
        ynew = ynew + y1_main.astype(jnp.float32)

    # packed output: updated y1 in the low channels, y2 passes straight through
    o_ref[:, :c] = ynew.astype(o_ref.dtype)
    o_ref[:, c:] = y_main[:, c:]


# ---------------------------------------------------------------------------
# Conv wrappers (layout glue only; all math is inside the Pallas kernels)
# ---------------------------------------------------------------------------
def conv1x1_bn_silu(x2d, w_t, scale, bias, out_dtype=jnp.bfloat16):
    """silu((x @ w) * scale + bias), tiled over rows and output channels."""
    m, cin = x2d.shape
    cout = w_t.shape[1]
    tm, m_pad = _choose_m_tiling(m)
    tn = _choose_tn(cout)
    xb = x2d if m_pad == m else jnp.pad(x2d, ((0, m_pad - m), (0, 0)))
    out = pl.pallas_call(
        _mm_bn_silu_kernel,
        out_shape=jax.ShapeDtypeStruct((m_pad, cout), out_dtype),
        grid=(m_pad // tm, cout // tn),
        in_specs=[
            pl.BlockSpec((tm, cin), lambda i, j: (i, 0)),
            pl.BlockSpec((cin, tn), lambda i, j: (0, j)),
            pl.BlockSpec((1, tn), lambda i, j: (0, j)),
            pl.BlockSpec((1, tn), lambda i, j: (0, j)),
        ],
        out_specs=pl.BlockSpec((tm, tn), lambda i, j: (i, j)),
        compiler_params=_compiler_params(("parallel", "parallel")),
    )(xb, w_t, scale, bias)
    return out if m_pad == m else out[:m]


def bottleneck_fused(y_packed, spatial, b_cv1, b_cv2, shortcut=True):
    """One YOLOv5 Bottleneck applied to the y1 half of the packed flat (M, 2c_) buffer."""
    n, h, w = spatial
    m, c2p = y_packed.shape
    c = c2p // 2
    assert m == n * h * w
    if w % 8 != 0:
        raise NotImplementedError("feature-map width must be a multiple of 8")

    w1_, s1_, b1_ = b_cv1
    w9_, s2_, b2_ = b_cv2
    w1t = jnp.asarray(w1_, jnp.float32).reshape(c, c).T.astype(jnp.bfloat16)
    # (cout, cin, kh, kw) -> (kh, kw, cin, cout) -> (9*cin, cout), matching the slab layout
    w9t = jnp.transpose(jnp.asarray(w9_, jnp.float32), (2, 3, 1, 0)).reshape(9 * c, c)
    w9t = w9t.astype(jnp.bfloat16)
    s1 = s1_.reshape(1, c).astype(jnp.float32)
    b1 = b1_.reshape(1, c).astype(jnp.float32)
    s2 = s2_.reshape(1, c).astype(jnp.float32)
    b2 = b2_.reshape(1, c).astype(jnp.float32)

    th = _choose_th(h, w)
    nt = h // th
    kern = functools.partial(_bottleneck_kernel, th=th, w=w, c=c, shortcut=shortcut)

    return pl.pallas_call(
        kern,
        out_shape=jax.ShapeDtypeStruct((m, c2p), jnp.bfloat16),
        grid=(n, nt),
        in_specs=[
            # main tile: th image rows of batch b (flat rows, block index in th*w units)
            pl.BlockSpec((th * w, c2p), lambda b, j: (b * nt + j, 0)),
            # one-image-row halo above / below (clamped at the image border; block in w units)
            pl.BlockSpec((w, c2p),
                         lambda b, j: (b * h + jnp.maximum(j * th - 1, 0), 0)),
            pl.BlockSpec((w, c2p),
                         lambda b, j: (b * h + jnp.minimum(j * th + th, h - 1), 0)),
            pl.BlockSpec((c, c), lambda b, j: (0, 0)),        # b_cv1 weight
            pl.BlockSpec((1, c), lambda b, j: (0, 0)),
            pl.BlockSpec((1, c), lambda b, j: (0, 0)),
            pl.BlockSpec((9 * c, c), lambda b, j: (0, 0)),    # 3x3 weight (K-packed)
            pl.BlockSpec((1, c), lambda b, j: (0, 0)),
            pl.BlockSpec((1, c), lambda b, j: (0, 0)),
        ],
        out_specs=pl.BlockSpec((th * w, c2p), lambda b, j: (b * nt + j, 0)),
        scratch_shapes=[
            pltpu.VMEM(((th + 2) * w + 2, c), jnp.bfloat16),   # zero-framed hid
            pltpu.VMEM((th * w, 9 * c), jnp.bfloat16),         # K-packed im2col slab
        ],
        compiler_params=_compiler_params(("parallel", "parallel")),
    )(y_packed, y_packed, y_packed, w1t, s1, b1, w9t, s2, b2)


# ---------------------------------------------------------------------------
# Parameter construction (deterministic, synthetic) + BN folding (eval mode)
# ---------------------------------------------------------------------------
def _fold_bn(gamma, beta, mean, var, eps=1e-5):
    scale = gamma / jnp.sqrt(var + eps)
    bias = beta - mean * scale
    return scale, bias


def _make_conv_block(key, c_out, c_in, k):
    kw, kg, kb, km, kv = jax.random.split(key, 5)
    w = jax.random.normal(kw, (c_out, c_in, k, k), jnp.float32) * 0.1
    gamma = 1.0 + 0.1 * jax.random.normal(kg, (c_out,), jnp.float32)
    beta = 0.05 * jax.random.normal(kb, (c_out,), jnp.float32)
    mean = 0.1 * jax.random.normal(km, (c_out,), jnp.float32)
    var = 1.0 + jnp.abs(0.1 * jax.random.normal(kv, (c_out,), jnp.float32))
    scale, bias = _fold_bn(gamma, beta, mean, var)
    return (w, scale, bias)


def make_c3_params(key, c1, c2, n=1, e=0.5):
    c_ = int(c2 * e)
    keys = jax.random.split(key, 3 + 2 * n)
    params = {
        "cv1": _make_conv_block(keys[0], c_, c1, 1),
        "cv2": _make_conv_block(keys[1], c_, c1, 1),
        "cv3": _make_conv_block(keys[2], c2, 2 * c_, 1),
        "m": [],
    }
    for i in range(n):
        b_cv1 = _make_conv_block(keys[3 + 2 * i], c_, c_, 1)   # Bottleneck, e=1.0
        b_cv2 = _make_conv_block(keys[4 + 2 * i], c_, c_, 3)
        params["m"].append((b_cv1, b_cv2))
    return params


def _prep_1x1(w_oihw, scale, bias):
    cout, cin = w_oihw.shape[0], w_oihw.shape[1]
    w_t = jnp.asarray(w_oihw, jnp.float32).reshape(cout, cin).T.astype(jnp.bfloat16)
    return (w_t, scale.reshape(1, cout).astype(jnp.float32),
            bias.reshape(1, cout).astype(jnp.float32))


# ---------------------------------------------------------------------------
# C3 forward (NCHW in / NCHW out) and the autoShape tensor fast-path
# ---------------------------------------------------------------------------
def c3_forward(x_nchw, params, shortcut=True):
    n, c1, h, w = x_nchw.shape
    w1_, s1_, b1_ = params["cv1"]
    w2_, s2_, b2_ = params["cv2"]
    c_ = w1_.shape[0]

    # cv1 and cv2 packed side by side -> one matmul, one lane-dense (M, 2c_) output.
    w12 = jnp.concatenate([jnp.asarray(w1_, jnp.float32).reshape(c_, c1),
                           jnp.asarray(w2_, jnp.float32).reshape(c_, c1)],
                          axis=0).T.astype(jnp.bfloat16)
    s12 = jnp.concatenate([s1_, s2_]).reshape(1, 2 * c_).astype(jnp.float32)
    b12 = jnp.concatenate([b1_, b2_]).reshape(1, 2 * c_).astype(jnp.float32)

    x2d = jnp.transpose(x_nchw, (0, 2, 3, 1)).reshape(n * h * w, c1).astype(jnp.bfloat16)
    y = conv1x1_bn_silu(x2d, w12, s12, b12)          # packed [y1 | y2], flat (M, 2c_)

    for (b_cv1, b_cv2) in params["m"]:               # Bottleneck chain (updates y1 half)
        y = bottleneck_fused(y, (n, h, w), b_cv1, b_cv2, shortcut=shortcut)

    # concat(m(y1), y2) + cv3 is just a 1x1 matmul on the packed buffer (no HBM concat).
    w3t, s3, b3 = _prep_1x1(*params["cv3"])
    c2 = params["cv3"][0].shape[0]
    out = conv1x1_bn_silu(y, w3t, s3, b3)            # (M, c2) bf16 writeback
    out = jnp.transpose(out.reshape(n, h, w, c2), (0, 3, 1, 2))
    return out.astype(jnp.float32)


def autoshape_forward(x, params, shortcut=True):
    """autoShape.forward fast-path for tensor input: run the wrapped model directly."""
    return c3_forward(x.astype(jnp.float32), params, shortcut=shortcut)


# ---------------------------------------------------------------------------
# Pure-JAX reference (same dtype policy: bf16 operands, f32 accumulate)
# ---------------------------------------------------------------------------
def _ref_conv(x_nhwc, w_oihw, scale, bias, residual=None, out_dtype=jnp.bfloat16):
    cout, cin, k, _ = w_oihw.shape
    xb = x_nhwc.astype(jnp.bfloat16)
    wb = jnp.asarray(w_oihw, jnp.float32).astype(jnp.bfloat16)
    if k == 1:
        y = jnp.einsum("nhwc,oc->nhwo", xb, wb.reshape(cout, cin),
                       preferred_element_type=jnp.float32)
    else:
        n, h, w, _ = x_nhwc.shape
        xp = jnp.pad(xb, ((0, 0), (1, 1), (1, 1), (0, 0)))
        y = jnp.zeros((n, h, w, cout), jnp.float32)
        for kh in range(3):
            for kw in range(3):
                y = y + jnp.einsum("nhwc,oc->nhwo",
                                   xp[:, kh:kh + h, kw:kw + w, :], wb[:, :, kh, kw],
                                   preferred_element_type=jnp.float32)
    y = y * scale + bias
    y = y * jax.nn.sigmoid(y)
    if residual is not None:
        y = y + residual.astype(jnp.float32)
    return y.astype(out_dtype)


def c3_forward_ref(x_nchw, params, shortcut=True):
    x = jnp.transpose(x_nchw, (0, 2, 3, 1))
    y1 = _ref_conv(x, *params["cv1"])
    y2 = _ref_conv(x, *params["cv2"])
    for (b_cv1, b_cv2) in params["m"]:
        hid = _ref_conv(y1, *b_cv1)
        y1 = _ref_conv(hid, *b_cv2, residual=y1 if shortcut else None)
    cat = jnp.concatenate([y1, y2], axis=-1)
    out = _ref_conv(cat, *params["cv3"], out_dtype=jnp.float32)
    return jnp.transpose(out, (0, 3, 1, 2))


if __name__ == "__main__":
    key = jax.random.PRNGKey(0)
    k_x, k_p = jax.random.split(key)

    c1, c2, nb = 4, 8, 1
    x = jax.random.normal(k_x, (2, c1, 16, 16), jnp.float32)   # NCHW, like PyTorch
    params = make_c3_params(k_p, c1, c2, n=nb, e=0.5)

    out = jax.block_until_ready(jax.jit(autoshape_forward)(x, params))
    assert out.shape == (2, c2, 16, 16)
    assert bool(jnp.all(jnp.isfinite(out)))

    ref = c3_forward_ref(x, params, shortcut=True)
    max_err = float(jnp.max(jnp.abs(out - ref)))
    assert max_err < 2e-2, f"mismatch vs reference: {max_err}"

    print("KERNEL_OK")
</pallas_src>

<mosaic_0001>
module attributes {stable_mosaic.version = 11 : i64} {
  func.func @_mm_bn_silu_kernel(%arg0: i32, %arg1: i32, %arg2: memref<128x8xbf16, #tpu.memory_space<vmem>>, %arg3: memref<8x8xbf16, #tpu.memory_space<vmem>>, %arg4: memref<1x8xf32, #tpu.memory_space<vmem>>, %arg5: memref<1x8xf32, #tpu.memory_space<vmem>>, %arg6: memref<128x8xbf16, #tpu.memory_space<vmem>>) attributes {dimension_semantics = [#tpu.dimension_semantics<parallel>, #tpu.dimension_semantics<parallel>], iteration_bounds = array<i64: 4, 1>, scalar_prefetch = 0 : i64, scratch_operands = 0 : i64, tpu.core_type = #tpu.core_type<tc>, window_params = [{transform_indices = @transform_0, window_bounds = array<i64: 128, 8>}, {transform_indices = @transform_1, window_bounds = array<i64: 8, 8>}, {transform_indices = @transform_2, window_bounds = array<i64: 1, 8>}, {transform_indices = @transform_3, window_bounds = array<i64: 1, 8>}, {transform_indices = @transform_4, window_bounds = array<i64: 128, 8>}]} {
    %c0 = arith.constant 0 : index
    %c0_0 = arith.constant 0 : index
    %0 = vector.load %arg2[%c0, %c0_0] : memref<128x8xbf16, #tpu.memory_space<vmem>>, vector<128x8xbf16>
    %c0_1 = arith.constant 0 : index
    %c0_2 = arith.constant 0 : index
    %1 = vector.load %arg3[%c0_1, %c0_2] : memref<8x8xbf16, #tpu.memory_space<vmem>>, vector<8x8xbf16>
    %cst = arith.constant dense<0.000000e+00> : vector<128x8xf32>
    %2 = tpu.matmul %0, %1, %cst {dimension_numbers = #tpu.dot_dimension_numbers<[1], [0], [0], [1], [0, 0, 1, 1], [], []>} : vector<128x8xbf16>, vector<8x8xbf16>, vector<128x8xf32> -> vector<128x8xf32>
    %c0_3 = arith.constant 0 : index
    %c0_4 = arith.constant 0 : index
    %3 = vector.load %arg4[%c0_3, %c0_4] : memref<1x8xf32, #tpu.memory_space<vmem>>, vector<1x8xf32>
    %4 = vector.broadcast %3 : vector<1x8xf32> to vector<128x8xf32>
    %5 = arith.mulf %2, %4 : vector<128x8xf32>
    %c0_5 = arith.constant 0 : index
    %c0_6 = arith.constant 0 : index
    %6 = vector.load %arg5[%c0_5, %c0_6] : memref<1x8xf32, #tpu.memory_space<vmem>>, vector<1x8xf32>
    %7 = vector.broadcast %6 : vector<1x8xf32> to vector<128x8xf32>
    %8 = arith.addf %5, %7 : vector<128x8xf32>
    %cst_7 = arith.constant 5.000000e-01 : f32
    %9 = vector.broadcast %cst_7 : f32 to vector<128x8xf32>
    %10 = arith.mulf %9, %8 : vector<128x8xf32>
    %11 = math.tanh %10 : vector<128x8xf32>
    %cst_8 = arith.constant 5.000000e-01 : f32
    %12 = vector.broadcast %cst_8 : f32 to vector<128x8xf32>
    %13 = arith.mulf %12, %11 : vector<128x8xf32>
    %cst_9 = arith.constant 5.000000e-01 : f32
    %14 = vector.broadcast %cst_9 : f32 to vector<128x8xf32>
    %15 = arith.addf %13, %14 : vector<128x8xf32>
    %16 = arith.mulf %8, %15 : vector<128x8xf32>
    %17 = arith.truncf %16 : vector<128x8xf32> to vector<128x8xbf16>
    %c0_10 = arith.constant 0 : index
    %c0_11 = arith.constant 0 : index
    %18 = vector.load %arg6[%c0_10, %c0_11] : memref<128x8xbf16, #tpu.memory_space<vmem>>, vector<128x8xbf16>
    tpu.vector_store %arg6[%c0_10, %c0_11], %17 {strides = array<i32>} : memref<128x8xbf16, #tpu.memory_space<vmem>>, vector<128x8xbf16>,
    return
  }
  func.func @transform_0(%arg0: i32, %arg1: i32) -> (i32, i32) {
    %c0_i32 = arith.constant 0 : i32
    %c0_i32_0 = arith.constant 0 : i32
    return %arg0, %c0_i32 : i32, i32
  }
  func.func @transform_1(%arg0: i32, %arg1: i32) -> (i32, i32) {
    %c0_i32 = arith.constant 0 : i32
    %c0_i32_0 = arith.constant 0 : i32
    return %c0_i32, %arg1 : i32, i32
  }
  func.func @transform_2(%arg0: i32, %arg1: i32) -> (i32, i32) {
    %c0_i32 = arith.constant 0 : i32
    %c0_i32_0 = arith.constant 0 : i32
    return %c0_i32, %arg1 : i32, i32
  }
  func.func @transform_3(%arg0: i32, %arg1: i32) -> (i32, i32) {
    %c0_i32 = arith.constant 0 : i32
    %c0_i32_0 = arith.constant 0 : i32
    return %c0_i32, %arg1 : i32, i32
  }
  func.func @transform_4(%arg0: i32, %arg1: i32) -> (i32, i32) {
    %c0_i32 = arith.constant 0 : i32
    return %arg0, %arg1 : i32, i32
  }
}

module attributes {stable_mosaic.version = 11 : i64} {
  func.func @_mm_bn_silu_kernel(%arg0: i32, %arg1: i32, %arg2: memref<128x4xbf16, #tpu.memory_space<vmem>>, %arg3: memref<4x8xbf16, #tpu.memory_space<vmem>>, %arg4: memref<1x8xf32, #tpu.memory_space<vmem>>, %arg5: memref<1x8xf32, #tpu.memory_space<vmem>>, %arg6: memref<128x8xbf16, #tpu.memory_space<vmem>>) attributes {dimension_semantics = [#tpu.dimension_semantics<parallel>, #tpu.dimension_semantics<parallel>], iteration_bounds = array<i64: 4, 1>, scalar_prefetch = 0 : i64, scratch_operands = 0 : i64, tpu.core_type = #tpu.core_type<tc>, window_params = [{transform_indices = @transform_0, window_bounds = array<i64: 128, 4>}, {transform_indices = @transform_1, window_bounds = array<i64: 4, 8>}, {transform_indices = @transform_2, window_bounds = array<i64: 1, 8>}, {transform_indices = @transform_3, window_bounds = array<i64: 1, 8>}, {transform_indices = @transform_4, window_bounds = array<i64: 128, 8>}]} {
    %c0 = arith.constant 0 : index
    %c0_0 = arith.constant 0 : index
    %0 = vector.load %arg2[%c0, %c0_0] : memref<128x4xbf16, #tpu.memory_space<vmem>>, vector<128x4xbf16>
    %c0_1 = arith.constant 0 : index
    %c0_2 = arith.constant 0 : index
    %1 = vector.load %arg3[%c0_1, %c0_2] : memref<4x8xbf16, #tpu.memory_space<vmem>>, vector<4x8xbf16>
    %cst = arith.constant dense<0.000000e+00> : vector<128x8xf32>
    %2 = tpu.matmul %0, %1, %cst {dimension_numbers = #tpu.dot_dimension_numbers<[1], [0], [0], [1], [0, 0, 1, 1], [], []>} : vector<128x4xbf16>, vector<4x8xbf16>, vector<128x8xf32> -> vector<128x8xf32>
    %c0_3 = arith.constant 0 : index
    %c0_4 = arith.constant 0 : index
    %3 = vector.load %arg4[%c0_3, %c0_4] : memref<1x8xf32, #tpu.memory_space<vmem>>, vector<1x8xf32>
    %4 = vector.broadcast %3 : vector<1x8xf32> to vector<128x8xf32>
    %5 = arith.mulf %2, %4 : vector<128x8xf32>
    %c0_5 = arith.constant 0 : index
    %c0_6 = arith.constant 0 : index
    %6 = vector.load %arg5[%c0_5, %c0_6] : memref<1x8xf32, #tpu.memory_space<vmem>>, vector<1x8xf32>
    %7 = vector.broadcast %6 : vector<1x8xf32> to vector<128x8xf32>
    %8 = arith.addf %5, %7 : vector<128x8xf32>
    %cst_7 = arith.constant 5.000000e-01 : f32
    %9 = vector.broadcast %cst_7 : f32 to vector<128x8xf32>
    %10 = arith.mulf %9, %8 : vector<128x8xf32>
    %11 = math.tanh %10 : vector<128x8xf32>
    %cst_8 = arith.constant 5.000000e-01 : f32
    %12 = vector.broadcast %cst_8 : f32 to vector<128x8xf32>
    %13 = arith.mulf %12, %11 : vector<128x8xf32>
    %cst_9 = arith.constant 5.000000e-01 : f32
    %14 = vector.broadcast %cst_9 : f32 to vector<128x8xf32>
    %15 = arith.addf %13, %14 : vector<128x8xf32>
    %16 = arith.mulf %8, %15 : vector<128x8xf32>
    %17 = arith.truncf %16 : vector<128x8xf32> to vector<128x8xbf16>
    %c0_10 = arith.constant 0 : index
    %c0_11 = arith.constant 0 : index
    %18 = vector.load %arg6[%c0_10, %c0_11] : memref<128x8xbf16, #tpu.memory_space<vmem>>, vector<128x8xbf16>
    tpu.vector_store %arg6[%c0_10, %c0_11], %17 {strides = array<i32>} : memref<128x8xbf16, #tpu.memory_space<vmem>>, vector<128x8xbf16>,
    return
  }
  func.func @transform_0(%arg0: i32, %arg1: i32) -> (i32, i32) {
    %c0_i32 = arith.constant 0 : i32
    %c0_i32_0 = arith.constant 0 : i32
    return %arg0, %c0_i32 : i32, i32
  }
  func.func @transform_1(%arg0: i32, %arg1: i32) -> (i32, i32) {
    %c0_i32 = arith.constant 0 : i32
    %c0_i32_0 = arith.constant 0 : i32
    return %c0_i32, %arg1 : i32, i32
  }
  func.func @transform_2(%arg0: i32, %arg1: i32) -> (i32, i32) {
    %c0_i32 = arith.constant 0 : i32
    %c0_i32_0 = arith.constant 0 : i32
    return %c0_i32, %arg1 : i32, i32
  }
  func.func @transform_3(%arg0: i32, %arg1: i32) -> (i32, i32) {
    %c0_i32 = arith.constant 0 : i32
    %c0_i32_0 = arith.constant 0 : i32
    return %c0_i32, %arg1 : i32, i32
  }
  func.func @transform_4(%arg0: i32, %arg1: i32) -> (i32, i32) {
    %c0_i32 = arith.constant 0 : i32
    return %arg0, %arg1 : i32, i32
  }
}

module attributes {stable_mosaic.version = 11 : i64} {
  func.func @_bottleneck_kernel(%arg0: i32, %arg1: i32, %arg2: memref<128x8xbf16, #tpu.memory_space<vmem>>, %arg3: memref<16x8xbf16, #tpu.memory_space<vmem>>, %arg4: memref<16x8xbf16, #tpu.memory_space<vmem>>, %arg5: memref<4x4xbf16, #tpu.memory_space<vmem>>, %arg6: memref<1x4xf32, #tpu.memory_space<vmem>>, %arg7: memref<1x4xf32, #tpu.memory_space<vmem>>, %arg8: memref<36x4xbf16, #tpu.memory_space<vmem>>, %arg9: memref<1x4xf32, #tpu.memory_space<vmem>>, %arg10: memref<1x4xf32, #tpu.memory_space<vmem>>, %arg11: memref<128x8xbf16, #tpu.memory_space<vmem>>, %arg12: memref<162x4xbf16, #tpu.memory_space<vmem>>, %arg13: memref<128x36xbf16, #tpu.memory_space<vmem>>) attributes {dimension_semantics = [#tpu.dimension_semantics<parallel>, #tpu.dimension_semantics<parallel>], iteration_bounds = array<i64: 2, 2>, scalar_prefetch = 0 : i64, scratch_operands = 2 : i64, tpu.core_type = #tpu.core_type<tc>, window_params = [{transform_indices = @transform_0, window_bounds = array<i64: 128, 8>}, {transform_indices = @transform_1, window_bounds = array<i64: 16, 8>}, {transform_indices = @transform_2, window_bounds = array<i64: 16, 8>}, {pipeline_mode = #tpu.pipeline_mode<synchronous>, transform_indices = @transform_3, window_bounds = array<i64: 4, 4>}, {pipeline_mode = #tpu.pipeline_mode<synchronous>, transform_indices = @transform_4, window_bounds = array<i64: 1, 4>}, {pipeline_mode = #tpu.pipeline_mode<synchronous>, transform_indices = @transform_5, window_bounds = array<i64: 1, 4>}, {pipeline_mode = #tpu.pipeline_mode<synchronous>, transform_indices = @transform_6, window_bounds = array<i64: 36, 4>}, {pipeline_mode = #tpu.pipeline_mode<synchronous>, transform_indices = @transform_7, window_bounds = array<i64: 1, 4>}, {pipeline_mode = #tpu.pipeline_mode<synchronous>, transform_indices = @transform_8, window_bounds = array<i64: 1, 4>}, {transform_indices = @transform_9, window_bounds = array<i64: 128, 8>}]} {
    %c0_i32 = arith.constant 0 : i32
    %0 = arith.cmpi eq, %arg1, %c0_i32 : i32
    %c1_i32 = arith.constant 1 : i32
    %1 = arith.cmpi eq, %arg1, %c1_i32 : i32
    %c0 = arith.constant 0 : index
    %c0_0 = arith.constant 0 : index
    %2 = vector.load %arg2[%c0, %c0_0] : memref<128x8xbf16, #tpu.memory_space<vmem>>, vector<128x8xbf16>
    %3 = vector.extract_strided_slice %2 {offsets = [0, 0], sizes = [128, 4], strides = [1, 1]} : vector<128x8xbf16> to vector<128x4xbf16>
    %c0_1 = arith.constant 0 : index
    %c0_2 = arith.constant 0 : index
    %4 = vector.load %arg3[%c0_1, %c0_2] : memref<16x8xbf16, #tpu.memory_space<vmem>>, vector<16x4xbf16>
    %c0_3 = arith.constant 0 : index
    %c0_4 = arith.constant 0 : index
    %5 = vector.load %arg4[%c0_3, %c0_4] : memref<16x8xbf16, #tpu.memory_space<vmem>>, vector<16x4xbf16>
    %6 = tpu.concatenate %4, %3, %5 in 0 : vector<16x4xbf16>, vector<128x4xbf16>, vector<16x4xbf16> -> vector<160x4xbf16>
    %c0_5 = arith.constant 0 : index
    %c0_6 = arith.constant 0 : index
    %7 = vector.load %arg5[%c0_5, %c0_6] : memref<4x4xbf16, #tpu.memory_space<vmem>>, vector<4x4xbf16>
    %cst = arith.constant dense<0.000000e+00> : vector<160x4xf32>
    %8 = tpu.matmul %6, %7, %cst {dimension_numbers = #tpu.dot_dimension_numbers<[1], [0], [0], [1], [0, 0, 1, 1], [], []>} : vector<160x4xbf16>, vector<4x4xbf16>, vector<160x4xf32> -> vector<160x4xf32>
    %c0_7 = arith.constant 0 : index
    %c0_8 = arith.constant 0 : index
    %9 = vector.load %arg6[%c0_7, %c0_8] : memref<1x4xf32, #tpu.memory_space<vmem>>, vector<1x4xf32>
    %10 = vector.broadcast %9 : vector<1x4xf32> to vector<160x4xf32>
    %11 = arith.mulf %8, %10 : vector<160x4xf32>
    %c0_9 = arith.constant 0 : index
    %c0_10 = arith.constant 0 : index
    %12 = vector.load %arg7[%c0_9, %c0_10] : memref<1x4xf32, #tpu.memory_space<vmem>>, vector<1x4xf32>
    %13 = vector.broadcast %12 : vector<1x4xf32> to vector<160x4xf32>
    %14 = arith.addf %11, %13 : vector<160x4xf32>
    %cst_11 = arith.constant 5.000000e-01 : f32
    %15 = vector.broadcast %cst_11 : f32 to vector<160x4xf32>
    %16 = arith.mulf %15, %14 : vector<160x4xf32>
    %17 = math.tanh %16 : vector<160x4xf32>
    %cst_12 = arith.constant 5.000000e-01 : f32
    %18 = vector.broadcast %cst_12 : f32 to vector<160x4xf32>
    %19 = arith.mulf %18, %17 : vector<160x4xf32>
    %cst_13 = arith.constant 5.000000e-01 : f32
    %20 = vector.broadcast %cst_13 : f32 to vector<160x4xf32>
    %21 = arith.addf %19, %20 : vector<160x4xf32>
    %22 = arith.mulf %14, %21 : vector<160x4xf32>
    %23 = tpu.iota {dimensions = array<i32: 0>} : vector<160x1xi32>
    %c16_i32 = arith.constant 16 : i32
    %24 = vector.broadcast %c16_i32 : i32 to vector<160x1xi32>
    %25 = arith.cmpi sge, %23, %24 : vector<160x1xi32>
    %true = arith.constant true
    %26 = arith.xori %0, %true : i1
    %27 = vector.broadcast %26 : i1 to vector<160x1xi1>
    %28 = arith.ori %25, %27 : vector<160x1xi1>
    %c144_i32 = arith.constant 144 : i32
    %29 = vector.broadcast %c144_i32 : i32 to vector<160x1xi32>
    %30 = arith.cmpi slt, %23, %29 : vector<160x1xi32>
    %true_14 = arith.constant true
    %31 = arith.xori %1, %true_14 : i1
    %32 = vector.broadcast %31 : i1 to vector<160x1xi1>
    %33 = arith.ori %30, %32 : vector<160x1xi1>
    %34 = arith.andi %28, %33 : vector<160x1xi1>
    %cst_15 = arith.constant 0.000000e+00 : f32
    %35 = vector.shape_cast %34 : vector<160x1xi1> to vector<160x1xi1>
    %36 = vector.broadcast %35 : vector<160x1xi1> to vector<160x4xi1>
    %37 = vector.broadcast %cst_15 : f32 to vector<160x4xf32>
    %38 = arith.select %36, %22, %37 : vector<160x4xi1>, vector<160x4xf32>
    %39 = arith.truncf %38 : vector<160x4xf32> to vector<160x4xbf16>
    %cst_16 = arith.constant 0.000000e+00 : bf16
    %40 = vector.broadcast %cst_16 : bf16 to vector<1x4xbf16>
    %c0_17 = arith.constant 0 : index
    %c0_18 = arith.constant 0 : index
    %41 = vector.load %arg12[%c0_17, %c0_18] : memref<162x4xbf16, #tpu.memory_space<vmem>>, vector<1x4xbf16>
    tpu.vector_store %arg12[%c0_17, %c0_18], %40 {strides = array<i32>} : memref<162x4xbf16, #tpu.memory_space<vmem>>, vector<1x4xbf16>,
    %cst_19 = arith.constant 0.000000e+00 : bf16
    %42 = vector.broadcast %cst_19 : bf16 to vector<1x4xbf16>
    %c161 = arith.constant 161 : index
    %c0_20 = arith.constant 0 : index
    %43 = vector.load %arg12[%c161, %c0_20] : memref<162x4xbf16, #tpu.memory_space<vmem>>, vector<1x4xbf16>
    tpu.vector_store %arg12[%c161, %c0_20], %42 {strides = array<i32>} : memref<162x4xbf16, #tpu.memory_space<vmem>>, vector<1x4xbf16>,
    %c1 = arith.constant 1 : index
    %c0_21 = arith.constant 0 : index
    %44 = vector.load %arg12[%c1, %c0_21] : memref<162x4xbf16, #tpu.memory_space<vmem>>, vector<160x4xbf16>
    tpu.vector_store %arg12[%c1, %c0_21], %39 {strides = array<i32>} : memref<162x4xbf16, #tpu.memory_space<vmem>>, vector<160x4xbf16>,
    %45 = tpu.iota {dimensions = array<i32: 0>} : vector<128x1xi32>
    %c16_i32_22 = arith.constant 16 : i32
    %c0_i32_23 = arith.constant 0 : i32
    %46 = arith.cmpi eq, %c16_i32_22, %c0_i32_23 : i32
    %c1_i32_24 = arith.constant 1 : i32
    %47 = arith.select %46, %c1_i32_24, %c16_i32_22 : i32
    %48 = vector.broadcast %47 : i32 to vector<128x1xi32>
    %49 = arith.remsi %45, %48 : vector<128x1xi32>
    %c0_i32_25 = arith.constant 0 : i32
    %50 = vector.broadcast %c0_i32_25 : i32 to vector<128x1xi32>
    %51 = arith.cmpi ne, %49, %50 : vector<128x1xi32>
    %c0_i32_26 = arith.constant 0 : i32
    %52 = vector.broadcast %c0_i32_26 : i32 to vector<128x1xi32>
    %53 = arith.cmpi slt, %49, %52 : vector<128x1xi32>
    %c0_i32_27 = arith.constant 0 : i32
    %54 = arith.cmpi slt, %47, %c0_i32_27 : i32
    %55 = vector.broadcast %54 : i1 to vector<128x1xi1>
    %56 = vector.broadcast %55 : vector<128x1xi1> to vector<128x1xi1>
    %57 = arith.xori %53, %56 : vector<128x1xi1>
    %58 = arith.andi %57, %51 : vector<128x1xi1>
    %59 = vector.broadcast %47 : i32 to vector<128x1xi32>
    %60 = arith.addi %49, %59 : vector<128x1xi32>
    %61 = arith.select %58, %60, %49 : vector<128x1xi1>, vector<128x1xi32>
    %c0_i32_28 = arith.constant 0 : i32
    %62 = vector.broadcast %c0_i32_28 : i32 to vector<128x1xi32>
    %63 = arith.cmpi ne, %61, %62 : vector<128x1xi32>
    %c15_i32 = arith.constant 15 : i32
    %64 = vector.broadcast %c15_i32 : i32 to vector<128x1xi32>
    %65 = arith.cmpi ne, %61, %64 : vector<128x1xi32>
    %c0_29 = arith.constant 0 : index
    %c0_30 = arith.constant 0 : index
    %66 = vector.load %arg12[%c0_29, %c0_30] : memref<162x4xbf16, #tpu.memory_space<vmem>>, vector<128x4xbf16>
    %cst_31 = arith.constant 0.000000e+00 : f32
    %67 = arith.truncf %cst_31 : f32 to bf16
    %68 = vector.shape_cast %63 : vector<128x1xi1> to vector<128x1xi1>
    %69 = vector.broadcast %68 : vector<128x1xi1> to vector<128x4xi1>
    %70 = vector.broadcast %67 : bf16 to vector<128x4xbf16>
    %71 = arith.select %69, %66, %70 : vector<128x4xi1>, vector<128x4xbf16>
    %c0_32 = arith.constant 0 : index
    %c0_33 = arith.constant 0 : index
    %72 = vector.load %arg13[%c0_32, %c0_33] : memref<128x36xbf16, #tpu.memory_space<vmem>>, vector<128x4xbf16>
    tpu.vector_store %arg13[%c0_32, %c0_33], %71 {strides = array<i32>} : memref<128x36xbf16, #tpu.memory_space<vmem>>, vector<128x4xbf16>,
    %c1_34 = arith.constant 1 : index
    %c0_35 = arith.constant 0 : index
    %73 = vector.load %arg12[%c1_34, %c0_35] : memref<162x4xbf16, #tpu.memory_space<vmem>>, vector<128x4xbf16>
    %c0_36 = arith.constant 0 : index
    %c4 = arith.constant 4 : index
    %74 = vector.load %arg13[%c0_36, %c4] : memref<128x36xbf16, #tpu.memory_space<vmem>>, vector<128x4xbf16>
    tpu.vector_store %arg13[%c0_36, %c4], %73 {strides = array<i32>} : memref<128x36xbf16, #tpu.memory_space<vmem>>, vector<128x4xbf16>,
    %c2 = arith.constant 2 : index
    %c0_37 = arith.constant 0 : index
    %75 = vector.load %arg12[%c2, %c0_37] : memref<162x4xbf16, #tpu.memory_space<vmem>>, vector<128x4xbf16>
    %cst_38 = arith.constant 0.000000e+00 : f32
    %76 = arith.truncf %cst_38 : f32 to bf16
    %77 = vector.shape_cast %65 : vector<128x1xi1> to vector<128x1xi1>
    %78 = vector.broadcast %77 : vector<128x1xi1> to vector<128x4xi1>
    %79 = vector.broadcast %76 : bf16 to vector<128x4xbf16>
    %80 = arith.select %78, %75, %79 : vector<128x4xi1>, vector<128x4xbf16>
    %c0_39 = arith.constant 0 : index
    %c8 = arith.constant 8 : index
    %81 = vector.load %arg13[%c0_39, %c8] : memref<128x36xbf16, #tpu.memory_space<vmem>>, vector<128x4xbf16>
    tpu.vector_store %arg13[%c0_39, %c8], %80 {strides = array<i32>} : memref<128x36xbf16, #tpu.memory_space<vmem>>, vector<128x4xbf16>,
    %c16 = arith.constant 16 : index
    %c0_40 = arith.constant 0 : index
    %82 = vector.load %arg12[%c16, %c0_40] : memref<162x4xbf16, #tpu.memory_space<vmem>>, vector<128x4xbf16>
    %cst_41 = arith.constant 0.000000e+00 : f32
    %83 = arith.truncf %cst_41 : f32 to bf16
    %84 = vector.shape_cast %63 : vector<128x1xi1> to vector<128x1xi1>
    %85 = vector.broadcast %84 : vector<128x1xi1> to vector<128x4xi1>
    %86 = vector.broadcast %83 : bf16 to vector<128x4xbf16>
    %87 = arith.select %85, %82, %86 : vector<128x4xi1>, vector<128x4xbf16>
    %c0_42 = arith.constant 0 : index
    %c12 = arith.constant 12 : index
    %88 = vector.load %arg13[%c0_42, %c12] : memref<128x36xbf16, #tpu.memory_space<vmem>>, vector<128x4xbf16>
    tpu.vector_store %arg13[%c0_42, %c12], %87 {strides = array<i32>} : memref<128x36xbf16, #tpu.memory_space<vmem>>, vector<128x4xbf16>,
    %c17 = arith.constant 17 : index
    %c0_43 = arith.constant 0 : index
    %89 = vector.load %arg12[%c17, %c0_43] : memref<162x4xbf16, #tpu.memory_space<vmem>>, vector<128x4xbf16>
    %c0_44 = arith.constant 0 : index
    %c16_45 = arith.constant 16 : index
    %90 = vector.load %arg13[%c0_44, %c16_45] : memref<128x36xbf16, #tpu.memory_space<vmem>>, vector<128x4xbf16>
    tpu.vector_store %arg13[%c0_44, %c16_45], %89 {strides = array<i32>} : memref<128x36xbf16, #tpu.memory_space<vmem>>, vector<128x4xbf16>,
    %c18 = arith.constant 18 : index
    %c0_46 = arith.constant 0 : index
    %91 = vector.load %arg12[%c18, %c0_46] : memref<162x4xbf16, #tpu.memory_space<vmem>>, vector<128x4xbf16>
    %cst_47 = arith.constant 0.000000e+00 : f32
    %92 = arith.truncf %cst_47 : f32 to bf16
    %93 = vector.shape_cast %65 : vector<128x1xi1> to vector<128x1xi1>
    %94 = vector.broadcast %93 : vector<128x1xi1> to vector<128x4xi1>
    %95 = vector.broadcast %92 : bf16 to vector<128x4xbf16>
    %96 = arith.select %94, %91, %95 : vector<128x4xi1>, vector<128x4xbf16>
    %c0_48 = arith.constant 0 : index
    %c20 = arith.constant 20 : index
    %97 = vector.load %arg13[%c0_48, %c20] : memref<128x36xbf16, #tpu.memory_space<vmem>>, vector<128x4xbf16>
    tpu.vector_store %arg13[%c0_48, %c20], %96 {strides = array<i32>} : memref<128x36xbf16, #tpu.memory_space<vmem>>, vector<128x4xbf16>,
    %c32 = arith.constant 32 : index
    %c0_49 = arith.constant 0 : index
    %98 = vector.load %arg12[%c32, %c0_49] : memref<162x4xbf16, #tpu.memory_space<vmem>>, vector<128x4xbf16>
    %cst_50 = arith.constant 0.000000e+00 : f32
    %99 = arith.truncf %cst_50 : f32 to bf16
    %100 = vector.shape_cast %63 : vector<128x1xi1> to vector<128x1xi1>
    %101 = vector.broadcast %100 : vector<128x1xi1> to vector<128x4xi1>
    %102 = vector.broadcast %99 : bf16 to vector<128x4xbf16>
    %103 = arith.select %101, %98, %102 : vector<128x4xi1>, vector<128x4xbf16>
    %c0_51 = arith.constant 0 : index
    %c24 = arith.constant 24 : index
    %104 = vector.load %arg13[%c0_51, %c24] : memref<128x36xbf16, #tpu.memory_space<vmem>>, vector<128x4xbf16>
    tpu.vector_store %arg13[%c0_51, %c24], %103 {strides = array<i32>} : memref<128x36xbf16, #tpu.memory_space<vmem>>, vector<128x4xbf16>,
    %c33 = arith.constant 33 : index
    %c0_52 = arith.constant 0 : index
    %105 = vector.load %arg12[%c33, %c0_52] : memref<162x4xbf16, #tpu.memory_space<vmem>>, vector<128x4xbf16>
    %c0_53 = arith.constant 0 : index
    %c28 = arith.constant 28 : index
    %106 = vector.load %arg13[%c0_53, %c28] : memref<128x36xbf16, #tpu.memory_space<vmem>>, vector<128x4xbf16>
    tpu.vector_store %arg13[%c0_53, %c28], %105 {strides = array<i32>} : memref<128x36xbf16, #tpu.memory_space<vmem>>, vector<128x4xbf16>,
    %c34 = arith.constant 34 : index
    %c0_54 = arith.constant 0 : index
    %107 = vector.load %arg12[%c34, %c0_54] : memref<162x4xbf16, #tpu.memory_space<vmem>>, vector<128x4xbf16>
    %cst_55 = arith.constant 0.000000e+00 : f32
    %108 = arith.truncf %cst_55 : f32 to bf16
    %109 = vector.shape_cast %65 : vector<128x1xi1> to vector<128x1xi1>
    %110 = vector.broadcast %109 : vector<128x1xi1> to vector<128x4xi1>
    %111 = vector.broadcast %108 : bf16 to vector<128x4xbf16>
    %112 = arith.select %110, %107, %111 : vector<128x4xi1>, vector<128x4xbf16>
    %c0_56 = arith.constant 0 : index
    %c32_57 = arith.constant 32 : index
    %113 = vector.load %arg13[%c0_56, %c32_57] : memref<128x36xbf16, #tpu.memory_space<vmem>>, vector<128x4xbf16>
    tpu.vector_store %arg13[%c0_56, %c32_57], %112 {strides = array<i32>} : memref<128x36xbf16, #tpu.memory_space<vmem>>, vector<128x4xbf16>,
    %c0_58 = arith.constant 0 : index
    %c0_59 = arith.constant 0 : index
    %114 = vector.load %arg13[%c0_58, %c0_59] : memref<128x36xbf16, #tpu.memory_space<vmem>>, vector<128x36xbf16>
    %c0_60 = arith.constant 0 : index
    %c0_61 = arith.constant 0 : index
    %115 = vector.load %arg8[%c0_60, %c0_61] : memref<36x4xbf16, #tpu.memory_space<vmem>>, vector<36x4xbf16>
    %cst_62 = arith.constant dense<0.000000e+00> : vector<128x4xf32>
    %116 = tpu.matmul %114, %115, %cst_62 {dimension_numbers = #tpu.dot_dimension_numbers<[1], [0], [0], [1], [0, 0, 1, 1], [], []>} : vector<128x36xbf16>, vector<36x4xbf16>, vector<128x4xf32> -> vector<128x4xf32>
    %c0_63 = arith.constant 0 : index
    %c0_64 = arith.constant 0 : index
    %117 = vector.load %arg9[%c0_63, %c0_64] : memref<1x4xf32, #tpu.memory_space<vmem>>, vector<1x4xf32>
    %118 = vector.broadcast %117 : vector<1x4xf32> to vector<128x4xf32>
    %119 = arith.mulf %116, %118 : vector<128x4xf32>
    %c0_65 = arith.constant 0 : index
    %c0_66 = arith.constant 0 : index
    %120 = vector.load %arg10[%c0_65, %c0_66] : memref<1x4xf32, #tpu.memory_space<vmem>>, vector<1x4xf32>
    %121 = vector.broadcast %120 : vector<1x4xf32> to vector<128x4xf32>
    %122 = arith.addf %119, %121 : vector<128x4xf32>
    %cst_67 = arith.constant 5.000000e-01 : f32
    %123 = vector.broadcast %cst_67 : f32 to vector<128x4xf32>
    %124 = arith.mulf %123, %122 : vector<128x4xf32>
    %125 = math.tanh %124 : vector<128x4xf32>
    %cst_68 = arith.constant 5.000000e-01 : f32
    %126 = vector.broadcast %cst_68 : f32 to vector<128x4xf32>
    %127 = arith.mulf %126, %125 : vector<128x4xf32>
    %cst_69 = arith.constant 5.000000e-01 : f32
    %128 = vector.broadcast %cst_69 : f32 to vector<128x4xf32>
    %129 = arith.addf %127, %128 : vector<128x4xf32>
    %130 = arith.mulf %122, %129 : vector<128x4xf32>
    %131 = arith.extf %3 : vector<128x4xbf16> to vector<128x4xf32>
    %132 = arith.addf %130, %131 : vector<128x4xf32>
    %133 = arith.truncf %132 : vector<128x4xf32> to vector<128x4xbf16>
    %c0_70 = arith.constant 0 : index
    %c0_71 = arith.constant 0 : index
    %134 = vector.load %arg11[%c0_70, %c0_71] : memref<128x8xbf16, #tpu.memory_space<vmem>>, vector<128x4xbf16>
    tpu.vector_store %arg11[%c0_70, %c0_71], %133 {strides = array<i32>} : memref<128x8xbf16, #tpu.memory_space<vmem>>, vector<128x4xbf16>,
    %135 = vector.extract_strided_slice %2 {offsets = [0, 4], sizes = [128, 4], strides = [1, 1]} : vector<128x8xbf16> to vector<128x4xbf16>
    %c0_72 = arith.constant 0 : index
    %c4_73 = arith.constant 4 : index
    %136 = vector.load %arg11[%c0_72, %c4_73] : memref<128x8xbf16, #tpu.memory_space<vmem>>, vector<128x4xbf16>
    tpu.vector_store %arg11[%c0_72, %c4_73], %135 {strides = array<i32>} : memref<128x8xbf16, #tpu.memory_space<vmem>>, vector<128x4xbf16>,
    return
  }
  func.func @transform_0(%arg0: i32, %arg1: i32) -> (i32, i32) {
    %c2_i32 = arith.constant 2 : i32
    %0 = arith.muli %arg0, %c2_i32 : i32
    %1 = arith.addi %0, %arg1 : i32
    %c0_i32 = arith.constant 0 : i32
    %c0_i32_0 = arith.constant 0 : i32
    return %1, %c0_i32 : i32, i32
  }
  func.func @transform_1(%arg0: i32, %arg1: i32) -> (i32, i32) {
    %c16_i32 = arith.constant 16 : i32
    %0 = arith.muli %arg0, %c16_i32 : i32
    %c8_i32 = arith.constant 8 : i32
    %1 = arith.muli %arg1, %c8_i32 : i32
    %c1_i32 = arith.constant 1 : i32
    %2 = arith.subi %1, %c1_i32 : i32
    %c0_i32 = arith.constant 0 : i32
    %3 = arith.maxsi %2, %c0_i32 : i32
    %4 = arith.addi %0, %3 : i32
    %c0_i32_0 = arith.constant 0 : i32
    %c0_i32_1 = arith.constant 0 : i32
    return %4, %c0_i32_0 : i32, i32
  }
  func.func @transform_2(%arg0: i32, %arg1: i32) -> (i32, i32) {
    %c16_i32 = arith.constant 16 : i32
    %0 = arith.muli %arg0, %c16_i32 : i32
    %c8_i32 = arith.constant 8 : i32
    %1 = arith.muli %arg1, %c8_i32 : i32
    %c8_i32_0 = arith.constant 8 : i32
    %2 = arith.addi %1, %c8_i32_0 : i32
    %c15_i32 = arith.constant 15 : i32
    %3 = arith.minsi %2, %c15_i32 : i32
    %4 = arith.addi %0, %3 : i32
    %c0_i32 = arith.constant 0 : i32
    %c0_i32_1 = arith.constant 0 : i32
    return %4, %c0_i32 : i32, i32
  }
  func.func @transform_3(%arg0: i32, %arg1: i32) -> (i32, i32) {
    %c0_i32 = arith.constant 0 : i32
    %c0_i32_0 = arith.constant 0 : i32
    %c0_i32_1 = arith.constant 0 : i32
    return %c0_i32, %c0_i32_0 : i32, i32
  }
  func.func @transform_4(%arg0: i32, %arg1: i32) -> (i32, i32) {
    %c0_i32 = arith.constant 0 : i32
    %c0_i32_0 = arith.constant 0 : i32
    %c0_i32_1 = arith.constant 0 : i32
    return %c0_i32, %c0_i32_0 : i32, i32
  }
  func.func @transform_5(%arg0: i32, %arg1: i32) -> (i32, i32) {
    %c0_i32 = arith.constant 0 : i32
    %c0_i32_0 = arith.constant 0 : i32
    %c0_i32_1 = arith.constant 0 : i32
    return %c0_i32, %c0_i32_0 : i32, i32
  }
  func.func @transform_6(%arg0: i32, %arg1: i32) -> (i32, i32) {
    %c0_i32 = arith.constant 0 : i32
    %c0_i32_0 = arith.constant 0 : i32
    %c0_i32_1 = arith.constant 0 : i32
    return %c0_i32, %c0_i32_0 : i32, i32
  }
  func.func @transform_7(%arg0: i32, %arg1: i32) -> (i32, i32) {
    %c0_i32 = arith.constant 0 : i32
    %c0_i32_0 = arith.constant 0 : i32
    %c0_i32_1 = arith.constant 0 : i32
    return %c0_i32, %c0_i32_0 : i32, i32
  }
  func.func @transform_8(%arg0: i32, %arg1: i32) -> (i32, i32) {
    %c0_i32 = arith.constant 0 : i32
    %c0_i32_0 = arith.constant 0 : i32
    %c0_i32_1 = arith.constant 0 : i32
    return %c0_i32, %c0_i32_0 : i32, i32
  }
  func.func @transform_9(%arg0: i32, %arg1: i32) -> (i32, i32) {
    %c2_i32 = arith.constant 2 : i32
    %0 = arith.muli %arg0, %c2_i32 : i32
    %1 = arith.addi %0, %arg1 : i32
    %c0_i32 = arith.constant 0 : i32
    %c0_i32_0 = arith.constant 0 : i32
    return %1, %c0_i32 : i32, i32
  }
}

</mosaic_0001>

<llo_original>
// kernel: autoshape_forward.5
$region0: #{autoshape_forward.5}
  #allocation0 [shape = 'u32[]', space=smem, size = 0x4, offset = 0x4, fixed_abs, tag = 'smem constant byte address 0x4 - core index']
  #allocation1 [shape = 'u32[72,128]{1,0:T(1,128)}', space=vmem, size = 0x9000, scoped, tag = 'internal scratch']
  %s0 = inlined_call_operand.vmem [shape: bf16[512,8], index: 0, kind: input, shape index: {}]
  %s1 = inlined_call_operand.vmem [shape: bf16[8,8], index: 1, kind: input, shape index: {}]
  %s2 = inlined_call_operand.vmem [shape: f32[1,8], index: 2, kind: input, shape index: {}]
  %s3 = inlined_call_operand.vmem [shape: f32[1,8], index: 3, kind: input, shape index: {}]
  %s4 = inlined_call_operand.vmem [shape: bf16[512,8], index: 4, kind: output, shape index: {}]
  %s5 = sld [smem:[#allocation0]]
  $region49: #{autoshape_forward.5} parent=0
    _
  %s7 = ssub.s32 1, %s5
  %s8 = scalar_select 0, %s7, %s5
  loop: start=0, step=1, limit=6
  $region2: #{autoshape_forward.5} parent=0 // loop_pre_header
    _
  $region3: #{autoshape_forward.5} parent=0 // loop_header
    %s10 = sphi 0, %s14
    %p11 = scmp.ge.s32.totalorder %s10, 6
    %s17 = sphi 0, %s29
    %s18 = sphi 0, %s25
    %s19 = sphi 0, %s17
    %s20 = sphi 0, %s18
    %s21 = sphi 0, %s19
    %s22 = sphi 0, %s20
    %s32 = sphi 0, %s34
    %s35 = sphi 0, %s32
    %s36 = sphi 0, %s35
    %s52 = sphi 0, %s36
    %s58 = sphi 0, %s60
    %s61 = sphi 0, %s58
    %s62 = sphi 0, %s61
    %s78 = sphi 0, %s62
    %s84 = sphi 0, %s86
    %s87 = sphi 0, %s84
    %s88 = sphi 0, %s87
    %s104 = sphi 0, %s88
    %s110 = sphi 0, %s112
    %s113 = sphi 0, %s110
    %s114 = sphi 0, %s113
    %s130 = sphi 0, %s114
    %s138 = sphi 0, %s140
    %s141 = sphi 0, %s138
    %s142 = sphi 0, %s141
    %s158 = sphi 0, %s142
  $region4: #{autoshape_forward.5} parent=0 // loop_header_branch
    %13 = sbr.rel (%p11) target = $region8
  $region5: #{autoshape_forward.5} parent=0 // loop_body
    %s15 = ssub.s32 %s10, 1
    %s16 = ssub.s32 %s10, 2
    %s23 = sadd.s32 1, %s18
    %p24 = scmp.ge.s32.totalorder %s23, 1
    %s25 = scalar_select %p24, 0, %s23
    %s26 = sadd.s32 1, %s17
    %s27 = scalar_select %p24, %s26, %s17
    %p28 = scmp.ge.s32.totalorder %s27, 4
    %s29 = scalar_select %p28, 0, %s27
    %s30 = ssub.s32 %s17, %s29
    %p31 = scmp.eq.s32.totalorder %s30, 0
    %s33 = sadd.s32 %s32, 1
    %s34 = scalar_select %p31, %s32, %s33
    %p37 = pneg %p31
    %p38 = scmp.eq.s32.totalorder %s10, 3
    %p39 = por %p37, %p38
    %p40 = scmp.ne.s32.totalorder %s32, %s35
    %p41 = scmp.eq.s32.totalorder %s10, 0
    %p42 = por %p40, %p41
    %p43 = scmp.ne.s32.totalorder %s32, %s35
    %p44 = scmp.eq.s32.totalorder %s15, 3
    %p45 = por %p43, %p44
    %p46 = scmp.ne.s32.totalorder %s35, %s36
    %p47 = scmp.eq.s32.totalorder %s15, 0
    %p48 = por %p46, %p47
    %p49 = scmp.ne.s32.totalorder %s35, %s36
    %p50 = scmp.eq.s32.totalorder %s16, 3
    %p51 = por %p49, %p50
    %p53 = scmp.ne.s32.totalorder %s36, %s52
    %p54 = scmp.eq.s32.totalorder %s16, 0
    %p55 = por %p53, %p54
    %s56 = ssub.s32 %s18, %s25
    %p57 = scmp.eq.s32.totalorder %s56, 0
    %s59 = sadd.s32 %s58, 1
    %s60 = scalar_select %p57, %s58, %s59
    %p63 = pneg %p57
    %p64 = scmp.eq.s32.totalorder %s10, 3
    %p65 = por %p63, %p64
    %p66 = scmp.ne.s32.totalorder %s58, %s61
    %p67 = scmp.eq.s32.totalorder %s10, 0
    %p68 = por %p66, %p67
    %p69 = scmp.ne.s32.totalorder %s58, %s61
    %p70 = scmp.eq.s32.totalorder %s15, 3
    %p71 = por %p69, %p70
    %p72 = scmp.ne.s32.totalorder %s61, %s62
    %p73 = scmp.eq.s32.totalorder %s15, 0
    %p74 = por %p72, %p73
    %p75 = scmp.ne.s32.totalorder %s61, %s62
    %p76 = scmp.eq.s32.totalorder %s16, 3
    %p77 = por %p75, %p76
    %p79 = scmp.ne.s32.totalorder %s62, %s78
    %p80 = scmp.eq.s32.totalorder %s16, 0
    %p81 = por %p79, %p80
    %s82 = ssub.s32 %s18, %s25
    %p83 = scmp.eq.s32.totalorder %s82, 0
    %s85 = sadd.s32 %s84, 1
    %s86 = scalar_select %p83, %s84, %s85
    %p89 = pneg %p83
    %p90 = scmp.eq.s32.totalorder %s10, 3
    %p91 = por %p89, %p90
    %p92 = scmp.ne.s32.totalorder %s84, %s87
    %p93 = scmp.eq.s32.totalorder %s10, 0
    %p94 = por %p92, %p93
    %p95 = scmp.ne.s32.totalorder %s84, %s87
    %p96 = scmp.eq.s32.totalorder %s15, 3
    %p97 = por %p95, %p96
    %p98 = scmp.ne.s32.totalorder %s87, %s88
    %p99 = scmp.eq.s32.totalorder %s15, 0
    %p100 = por %p98, %p99
    %p101 = scmp.ne.s32.totalorder %s87, %s88
    %p102 = scmp.eq.s32.totalorder %s16, 3
    %p103 = por %p101, %p102
    %p105 = scmp.ne.s32.totalorder %s88, %s104
    %p106 = scmp.eq.s32.totalorder %s16, 0
    %p107 = por %p105, %p106
    %s108 = ssub.s32 %s18, %s25
    %p109 = scmp.eq.s32.totalorder %s108, 0
    %s111 = sadd.s32 %s110, 1
    %s112 = scalar_select %p109, %s110, %s111
    %p115 = pneg %p109
    %p116 = scmp.eq.s32.totalorder %s10, 3
    %p117 = por %p115, %p116
    %p118 = scmp.ne.s32.totalorder %s110, %s113
    %p119 = scmp.eq.s32.totalorder %s10, 0
    %p120 = por %p118, %p119
    %p121 = scmp.ne.s32.totalorder %s110, %s113
    %p122 = scmp.eq.s32.totalorder %s15, 3
    %p123 = por %p121, %p122
    %p124 = scmp.ne.s32.totalorder %s113, %s114
    %p125 = scmp.eq.s32.totalorder %s15, 0
    %p126 = por %p124, %p125
    %p127 = scmp.ne.s32.totalorder %s113, %s114
    %p128 = scmp.eq.s32.totalorder %s16, 3
    %p129 = por %p127, %p128
    %p131 = scmp.ne.s32.totalorder %s114, %s130
    %p132 = scmp.eq.s32.totalorder %s16, 0
    %p133 = por %p131, %p132
    %s134 = ssub.s32 %s17, %s29
    %s135 = ssub.s32 %s18, %s25
    %s136 = sor.u32 %s134, %s135
    %p137 = scmp.eq.s32.totalorder %s136, 0
    %s139 = sadd.s32 %s138, 1
    %s140 = scalar_select %p137, %s138, %s139
    %p143 = pneg %p137
    %p144 = scmp.eq.s32.totalorder %s10, 3
    %p145 = por %p143, %p144
    %p146 = scmp.ne.s32.totalorder %s138, %s141
    %p147 = scmp.eq.s32.totalorder %s10, 0
    %p148 = por %p146, %p147
    %p149 = scmp.ne.s32.totalorder %s138, %s141
    %p150 = scmp.eq.s32.totalorder %s15, 3
    %p151 = por %p149, %p150
    %p152 = scmp.ne.s32.totalorder %s141, %s142
    %p153 = scmp.eq.s32.totalorder %s15, 0
    %p154 = por %p152, %p153
    %p155 = scmp.ne.s32.totalorder %s141, %s142
    %p156 = scmp.eq.s32.totalorder %s16, 3
    %p157 = por %p155, %p156
    %p159 = scmp.ne.s32.totalorder %s142, %s158
    %p160 = scmp.eq.s32.totalorder %s16, 0
    %p161 = por %p159, %p160
    %p162 = scmp.le.s32.totalorder 1, %s10
    %p163 = scmp.lt.s32.totalorder %s10, 5
    %p164 = pnand %p162, %p163
    %p165 = pneg %p164
    // Predicated region
    $region9: #{autoshape_forward.5} parent=5 // pred_check
      _
    $region10: #{autoshape_forward.5} parent=5 // pred_check_branch
      %167 = sbr.rel (%p164) target = $region12
    $region11: #{autoshape_forward.5} parent=5 // pred_region
      %s168 = ssub.s32 %s10, 1
      // Predicated region
      $region13: #{autoshape_forward.5} parent=11 // pred_check
        %p169 = pneg %p74
      $region14: #{autoshape_forward.5} parent=11 // pred_check_branch
        %171 = sbr.rel (%p169) target = $region16
      $region15: #{autoshape_forward.5} parent=11 // pred_region
        %p172 = scmp.lt.s32.totalorder %s20, 0
        %s173 = scalar_select %p172, %s20, 0
        %s174 = smul.addr %s173, 4
        %s175 = scalar_lea.vmem %s1, %s174
      $region16: #{autoshape_forward.5} parent=11 // pred_fallthru
        _
      // Predicated region
      $region17: #{autoshape_forward.5} parent=11 // pred_check
        %p176 = pneg %p100
      $region18: #{autoshape_forward.5} parent=11 // pred_check_branch
        %178 = sbr.rel (%p176) target = $region20
      $region19: #{autoshape_forward.5} parent=11 // pred_region
        %p179 = scmp.lt.s32.totalorder %s20, 0
        %s180 = scalar_select %p179, %s20, 0
        %s181 = scalar_lea.vmem %s2, %s180
      $region20: #{autoshape_forward.5} parent=11 // pred_fallthru
        _
      // Predicated region
      $region21: #{autoshape_forward.5} parent=11 // pred_check
        %p182 = pneg %p126
      $region22: #{autoshape_forward.5} parent=11 // pred_check_branch
        %184 = sbr.rel (%p182) target = $region24
      $region23: #{autoshape_forward.5} parent=11 // pred_region
        %p185 = scmp.lt.s32.totalorder %s20, 0
        %s186 = scalar_select %p185, %s20, 0
        %s187 = scalar_lea.vmem %s3, %s186
      $region24: #{autoshape_forward.5} parent=11 // pred_fallthru
        _
    $region12: #{autoshape_forward.5} parent=5 // pred_fallthru
      _
    %p188 = scmp.lt.s32.totalorder %s10, 4
    // Predicated region
    $region25: #{autoshape_forward.5} parent=5 // pred_check
      %p189 = pneg %p188
    $region26: #{autoshape_forward.5} parent=5 // pred_check_branch
      %191 = sbr.rel (%p189) target = $region28
    $region27: #{autoshape_forward.5} parent=5 // pred_region
      // Predicated region
      $region29: #{autoshape_forward.5} parent=27 // pred_check
        %p192 = pneg %p42
      $region30: #{autoshape_forward.5} parent=27 // pred_check_branch
        %194 = sbr.rel (%p192) target = $region32
      $region31: #{autoshape_forward.5} parent=27 // pred_region
        %s195 = smul.u32 16, %s17
        %p196 = scmp.lt.s32.totalorder %s195, 63
        %s197 = scalar_select %p196, %s195, 63
        %s198 = smul.addr %s197, 4
        %s199 = scalar_lea.vmem %s0, %s198
        %s200 = smul.u32 16, %s17
      $region32: #{autoshape_forward.5} parent=27 // pred_fallthru
        _
    $region28: #{autoshape_forward.5} parent=5 // pred_fallthru
      _
    %p201 = scmp.le.s32.totalorder 1, %s10
    %p202 = scmp.lt.s32.totalorder %s10, 5
    %p203 = pnand %p201, %p202
    %p204 = pneg %p203
    // Predicated region
    $region33: #{autoshape_forward.5} parent=5 // pred_check
      _
    $region34: #{autoshape_forward.5} parent=5 // pred_check_branch
      %206 = sbr.rel (%p203) target = $region36
    $region35: #{autoshape_forward.5} parent=5 // pred_region
      %s207 = ssub.s32 %s10, 1
      %s208 = smul.u32 16, %s19
      %p209 = scmp.lt.s32.totalorder %s208, 63
      %s210 = scalar_select %p209, %s208, 63
      %s211 = smul.addr %s210, 4
      %s212 = scalar_lea.vmem %s0, %s211
      %p213 = pneg %p48
      %p214 = pneg %p45
      %p215 = scmp.lt.s32.totalorder %s20, 0
      %s216 = scalar_select %p215, %s20, 0
      %s217 = smul.addr %s216, 4
      %s218 = scalar_lea.vmem %s1, %s217
      %p219 = pneg %p74
      %p220 = pneg %p71
      %p221 = scmp.lt.s32.totalorder %s20, 0
      %s222 = scalar_select %p221, %s20, 0
      %s223 = scalar_lea.vmem %s2, %s222
      %p224 = pneg %p100
      %p225 = pneg %p97
      %p226 = scmp.lt.s32.totalorder %s20, 0
      %s227 = scalar_select %p226, %s20, 0
      %s228 = scalar_lea.vmem %s3, %s227
      %p229 = pneg %p126
      %p230 = pneg %p123
      %p231 = pneg %p154
      %p232 = pneg %p151
      %s233 = smul.u32 16, %s19
      %p234 = scmp.lt.s32.totalorder %s233, 63
      %s235 = scalar_select %p234, %s233, 63
      %p236 = scmp.lt.s32.totalorder %s20, 0
      %s237 = scalar_select %p236, %s20, 0
      %s238 = sadd.s32 %s237, %s235
      %s239 = smul.addr %s238, 4
      %s240 = scalar_lea.vmem %s4, %s239
      %s241 = smul.u32 16, %s19
      %p242 = scmp.lt.s32.totalorder %s241, 63
      %s243 = scalar_select %p242, %s241, 63
      %s244 = smul.addr %s243, 4
      %s245 = scalar_lea.vmem %s0, %s244
      %s246 = smul.u32 16, %s19
      %p247 = scmp.lt.s32.totalorder %s20, 0
      %s248 = scalar_select %p247, %s20, 0
      %s249 = smul.addr %s248, 4
      %s250 = scalar_lea.vmem %s1, %s249
      %p251 = scmp.lt.s32.totalorder %s20, 0
      %s252 = scalar_select %p251, %s20, 0
      %s253 = scalar_lea.vmem %s2, %s252
      %p254 = scmp.lt.s32.totalorder %s20, 0
      %s255 = scalar_select %p254, %s20, 0
      %s256 = scalar_lea.vmem %s3, %s255
      %s257 = smul.u32 16, %s19
      %p258 = scmp.lt.s32.totalorder %s257, 63
      %s259 = scalar_select %p258, %s257, 63
      %p260 = scmp.lt.s32.totalorder %s20, 0
      %s261 = scalar_select %p260, %s20, 0
      %s262 = sadd.s32 %s261, %s259
      %s263 = smul.addr %s262, 4
      %s264 = scalar_lea.vmem %s4, %s263
      %s265 = smul.u32 16, %s19
      %v267 = vld [vmem:[%s245] sm:$0xf]
      %v268 = vld [vmem:[%s245 + $0x4] sm:$0xf]
      %v269 = vld [vmem:[%s245 + $0x8] sm:$0xf]
      %v270 = vld [vmem:[%s245 + $0xc] sm:$0xf]
      %v271 = vld [vmem:[%s245 + $0x10] sm:$0xf]
      %v272 = vld [vmem:[%s245 + $0x14] sm:$0xf]
      %v273 = vld [vmem:[%s245 + $0x18] sm:$0xf]
      %v274 = vld [vmem:[%s245 + $0x1c] sm:$0xf]
      %v275 = vld [vmem:[%s245 + $0x20] sm:$0xf]
      %v276 = vld [vmem:[%s245 + $0x24] sm:$0xf]
      %v277 = vld [vmem:[%s245 + $0x28] sm:$0xf]
      %v278 = vld [vmem:[%s245 + $0x2c] sm:$0xf]
      %v279 = vld [vmem:[%s245 + $0x30] sm:$0xf]
      %v280 = vld [vmem:[%s245 + $0x34] sm:$0xf]
      %v281 = vld [vmem:[%s245 + $0x38] sm:$0xf]
      %v282 = vld [vmem:[%s245 + $0x3c] sm:$0xf]
      %v283 = vld [vmem:[%s250] sm:$0xf]
      %v300 = vunpack.c.l.b16 %v267
      %v301 = vunpack.c.l.b16 %v268
      %v302 = vunpack.c.l.b16 %v269
      %v303 = vunpack.c.l.b16 %v270
      %v304 = vunpack.c.l.b16 %v271
      %v305 = vunpack.c.l.b16 %v272
      %v306 = vunpack.c.l.b16 %v273
      %v307 = vunpack.c.l.b16 %v274
      %v308 = vunpack.c.l.b16 %v275
      %v309 = vunpack.c.l.b16 %v276
      %v310 = vunpack.c.l.b16 %v277
      %v311 = vunpack.c.l.b16 %v278
      %v312 = vunpack.c.l.b16 %v279
      %v313 = vunpack.c.l.b16 %v280
      %v314 = vunpack.c.l.b16 %v281
      %v315 = vunpack.c.l.b16 %v282
      %v316 = vpack.c.b16 %v301, %v300
      %v317 = vpack.c.b16 %v303, %v302
      %v318 = vpack.c.b16 %v305, %v304
      %v319 = vpack.c.b16 %v307, %v306
      %v320 = vpack.c.b16 %v309, %v308
      %v321 = vpack.c.b16 %v311, %v310
      %v322 = vpack.c.b16 %v313, %v312
      %v323 = vpack.c.b16 %v315, %v314
      %vm324 = vcmask 64512
      %v326 = vsel %vm324, %v316, 0
      %v329 = vsel %vm324, %v317, 0
      %v332 = vsel %vm324, %v318, 0
      %v335 = vsel %vm324, %v319, 0
      %v338 = vsel %vm324, %v320, 0
      %v341 = vsel %vm324, %v321, 0
      %v344 = vsel %vm324, %v322, 0
      %v347 = vsel %vm324, %v323, 0
      %vm349 = vcmask 1043456
      %v351 = vsel %vm349, %v283, 0
      %353 = vmatpush.bf16.msra.mxu0 0
      %354 = vmatpush.bf16.msra.mxu0 0
      %355 = vmatpush.bf16.msra.mxu0 0
      %356 = vmatpush.bf16.msra.mxu0 0
      %357 = vmatpush.bf16.msra.mxu0 0
      %358 = vmatpush.bf16.msra.mxu0 0
      %359 = vmatpush.bf16.msra.mxu0 0
      %360 = vmatpush.bf16.msra.mxu0 %v351
      %361 = vmatmul.bf16.gmra.mxu0 %v326
      %v362 = vpop.f32.mrf.mxu0
      %v363 = vadd.f32 0.0, %v362
      %v364 = vpop.f32.mrf.mxu0
      %v365 = vadd.f32 0.0, %v364
      %366 = vmatmul.bf16.gmra.mxu0 %v329
      %v367 = vpop.f32.mrf.mxu0
      %v368 = vadd.f32 0.0, %v367
      %v369 = vpop.f32.mrf.mxu0
      %v370 = vadd.f32 0.0, %v369
      %371 = vmatmul.bf16.gmra.mxu0 %v332
      %v372 = vpop.f32.mrf.mxu0
      %v373 = vadd.f32 0.0, %v372
      %v374 = vpop.f32.mrf.mxu0
      %v375 = vadd.f32 0.0, %v374
      %376 = vmatmul.bf16.gmra.mxu0 %v335
      %v377 = vpop.f32.mrf.mxu0
      %v378 = vadd.f32 0.0, %v377
      %v379 = vpop.f32.mrf.mxu0
      %v380 = vadd.f32 0.0, %v379
      %381 = vmatmul.bf16.gmra.mxu0 %v338
      %v382 = vpop.f32.mrf.mxu0
      %v383 = vadd.f32 0.0, %v382
      %v384 = vpop.f32.mrf.mxu0
      %v385 = vadd.f32 0.0, %v384
      %386 = vmatmul.bf16.gmra.mxu0 %v341
      %v387 = vpop.f32.mrf.mxu0
      %v388 = vadd.f32 0.0, %v387
      %v389 = vpop.f32.mrf.mxu0
      %v390 = vadd.f32 0.0, %v389
      %391 = vmatmul.bf16.gmra.mxu0 %v344
      %v392 = vpop.f32.mrf.mxu0
      %v393 = vadd.f32 0.0, %v392
      %v394 = vpop.f32.mrf.mxu0
      %v395 = vadd.f32 0.0, %v394
      %396 = vmatmul.bf16.gmra.mxu0 %v347
      %v397 = vpop.f32.mrf.mxu0
      %v398 = vadd.f32 0.0, %v397
      %v399 = vpop.f32.mrf.mxu0
      %v400 = vadd.f32 0.0, %v399
      %401 = vdwg.mxu0
      %v402 = vld [vmem:[%s253] sm:$0x1]
      %v404 = vperm.slane %v402, 0
      %v406 = vmul.f32 %v363, %v404
      %v407 = vmul.f32 %v365, %v404
      %v408 = vmul.f32 %v368, %v404
      %v409 = vmul.f32 %v370, %v404
      %v410 = vmul.f32 %v373, %v404
      %v411 = vmul.f32 %v375, %v404
      %v412 = vmul.f32 %v378, %v404
      %v413 = vmul.f32 %v380, %v404
      %v414 = vmul.f32 %v383, %v404
      %v415 = vmul.f32 %v385, %v404
      %v416 = vmul.f32 %v388, %v404
      %v417 = vmul.f32 %v390, %v404
      %v418 = vmul.f32 %v393, %v404
      %v419 = vmul.f32 %v395, %v404
      %v420 = vmul.f32 %v398, %v404
      %v421 = vmul.f32 %v400, %v404
      %v422 = vld [vmem:[%s256] sm:$0x1]
      %v424 = vperm.slane %v422, 0
      %v426 = vadd.f32 %v406, %v424
      %v427 = vadd.f32 %v407, %v424
      %v428 = vadd.f32 %v408, %v424
      %v429 = vadd.f32 %v409, %v424
      %v430 = vadd.f32 %v410, %v424
      %v431 = vadd.f32 %v411, %v424
      %v432 = vadd.f32 %v412, %v424
      %v433 = vadd.f32 %v413, %v424
      %v434 = vadd.f32 %v414, %v424
      %v435 = vadd.f32 %v415, %v424
      %v436 = vadd.f32 %v416, %v424
      %v437 = vadd.f32 %v417, %v424
      %v438 = vadd.f32 %v418, %v424
      %v439 = vadd.f32 %v419, %v424
      %v440 = vadd.f32 %v420, %v424
      %v441 = vadd.f32 %v421, %v424
      %v442 = vmul.f32 %v426, 0.5
      %v443 = vmul.f32 %v427, 0.5
      %v444 = vmul.f32 %v428, 0.5
      %v445 = vmul.f32 %v429, 0.5
      %v446 = vmul.f32 %v430, 0.5
      %v447 = vmul.f32 %v431, 0.5
      %v448 = vmul.f32 %v432, 0.5
      %v449 = vmul.f32 %v433, 0.5
      %v450 = vmul.f32 %v434, 0.5
      %v451 = vmul.f32 %v435, 0.5
      %v452 = vmul.f32 %v436, 0.5
      %v453 = vmul.f32 %v437, 0.5
      %v454 = vmul.f32 %v438, 0.5
      %v455 = vmul.f32 %v439, 0.5
      %v456 = vmul.f32 %v440, 0.5
      %v457 = vmul.f32 %v441, 0.5
      %v458 = vtanh.pop %v442
      %v459 = vtanh.pop %v443
      %v460 = vtanh.pop %v444
      %v461 = vtanh.pop %v445
      %v462 = vtanh.pop %v446
      %v463 = vtanh.pop %v447
      %v464 = vtanh.pop %v448
      %v465 = vtanh.pop %v449
      %v466 = vtanh.pop %v450
      %v467 = vtanh.pop %v451
      %v468 = vtanh.pop %v452
      %v469 = vtanh.pop %v453
      %v470 = vtanh.pop %v454
      %v471 = vtanh.pop %v455
      %v472 = vtanh.pop %v456
      %v473 = vtanh.pop %v457
      %v474 = vmul.f32 %v458, 0.5
      %v475 = vmul.f32 %v459, 0.5
      %v476 = vmul.f32 %v460, 0.5
      %v477 = vmul.f32 %v461, 0.5
      %v478 = vmul.f32 %v462, 0.5
      %v479 = vmul.f32 %v463, 0.5
      %v480 = vmul.f32 %v464, 0.5
      %v481 = vmul.f32 %v465, 0.5
      %v482 = vmul.f32 %v466, 0.5
      %v483 = vmul.f32 %v467, 0.5
      %v484 = vmul.f32 %v468, 0.5
      %v485 = vmul.f32 %v469, 0.5
      %v486 = vmul.f32 %v470, 0.5
      %v487 = vmul.f32 %v471, 0.5
      %v488 = vmul.f32 %v472, 0.5
      %v489 = vmul.f32 %v473, 0.5
      %v490 = vadd.f32 %v474, 0.5
      %v491 = vadd.f32 %v475, 0.5
      %v492 = vadd.f32 %v476, 0.5
      %v493 = vadd.f32 %v477, 0.5
      %v494 = vadd.f32 %v478, 0.5
      %v495 = vadd.f32 %v479, 0.5
      %v496 = vadd.f32 %v480, 0.5
      %v497 = vadd.f32 %v481, 0.5
      %v498 = vadd.f32 %v482, 0.5
      %v499 = vadd.f32 %v483, 0.5
      %v500 = vadd.f32 %v484, 0.5
      %v501 = vadd.f32 %v485, 0.5
      %v502 = vadd.f32 %v486, 0.5
      %v503 = vadd.f32 %v487, 0.5
      %v504 = vadd.f32 %v488, 0.5
      %v505 = vadd.f32 %v489, 0.5
      %v506 = vmul.f32 %v426, %v490
      %v507 = vmul.f32 %v427, %v491
      %v508 = vmul.f32 %v428, %v492
      %v509 = vmul.f32 %v429, %v493
      %v510 = vmul.f32 %v430, %v494
      %v511 = vmul.f32 %v431, %v495
      %v512 = vmul.f32 %v432, %v496
      %v513 = vmul.f32 %v433, %v497
      %v514 = vmul.f32 %v434, %v498
      %v515 = vmul.f32 %v435, %v499
      %v516 = vmul.f32 %v436, %v500
      %v517 = vmul.f32 %v437, %v501
      %v518 = vmul.f32 %v438, %v502
      %v519 = vmul.f32 %v439, %v503
      %v520 = vmul.f32 %v440, %v504
      %v521 = vmul.f32 %v441, %v505
      %v522 = vpack.c.bf16 %v506, %v506
      %v523 = vpack.c.bf16 %v507, %v507
      %v524 = vpack.c.bf16 %v508, %v508
      %v525 = vpack.c.bf16 %v509, %v509
      %v526 = vpack.c.bf16 %v510, %v510
      %v527 = vpack.c.bf16 %v511, %v511
      %v528 = vpack.c.bf16 %v512, %v512
      %v529 = vpack.c.bf16 %v513, %v513
      %v530 = vpack.c.bf16 %v514, %v514
      %v531 = vpack.c.bf16 %v515, %v515
      %v532 = vpack.c.bf16 %v516, %v516
      %v533 = vpack.c.bf16 %v517, %v517
      %v534 = vpack.c.bf16 %v518, %v518
      %v535 = vpack.c.bf16 %v519, %v519
      %v536 = vpack.c.bf16 %v520, %v520
      %v537 = vpack.c.bf16 %v521, %v521
      %vm538 = vcmask 60416
      %539 = vst.msk [vmem:[%s264] sm:$0xf] %vm538, %v522
      %540 = vst.msk [vmem:[%s264 + $0x4] sm:$0xf] %vm538, %v523
      %541 = vst.msk [vmem:[%s264 + $0x8] sm:$0xf] %vm538, %v524
      %542 = vst.msk [vmem:[%s264 + $0xc] sm:$0xf] %vm538, %v525
      %543 = vst.msk [vmem:[%s264 + $0x10] sm:$0xf] %vm538, %v526
      %544 = vst.msk [vmem:[%s264 + $0x14] sm:$0xf] %vm538, %v527
      %545 = vst.msk [vmem:[%s264 + $0x18] sm:$0xf] %vm538, %v528
      %546 = vst.msk [vmem:[%s264 + $0x1c] sm:$0xf] %vm538, %v529
      %547 = vst.msk [vmem:[%s264 + $0x20] sm:$0xf] %vm538, %v530
      %548 = vst.msk [vmem:[%s264 + $0x24] sm:$0xf] %vm538, %v531
      %549 = vst.msk [vmem:[%s264 + $0x28] sm:$0xf] %vm538, %v532
      %550 = vst.msk [vmem:[%s264 + $0x2c] sm:$0xf] %vm538, %v533
      %551 = vst.msk [vmem:[%s264 + $0x30] sm:$0xf] %vm538, %v534
      %552 = vst.msk [vmem:[%s264 + $0x34] sm:$0xf] %vm538, %v535
      %553 = vst.msk [vmem:[%s264 + $0x38] sm:$0xf] %vm538, %v536
      %554 = vst.msk [vmem:[%s264 + $0x3c] sm:$0xf] %vm538, %v537
      %s555 = smul.u32 16, %s19
      %p556 = scmp.lt.s32.totalorder %s555, 63
      %s557 = scalar_select %p556, %s555, 63
      %p558 = scmp.lt.s32.totalorder %s20, 0
      %s559 = scalar_select %p558, %s20, 0
      %s560 = sadd.s32 %s559, %s557
      %s561 = smul.addr %s560, 4
      %s562 = scalar_lea.vmem %s4, %s561
      // Predicated region
      $region37: #{autoshape_forward.5} parent=35 // pred_check
        %p563 = pneg %p151
      $region38: #{autoshape_forward.5} parent=35 // pred_check_branch
        %565 = sbr.rel (%p563) target = $region40
      $region39: #{autoshape_forward.5} parent=35 // pred_region
        %s566 = smul.u32 16, %s19
      $region40: #{autoshape_forward.5} parent=35 // pred_fallthru
        _
    $region36: #{autoshape_forward.5} parent=5 // pred_fallthru
      _
    %p567 = scmp.le.s32.totalorder 2, %s10
    // Predicated region
    $region41: #{autoshape_forward.5} parent=5 // pred_check
      %p568 = pneg %p567
    $region42: #{autoshape_forward.5} parent=5 // pred_check_branch
      %570 = sbr.rel (%p568) target = $region44
    $region43: #{autoshape_forward.5} parent=5 // pred_region
      %s571 = ssub.s32 %s10, 2
      // Predicated region
      $region45: #{autoshape_forward.5} parent=43 // pred_check
        %p572 = pneg %p157
      $region46: #{autoshape_forward.5} parent=43 // pred_check_branch
        %574 = sbr.rel (%p572) target = $region48
      $region47: #{autoshape_forward.5} parent=43 // pred_region
        %s575 = smul.u32 16, %s21
        %p576 = scmp.lt.s32.totalorder %s575, 63
        %s577 = scalar_select %p576, %s575, 63
        %p578 = scmp.lt.s32.totalorder %s22, 0
        %s579 = scalar_select %p578, %s22, 0
        %s580 = sadd.s32 %s579, %s577
        %s581 = smul.addr %s580, 4
        %s582 = scalar_lea.vmem %s4, %s581
      $region48: #{autoshape_forward.5} parent=43 // pred_fallthru
        _
    $region44: #{autoshape_forward.5} parent=5 // pred_fallthru
      _
  $region6: #{autoshape_forward.5} parent=0 // loop_footer
    %s14 = sadd.s32 1, %s10
  $region7: #{autoshape_forward.5} parent=0 // loop_footer_branch
    %9 = sbr.rel target = $region3
  $region8: #{autoshape_forward.5} parent=0 // loop_exit
    _

// kernel: autoshape_forward.3
$region0: #{autoshape_forward.3}
  #allocation0 [shape = 'u32[]', space=smem, size = 0x4, offset = 0x4, fixed_abs, tag = 'smem constant byte address 0x4 - core index']
  #allocation1 [shape = 'u32[72,128]{1,0:T(1,128)}', space=vmem, size = 0x9000, scoped, tag = 'internal scratch']
  %s0 = inlined_call_operand.vmem [shape: bf16[512,4], index: 0, kind: input, shape index: {}]
  %s1 = inlined_call_operand.vmem [shape: bf16[4,8], index: 1, kind: input, shape index: {}]
  %s2 = inlined_call_operand.vmem [shape: f32[1,8], index: 2, kind: input, shape index: {}]
  %s3 = inlined_call_operand.vmem [shape: f32[1,8], index: 3, kind: input, shape index: {}]
  %s4 = inlined_call_operand.vmem [shape: bf16[512,8], index: 4, kind: output, shape index: {}]
  %s5 = sld [smem:[#allocation0]]
  $region49: #{autoshape_forward.3} parent=0
    _
  %s7 = ssub.s32 1, %s5
  %s8 = scalar_select 0, %s7, %s5
  loop: start=0, step=1, limit=6
  $region2: #{autoshape_forward.3} parent=0 // loop_pre_header
    _
  $region3: #{autoshape_forward.3} parent=0 // loop_header
    %s10 = sphi 0, %s14
    %p11 = scmp.ge.s32.totalorder %s10, 6
    %s17 = sphi 0, %s29
    %s18 = sphi 0, %s25
    %s19 = sphi 0, %s17
    %s20 = sphi 0, %s18
    %s21 = sphi 0, %s19
    %s22 = sphi 0, %s20
    %s32 = sphi 0, %s34
    %s35 = sphi 0, %s32
    %s36 = sphi 0, %s35
    %s52 = sphi 0, %s36
    %s58 = sphi 0, %s60
    %s61 = sphi 0, %s58
    %s62 = sphi 0, %s61
    %s78 = sphi 0, %s62
    %s84 = sphi 0, %s86
    %s87 = sphi 0, %s84
    %s88 = sphi 0, %s87
    %s104 = sphi 0, %s88
    %s110 = sphi 0, %s112
    %s113 = sphi 0, %s110
    %s114 = sphi 0, %s113
    %s130 = sphi 0, %s114
    %s138 = sphi 0, %s140
    %s141 = sphi 0, %s138
    %s142 = sphi 0, %s141
    %s158 = sphi 0, %s142
  $region4: #{autoshape_forward.3} parent=0 // loop_header_branch
    %13 = sbr.rel (%p11) target = $region8
  $region5: #{autoshape_forward.3} parent=0 // loop_body
    %s15 = ssub.s32 %s10, 1
    %s16 = ssub.s32 %s10, 2
    %s23 = sadd.s32 1, %s18
    %p24 = scmp.ge.s32.totalorder %s23, 1
    %s25 = scalar_select %p24, 0, %s23
    %s26 = sadd.s32 1, %s17
    %s27 = scalar_select %p24, %s26, %s17
    %p28 = scmp.ge.s32.totalorder %s27, 4
    %s29 = scalar_select %p28, 0, %s27
    %s30 = ssub.s32 %s17, %s29
    %p31 = scmp.eq.s32.totalorder %s30, 0
    %s33 = sadd.s32 %s32, 1
    %s34 = scalar_select %p31, %s32, %s33
    %p37 = pneg %p31
    %p38 = scmp.eq.s32.totalorder %s10, 3
    %p39 = por %p37, %p38
    %p40 = scmp.ne.s32.totalorder %s32, %s35
    %p41 = scmp.eq.s32.totalorder %s10, 0
    %p42 = por %p40, %p41
    %p43 = scmp.ne.s32.totalorder %s32, %s35
    %p44 = scmp.eq.s32.totalorder %s15, 3
    %p45 = por %p43, %p44
    %p46 = scmp.ne.s32.totalorder %s35, %s36
    %p47 = scmp.eq.s32.totalorder %s15, 0
    %p48 = por %p46, %p47
    %p49 = scmp.ne.s32.totalorder %s35, %s36
    %p50 = scmp.eq.s32.totalorder %s16, 3
    %p51 = por %p49, %p50
    %p53 = scmp.ne.s32.totalorder %s36, %s52
    %p54 = scmp.eq.s32.totalorder %s16, 0
    %p55 = por %p53, %p54
    %s56 = ssub.s32 %s18, %s25
    %p57 = scmp.eq.s32.totalorder %s56, 0
    %s59 = sadd.s32 %s58, 1
    %s60 = scalar_select %p57, %s58, %s59
    %p63 = pneg %p57
    %p64 = scmp.eq.s32.totalorder %s10, 3
    %p65 = por %p63, %p64
    %p66 = scmp.ne.s32.totalorder %s58, %s61
    %p67 = scmp.eq.s32.totalorder %s10, 0
    %p68 = por %p66, %p67
    %p69 = scmp.ne.s32.totalorder %s58, %s61
    %p70 = scmp.eq.s32.totalorder %s15, 3
    %p71 = por %p69, %p70
    %p72 = scmp.ne.s32.totalorder %s61, %s62
    %p73 = scmp.eq.s32.totalorder %s15, 0
    %p74 = por %p72, %p73
    %p75 = scmp.ne.s32.totalorder %s61, %s62
    %p76 = scmp.eq.s32.totalorder %s16, 3
    %p77 = por %p75, %p76
    %p79 = scmp.ne.s32.totalorder %s62, %s78
    %p80 = scmp.eq.s32.totalorder %s16, 0
    %p81 = por %p79, %p80
    %s82 = ssub.s32 %s18, %s25
    %p83 = scmp.eq.s32.totalorder %s82, 0
    %s85 = sadd.s32 %s84, 1
    %s86 = scalar_select %p83, %s84, %s85
    %p89 = pneg %p83
    %p90 = scmp.eq.s32.totalorder %s10, 3
    %p91 = por %p89, %p90
    %p92 = scmp.ne.s32.totalorder %s84, %s87
    %p93 = scmp.eq.s32.totalorder %s10, 0
    %p94 = por %p92, %p93
    %p95 = scmp.ne.s32.totalorder %s84, %s87
    %p96 = scmp.eq.s32.totalorder %s15, 3
    %p97 = por %p95, %p96
    %p98 = scmp.ne.s32.totalorder %s87, %s88
    %p99 = scmp.eq.s32.totalorder %s15, 0
    %p100 = por %p98, %p99
    %p101 = scmp.ne.s32.totalorder %s87, %s88
    %p102 = scmp.eq.s32.totalorder %s16, 3
    %p103 = por %p101, %p102
    %p105 = scmp.ne.s32.totalorder %s88, %s104
    %p106 = scmp.eq.s32.totalorder %s16, 0
    %p107 = por %p105, %p106
    %s108 = ssub.s32 %s18, %s25
    %p109 = scmp.eq.s32.totalorder %s108, 0
    %s111 = sadd.s32 %s110, 1
    %s112 = scalar_select %p109, %s110, %s111
    %p115 = pneg %p109
    %p116 = scmp.eq.s32.totalorder %s10, 3
    %p117 = por %p115, %p116
    %p118 = scmp.ne.s32.totalorder %s110, %s113
    %p119 = scmp.eq.s32.totalorder %s10, 0
    %p120 = por %p118, %p119
    %p121 = scmp.ne.s32.totalorder %s110, %s113
    %p122 = scmp.eq.s32.totalorder %s15, 3
    %p123 = por %p121, %p122
    %p124 = scmp.ne.s32.totalorder %s113, %s114
    %p125 = scmp.eq.s32.totalorder %s15, 0
    %p126 = por %p124, %p125
    %p127 = scmp.ne.s32.totalorder %s113, %s114
    %p128 = scmp.eq.s32.totalorder %s16, 3
    %p129 = por %p127, %p128
    %p131 = scmp.ne.s32.totalorder %s114, %s130
    %p132 = scmp.eq.s32.totalorder %s16, 0
    %p133 = por %p131, %p132
    %s134 = ssub.s32 %s17, %s29
    %s135 = ssub.s32 %s18, %s25
    %s136 = sor.u32 %s134, %s135
    %p137 = scmp.eq.s32.totalorder %s136, 0
    %s139 = sadd.s32 %s138, 1
    %s140 = scalar_select %p137, %s138, %s139
    %p143 = pneg %p137
    %p144 = scmp.eq.s32.totalorder %s10, 3
    %p145 = por %p143, %p144
    %p146 = scmp.ne.s32.totalorder %s138, %s141
    %p147 = scmp.eq.s32.totalorder %s10, 0
    %p148 = por %p146, %p147
    %p149 = scmp.ne.s32.totalorder %s138, %s141
    %p150 = scmp.eq.s32.totalorder %s15, 3
    %p151 = por %p149, %p150
    %p152 = scmp.ne.s32.totalorder %s141, %s142
    %p153 = scmp.eq.s32.totalorder %s15, 0
    %p154 = por %p152, %p153
    %p155 = scmp.ne.s32.totalorder %s141, %s142
    %p156 = scmp.eq.s32.totalorder %s16, 3
    %p157 = por %p155, %p156
    %p159 = scmp.ne.s32.totalorder %s142, %s158
    %p160 = scmp.eq.s32.totalorder %s16, 0
    %p161 = por %p159, %p160
    %p162 = scmp.le.s32.totalorder 1, %s10
    %p163 = scmp.lt.s32.totalorder %s10, 5
    %p164 = pnand %p162, %p163
    %p165 = pneg %p164
    // Predicated region
    $region9: #{autoshape_forward.3} parent=5 // pred_check
      _
    $region10: #{autoshape_forward.3} parent=5 // pred_check_branch
      %167 = sbr.rel (%p164) target = $region12
    $region11: #{autoshape_forward.3} parent=5 // pred_region
      %s168 = ssub.s32 %s10, 1
      // Predicated region
      $region13: #{autoshape_forward.3} parent=11 // pred_check
        %p169 = pneg %p74
      $region14: #{autoshape_forward.3} parent=11 // pred_check_branch
        %171 = sbr.rel (%p169) target = $region16
      $region15: #{autoshape_forward.3} parent=11 // pred_region
        %p172 = scmp.lt.s32.totalorder %s20, 0
        %s173 = scalar_select %p172, %s20, 0
        %s174 = smul.addr %s173, 2
        %s175 = scalar_lea.vmem %s1, %s174
      $region16: #{autoshape_forward.3} parent=11 // pred_fallthru
        _
      // Predicated region
      $region17: #{autoshape_forward.3} parent=11 // pred_check
        %p176 = pneg %p100
      $region18: #{autoshape_forward.3} parent=11 // pred_check_branch
        %178 = sbr.rel (%p176) target = $region20
      $region19: #{autoshape_forward.3} parent=11 // pred_region
        %p179 = scmp.lt.s32.totalorder %s20, 0
        %s180 = scalar_select %p179, %s20, 0
        %s181 = scalar_lea.vmem %s2, %s180
      $region20: #{autoshape_forward.3} parent=11 // pred_fallthru
        _
      // Predicated region
      $region21: #{autoshape_forward.3} parent=11 // pred_check
        %p182 = pneg %p126
      $region22: #{autoshape_forward.3} parent=11 // pred_check_branch
        %184 = sbr.rel (%p182) target = $region24
      $region23: #{autoshape_forward.3} parent=11 // pred_region
        %p185 = scmp.lt.s32.totalorder %s20, 0
        %s186 = scalar_select %p185, %s20, 0
        %s187 = scalar_lea.vmem %s3, %s186
      $region24: #{autoshape_forward.3} parent=11 // pred_fallthru
        _
    $region12: #{autoshape_forward.3} parent=5 // pred_fallthru
      _
    %p188 = scmp.lt.s32.totalorder %s10, 4
    // Predicated region
    $region25: #{autoshape_forward.3} parent=5 // pred_check
      %p189 = pneg %p188
    $region26: #{autoshape_forward.3} parent=5 // pred_check_branch
      %191 = sbr.rel (%p189) target = $region28
    $region27: #{autoshape_forward.3} parent=5 // pred_region
      // Predicated region
      $region29: #{autoshape_forward.3} parent=27 // pred_check
        %p192 = pneg %p42
      $region30: #{autoshape_forward.3} parent=27 // pred_check_branch
        %194 = sbr.rel (%p192) target = $region32
      $region31: #{autoshape_forward.3} parent=27 // pred_region
        %s195 = smul.u32 16, %s17
        %p196 = scmp.lt.s32.totalorder %s195, 63
        %s197 = scalar_select %p196, %s195, 63
        %s198 = smul.addr %s197, 4
        %s199 = scalar_lea.vmem %s0, %s198
        %s200 = smul.u32 16, %s17
      $region32: #{autoshape_forward.3} parent=27 // pred_fallthru
        _
    $region28: #{autoshape_forward.3} parent=5 // pred_fallthru
      _
    %p201 = scmp.le.s32.totalorder 1, %s10
    %p202 = scmp.lt.s32.totalorder %s10, 5
    %p203 = pnand %p201, %p202
    %p204 = pneg %p203
    // Predicated region
    $region33: #{autoshape_forward.3} parent=5 // pred_check
      _
    $region34: #{autoshape_forward.3} parent=5 // pred_check_branch
      %206 = sbr.rel (%p203) target = $region36
    $region35: #{autoshape_forward.3} parent=5 // pred_region
      %s207 = ssub.s32 %s10, 1
      %s208 = smul.u32 16, %s19
      %p209 = scmp.lt.s32.totalorder %s208, 63
      %s210 = scalar_select %p209, %s208, 63
      %s211 = smul.addr %s210, 4
      %s212 = scalar_lea.vmem %s0, %s211
      %p213 = pneg %p48
      %p214 = pneg %p45
      %p215 = scmp.lt.s32.totalorder %s20, 0
      %s216 = scalar_select %p215, %s20, 0
      %s217 = smul.addr %s216, 2
      %s218 = scalar_lea.vmem %s1, %s217
      %p219 = pneg %p74
      %p220 = pneg %p71
      %p221 = scmp.lt.s32.totalorder %s20, 0
      %s222 = scalar_select %p221, %s20, 0
      %s223 = scalar_lea.vmem %s2, %s222
      %p224 = pneg %p100
      %p225 = pneg %p97
      %p226 = scmp.lt.s32.totalorder %s20, 0
      %s227 = scalar_select %p226, %s20, 0
      %s228 = scalar_lea.vmem %s3, %s227
      %p229 = pneg %p126
      %p230 = pneg %p123
      %p231 = pneg %p154
      %p232 = pneg %p151
      %s233 = smul.u32 16, %s19
      %p234 = scmp.lt.s32.totalorder %s233, 63
      %s235 = scalar_select %p234, %s233, 63
      %p236 = scmp.lt.s32.totalorder %s20, 0
      %s237 = scalar_select %p236, %s20, 0
      %s238 = sadd.s32 %s237, %s235
      %s239 = smul.addr %s238, 4
      %s240 = scalar_lea.vmem %s4, %s239
      %s241 = smul.u32 16, %s19
      %p242 = scmp.lt.s32.totalorder %s241, 63
      %s243 = scalar_select %p242, %s241, 63
      %s244 = smul.addr %s243, 4
      %s245 = scalar_lea.vmem %s0, %s244
      %s246 = smul.u32 16, %s19
      %p247 = scmp.lt.s32.totalorder %s20, 0
      %s248 = scalar_select %p247, %s20, 0
      %s249 = smul.addr %s248, 2
      %s250 = scalar_lea.vmem %s1, %s249
      %p251 = scmp.lt.s32.totalorder %s20, 0
      %s252 = scalar_select %p251, %s20, 0
      %s253 = scalar_lea.vmem %s2, %s252
      %p254 = scmp.lt.s32.totalorder %s20, 0
      %s255 = scalar_select %p254, %s20, 0
      %s256 = scalar_lea.vmem %s3, %s255
      %s257 = smul.u32 16, %s19
      %p258 = scmp.lt.s32.totalorder %s257, 63
      %s259 = scalar_select %p258, %s257, 63
      %p260 = scmp.lt.s32.totalorder %s20, 0
      %s261 = scalar_select %p260, %s20, 0
      %s262 = sadd.s32 %s261, %s259
      %s263 = smul.addr %s262, 4
      %s264 = scalar_lea.vmem %s4, %s263
      %s265 = smul.u32 16, %s19
      %v267 = vld [vmem:[%s245] sm:$0xf]
      %v268 = vld [vmem:[%s245 + $0x4] sm:$0xf]
      %v269 = vld [vmem:[%s245 + $0x8] sm:$0xf]
      %v270 = vld [vmem:[%s245 + $0xc] sm:$0xf]
      %v271 = vld [vmem:[%s245 + $0x10] sm:$0xf]
      %v272 = vld [vmem:[%s245 + $0x14] sm:$0xf]
      %v273 = vld [vmem:[%s245 + $0x18] sm:$0xf]
      %v274 = vld [vmem:[%s245 + $0x1c] sm:$0xf]
      %v275 = vld [vmem:[%s245 + $0x20] sm:$0xf]
      %v276 = vld [vmem:[%s245 + $0x24] sm:$0xf]
      %v277 = vld [vmem:[%s245 + $0x28] sm:$0xf]
      %v278 = vld [vmem:[%s245 + $0x2c] sm:$0xf]
      %v279 = vld [vmem:[%s245 + $0x30] sm:$0xf]
      %v280 = vld [vmem:[%s245 + $0x34] sm:$0xf]
      %v281 = vld [vmem:[%s245 + $0x38] sm:$0xf]
      %v282 = vld [vmem:[%s245 + $0x3c] sm:$0xf]
      %v283 = vld [vmem:[%s250] sm:$0x3]
      %v300 = vunpack.c.l.b16 %v267
      %v301 = vunpack.c.l.b16 %v268
      %v302 = vunpack.c.l.b16 %v269
      %v303 = vunpack.c.l.b16 %v270
      %v304 = vunpack.c.l.b16 %v271
      %v305 = vunpack.c.l.b16 %v272
      %v306 = vunpack.c.l.b16 %v273
      %v307 = vunpack.c.l.b16 %v274
      %v308 = vunpack.c.l.b16 %v275
      %v309 = vunpack.c.l.b16 %v276
      %v310 = vunpack.c.l.b16 %v277
      %v311 = vunpack.c.l.b16 %v278
      %v312 = vunpack.c.l.b16 %v279
      %v313 = vunpack.c.l.b16 %v280
      %v314 = vunpack.c.l.b16 %v281
      %v315 = vunpack.c.l.b16 %v282
      %v316 = vpack.c.b16 %v301, %v300
      %v317 = vpack.c.b16 %v303, %v302
      %v318 = vpack.c.b16 %v305, %v304
      %v319 = vpack.c.b16 %v307, %v306
      %v320 = vpack.c.b16 %v309, %v308
      %v321 = vpack.c.b16 %v311, %v310
      %v322 = vpack.c.b16 %v313, %v312
      %v323 = vpack.c.b16 %v315, %v314
      %vm324 = vcmask 31744
      %v326 = vsel %vm324, %v316, 0
      %v329 = vsel %vm324, %v317, 0
      %v332 = vsel %vm324, %v318, 0
      %v335 = vsel %vm324, %v319, 0
      %v338 = vsel %vm324, %v320, 0
      %v341 = vsel %vm324, %v321, 0
      %v344 = vsel %vm324, %v322, 0
      %v347 = vsel %vm324, %v323, 0
      %vm349 = vcmask 1041408
      %v351 = vsel %vm349, %v283, 0
      %353 = vmatpush.bf16.msra.mxu0 0
      %354 = vmatpush.bf16.msra.mxu0 0
      %355 = vmatpush.bf16.msra.mxu0 0
      %356 = vmatpush.bf16.msra.mxu0 0
      %357 = vmatpush.bf16.msra.mxu0 0
      %358 = vmatpush.bf16.msra.mxu0 0
      %359 = vmatpush.bf16.msra.mxu0 0
      %360 = vmatpush.bf16.msra.mxu0 %v351
      %361 = vmatmul.bf16.gmra.mxu0 %v326
      %v362 = vpop.f32.mrf.mxu0
      %v363 = vadd.f32 0.0, %v362
      %v364 = vpop.f32.mrf.mxu0
      %v365 = vadd.f32 0.0, %v364
      %366 = vmatmul.bf16.gmra.mxu0 %v329
      %v367 = vpop.f32.mrf.mxu0
      %v368 = vadd.f32 0.0, %v367
      %v369 = vpop.f32.mrf.mxu0
      %v370 = vadd.f32 0.0, %v369
      %371 = vmatmul.bf16.gmra.mxu0 %v332
      %v372 = vpop.f32.mrf.mxu0
      %v373 = vadd.f32 0.0, %v372
      %v374 = vpop.f32.mrf.mxu0
      %v375 = vadd.f32 0.0, %v374
      %376 = vmatmul.bf16.gmra.mxu0 %v335
      %v377 = vpop.f32.mrf.mxu0
      %v378 = vadd.f32 0.0, %v377
      %v379 = vpop.f32.mrf.mxu0
      %v380 = vadd.f32 0.0, %v379
      %381 = vmatmul.bf16.gmra.mxu0 %v338
      %v382 = vpop.f32.mrf.mxu0
      %v383 = vadd.f32 0.0, %v382
      %v384 = vpop.f32.mrf.mxu0
      %v385 = vadd.f32 0.0, %v384
      %386 = vmatmul.bf16.gmra.mxu0 %v341
      %v387 = vpop.f32.mrf.mxu0
      %v388 = vadd.f32 0.0, %v387
      %v389 = vpop.f32.mrf.mxu0
      %v390 = vadd.f32 0.0, %v389
      %391 = vmatmul.bf16.gmra.mxu0 %v344
      %v392 = vpop.f32.mrf.mxu0
      %v393 = vadd.f32 0.0, %v392
      %v394 = vpop.f32.mrf.mxu0
      %v395 = vadd.f32 0.0, %v394
      %396 = vmatmul.bf16.gmra.mxu0 %v347
      %v397 = vpop.f32.mrf.mxu0
      %v398 = vadd.f32 0.0, %v397
      %v399 = vpop.f32.mrf.mxu0
      %v400 = vadd.f32 0.0, %v399
      %401 = vdwg.mxu0
      %v402 = vld [vmem:[%s253] sm:$0x1]
      %v404 = vperm.slane %v402, 0
      %v406 = vmul.f32 %v363, %v404
      %v407 = vmul.f32 %v365, %v404
      %v408 = vmul.f32 %v368, %v404
      %v409 = vmul.f32 %v370, %v404
      %v410 = vmul.f32 %v373, %v404
      %v411 = vmul.f32 %v375, %v404
      %v412 = vmul.f32 %v378, %v404
      %v413 = vmul.f32 %v380, %v404
      %v414 = vmul.f32 %v383, %v404
      %v415 = vmul.f32 %v385, %v404
      %v416 = vmul.f32 %v388, %v404
      %v417 = vmul.f32 %v390, %v404
      %v418 = vmul.f32 %v393, %v404
      %v419 = vmul.f32 %v395, %v404
      %v420 = vmul.f32 %v398, %v404
      %v421 = vmul.f32 %v400, %v404
      %v422 = vld [vmem:[%s256] sm:$0x1]
      %v424 = vperm.slane %v422, 0
      %v426 = vadd.f32 %v406, %v424
      %v427 = vadd.f32 %v407, %v424
      %v428 = vadd.f32 %v408, %v424
      %v429 = vadd.f32 %v409, %v424
      %v430 = vadd.f32 %v410, %v424
      %v431 = vadd.f32 %v411, %v424
      %v432 = vadd.f32 %v412, %v424
      %v433 = vadd.f32 %v413, %v424
      %v434 = vadd.f32 %v414, %v424
      %v435 = vadd.f32 %v415, %v424
      %v436 = vadd.f32 %v416, %v424
      %v437 = vadd.f32 %v417, %v424
      %v438 = vadd.f32 %v418, %v424
      %v439 = vadd.f32 %v419, %v424
      %v440 = vadd.f32 %v420, %v424
      %v441 = vadd.f32 %v421, %v424
      %v442 = vmul.f32 %v426, 0.5
      %v443 = vmul.f32 %v427, 0.5
      %v444 = vmul.f32 %v428, 0.5
      %v445 = vmul.f32 %v429, 0.5
      %v446 = vmul.f32 %v430, 0.5
      %v447 = vmul.f32 %v431, 0.5
      %v448 = vmul.f32 %v432, 0.5
      %v449 = vmul.f32 %v433, 0.5
      %v450 = vmul.f32 %v434, 0.5
      %v451 = vmul.f32 %v435, 0.5
      %v452 = vmul.f32 %v436, 0.5
      %v453 = vmul.f32 %v437, 0.5
      %v454 = vmul.f32 %v438, 0.5
      %v455 = vmul.f32 %v439, 0.5
      %v456 = vmul.f32 %v440, 0.5
      %v457 = vmul.f32 %v441, 0.5
      %v458 = vtanh.pop %v442
      %v459 = vtanh.pop %v443
      %v460 = vtanh.pop %v444
      %v461 = vtanh.pop %v445
      %v462 = vtanh.pop %v446
      %v463 = vtanh.pop %v447
      %v464 = vtanh.pop %v448
      %v465 = vtanh.pop %v449
      %v466 = vtanh.pop %v450
      %v467 = vtanh.pop %v451
      %v468 = vtanh.pop %v452
      %v469 = vtanh.pop %v453
      %v470 = vtanh.pop %v454
      %v471 = vtanh.pop %v455
      %v472 = vtanh.pop %v456
      %v473 = vtanh.pop %v457
      %v474 = vmul.f32 %v458, 0.5
      %v475 = vmul.f32 %v459, 0.5
      %v476 = vmul.f32 %v460, 0.5
      %v477 = vmul.f32 %v461, 0.5
      %v478 = vmul.f32 %v462, 0.5
      %v479 = vmul.f32 %v463, 0.5
      %v480 = vmul.f32 %v464, 0.5
      %v481 = vmul.f32 %v465, 0.5
      %v482 = vmul.f32 %v466, 0.5
      %v483 = vmul.f32 %v467, 0.5
      %v484 = vmul.f32 %v468, 0.5
      %v485 = vmul.f32 %v469, 0.5
      %v486 = vmul.f32 %v470, 0.5
      %v487 = vmul.f32 %v471, 0.5
      %v488 = vmul.f32 %v472, 0.5
      %v489 = vmul.f32 %v473, 0.5
      %v490 = vadd.f32 %v474, 0.5
      %v491 = vadd.f32 %v475, 0.5
      %v492 = vadd.f32 %v476, 0.5
      %v493 = vadd.f32 %v477, 0.5
      %v494 = vadd.f32 %v478, 0.5
      %v495 = vadd.f32 %v479, 0.5
      %v496 = vadd.f32 %v480, 0.5
      %v497 = vadd.f32 %v481, 0.5
      %v498 = vadd.f32 %v482, 0.5
      %v499 = vadd.f32 %v483, 0.5
      %v500 = vadd.f32 %v484, 0.5
      %v501 = vadd.f32 %v485, 0.5
      %v502 = vadd.f32 %v486, 0.5
      %v503 = vadd.f32 %v487, 0.5
      %v504 = vadd.f32 %v488, 0.5
      %v505 = vadd.f32 %v489, 0.5
      %v506 = vmul.f32 %v426, %v490
      %v507 = vmul.f32 %v427, %v491
      %v508 = vmul.f32 %v428, %v492
      %v509 = vmul.f32 %v429, %v493
      %v510 = vmul.f32 %v430, %v494
      %v511 = vmul.f32 %v431, %v495
      %v512 = vmul.f32 %v432, %v496
      %v513 = vmul.f32 %v433, %v497
      %v514 = vmul.f32 %v434, %v498
      %v515 = vmul.f32 %v435, %v499
      %v516 = vmul.f32 %v436, %v500
      %v517 = vmul.f32 %v437, %v501
      %v518 = vmul.f32 %v438, %v502
      %v519 = vmul.f32 %v439, %v503
      %v520 = vmul.f32 %v440, %v504
      %v521 = vmul.f32 %v441, %v505
      %v522 = vpack.c.bf16 %v506, %v506
      %v523 = vpack.c.bf16 %v507, %v507
      %v524 = vpack.c.bf16 %v508, %v508
      %v525 = vpack.c.bf16 %v509, %v509
      %v526 = vpack.c.bf16 %v510, %v510
      %v527 = vpack.c.bf16 %v511, %v511
      %v528 = vpack.c.bf16 %v512, %v512
      %v529 = vpack.c.bf16 %v513, %v513
      %v530 = vpack.c.bf16 %v514, %v514
      %v531 = vpack.c.bf16 %v515, %v515
      %v532 = vpack.c.bf16 %v516, %v516
      %v533 = vpack.c.bf16 %v517, %v517
      %v534 = vpack.c.bf16 %v518, %v518
      %v535 = vpack.c.bf16 %v519, %v519
      %v536 = vpack.c.bf16 %v520, %v520
      %v537 = vpack.c.bf16 %v521, %v521
      %vm538 = vcmask 60416
      %539 = vst.msk [vmem:[%s264] sm:$0xf] %vm538, %v522
      %540 = vst.msk [vmem:[%s264 + $0x4] sm:$0xf] %vm538, %v523
      %541 = vst.msk [vmem:[%s264 + $0x8] sm:$0xf] %vm538, %v524
      %542 = vst.msk [vmem:[%s264 + $0xc] sm:$0xf] %vm538, %v525
      %543 = vst.msk [vmem:[%s264 + $0x10] sm:$0xf] %vm538, %v526
      %544 = vst.msk [vmem:[%s264 + $0x14] sm:$0xf] %vm538, %v527
      %545 = vst.msk [vmem:[%s264 + $0x18] sm:$0xf] %vm538, %v528
      %546 = vst.msk [vmem:[%s264 + $0x1c] sm:$0xf] %vm538, %v529
      %547 = vst.msk [vmem:[%s264 + $0x20] sm:$0xf] %vm538, %v530
      %548 = vst.msk [vmem:[%s264 + $0x24] sm:$0xf] %vm538, %v531
      %549 = vst.msk [vmem:[%s264 + $0x28] sm:$0xf] %vm538, %v532
      %550 = vst.msk [vmem:[%s264 + $0x2c] sm:$0xf] %vm538, %v533
      %551 = vst.msk [vmem:[%s264 + $0x30] sm:$0xf] %vm538, %v534
      %552 = vst.msk [vmem:[%s264 + $0x34] sm:$0xf] %vm538, %v535
      %553 = vst.msk [vmem:[%s264 + $0x38] sm:$0xf] %vm538, %v536
      %554 = vst.msk [vmem:[%s264 + $0x3c] sm:$0xf] %vm538, %v537
      %s555 = smul.u32 16, %s19
      %p556 = scmp.lt.s32.totalorder %s555, 63
      %s557 = scalar_select %p556, %s555, 63
      %p558 = scmp.lt.s32.totalorder %s20, 0
      %s559 = scalar_select %p558, %s20, 0
      %s560 = sadd.s32 %s559, %s557
      %s561 = smul.addr %s560, 4
      %s562 = scalar_lea.vmem %s4, %s561
      // Predicated region
      $region37: #{autoshape_forward.3} parent=35 // pred_check
        %p563 = pneg %p151
      $region38: #{autoshape_forward.3} parent=35 // pred_check_branch
        %565 = sbr.rel (%p563) target = $region40
      $region39: #{autoshape_forward.3} parent=35 // pred_region
        %s566 = smul.u32 16, %s19
      $region40: #{autoshape_forward.3} parent=35 // pred_fallthru
        _
    $region36: #{autoshape_forward.3} parent=5 // pred_fallthru
      _
    %p567 = scmp.le.s32.totalorder 2, %s10
    // Predicated region
    $region41: #{autoshape_forward.3} parent=5 // pred_check
      %p568 = pneg %p567
    $region42: #{autoshape_forward.3} parent=5 // pred_check_branch
      %570 = sbr.rel (%p568) target = $region44
    $region43: #{autoshape_forward.3} parent=5 // pred_region
      %s571 = ssub.s32 %s10, 2
      // Predicated region
      $region45: #{autoshape_forward.3} parent=43 // pred_check
        %p572 = pneg %p157
      $region46: #{autoshape_forward.3} parent=43 // pred_check_branch
        %574 = sbr.rel (%p572) target = $region48
      $region47: #{autoshape_forward.3} parent=43 // pred_region
        %s575 = smul.u32 16, %s21
        %p576 = scmp.lt.s32.totalorder %s575, 63
        %s577 = scalar_select %p576, %s575, 63
        %p578 = scmp.lt.s32.totalorder %s22, 0
        %s579 = scalar_select %p578, %s22, 0
        %s580 = sadd.s32 %s579, %s577
        %s581 = smul.addr %s580, 4
        %s582 = scalar_lea.vmem %s4, %s581
      $region48: #{autoshape_forward.3} parent=43 // pred_fallthru
        _
    $region44: #{autoshape_forward.3} parent=5 // pred_fallthru
      _
  $region6: #{autoshape_forward.3} parent=0 // loop_footer
    %s14 = sadd.s32 1, %s10
  $region7: #{autoshape_forward.3} parent=0 // loop_footer_branch
    %9 = sbr.rel target = $region3
  $region8: #{autoshape_forward.3} parent=0 // loop_exit
    _

// kernel: autoshape_forward.4
$region0: #{autoshape_forward.4}
  #allocation0 [shape = 'u32[]', space=smem, size = 0x4, offset = 0x4, fixed_abs, tag = 'smem constant byte address 0x4 - core index']
  #allocation1 [shape = 'u32[72,128]{1,0:T(1,128)}', space=vmem, size = 0x9000, scoped, tag = 'internal scratch']
  #allocation2 [shape = 'bf16[162,4]{1,0:T(8,128)(2,1)}', space=vmem, size = 0xa800, scoped, tag = 'scratch operand']
  #allocation3 [shape = 'bf16[128,36]{1,0:T(8,128)(2,1)}', space=vmem, size = 0x8000, scoped, tag = 'scratch operand']
  %s0 = inlined_call_operand.vmem [shape: bf16[512,8], index: 0, kind: input, shape index: {}, may-alias: {0,1,2}]
  %s1 = inlined_call_operand.vmem [shape: bf16[512,8], index: 1, kind: input, shape index: {}, may-alias: {0,1,2}]
  %s2 = inlined_call_operand.vmem [shape: bf16[512,8], index: 2, kind: input, shape index: {}, may-alias: {0,1,2}]
  %s3 = inlined_call_operand.vmem [shape: bf16[4,4], index: 3, kind: input, shape index: {}]
  %s4 = inlined_call_operand.vmem [shape: f32[1,4], index: 4, kind: input, shape index: {}]
  %s5 = inlined_call_operand.vmem [shape: f32[1,4], index: 5, kind: input, shape index: {}]
  %s6 = inlined_call_operand.vmem [shape: bf16[36,4], index: 6, kind: input, shape index: {}]
  %s7 = inlined_call_operand.vmem [shape: f32[1,4], index: 7, kind: input, shape index: {}]
  %s8 = inlined_call_operand.vmem [shape: f32[1,4], index: 8, kind: input, shape index: {}]
  %s9 = inlined_call_operand.vmem [shape: bf16[512,8], index: 9, kind: output, shape index: {}]
  %s10 = sld [smem:[#allocation0]]
  $region69: #{autoshape_forward.4} parent=0
    _
  %s12 = ssub.s32 1, %s10
  %s13 = scalar_select 0, %s12, %s10
  loop: start=0, step=1, limit=6
  $region2: #{autoshape_forward.4} parent=0 // loop_pre_header
    _
  $region3: #{autoshape_forward.4} parent=0 // loop_header
    %s15 = sphi 0, %s19
    %p16 = scmp.ge.s32.totalorder %s15, 6
    %s22 = sphi 0, %s34
    %s23 = sphi 0, %s30
    %s24 = sphi 0, %s22
    %s25 = sphi 0, %s23
    %s26 = sphi 0, %s24
    %s27 = sphi 0, %s25
    %s41 = sphi 0, %s43
    %s44 = sphi 0, %s41
    %s45 = sphi 0, %s44
    %s61 = sphi 0, %s45
    %s79 = sphi 0, %s81
    %s82 = sphi 0, %s79
    %s83 = sphi 0, %s82
    %s99 = sphi 0, %s83
    %s117 = sphi 0, %s119
    %s120 = sphi 0, %s117
    %s121 = sphi 0, %s120
    %s137 = sphi 0, %s121
    %s141 = sphi 0, %s141
    %s143 = sphi 0, %s141
    %s144 = sphi 0, %s143
    %s158 = sphi 0, %s144
    %s162 = sphi 0, %s162
    %s164 = sphi 0, %s162
    %s165 = sphi 0, %s164
    %s179 = sphi 0, %s165
    %s183 = sphi 0, %s183
    %s185 = sphi 0, %s183
    %s186 = sphi 0, %s185
    %s200 = sphi 0, %s186
    %s204 = sphi 0, %s204
    %s206 = sphi 0, %s204
    %s207 = sphi 0, %s206
    %s221 = sphi 0, %s207
    %s225 = sphi 0, %s225
    %s227 = sphi 0, %s225
    %s228 = sphi 0, %s227
    %s242 = sphi 0, %s228
    %s246 = sphi 0, %s246
    %s248 = sphi 0, %s246
    %s249 = sphi 0, %s248
    %s263 = sphi 0, %s249
    %s273 = sphi 0, %s275
    %s276 = sphi 0, %s273
    %s277 = sphi 0, %s276
    %s293 = sphi 0, %s277
  $region4: #{autoshape_forward.4} parent=0 // loop_header_branch
    %18 = sbr.rel (%p16) target = $region8
  $region5: #{autoshape_forward.4} parent=0 // loop_body
    %s20 = ssub.s32 %s15, 1
    %s21 = ssub.s32 %s15, 2
    %s28 = sadd.s32 1, %s23
    %p29 = scmp.ge.s32.totalorder %s28, 2
    %s30 = scalar_select %p29, 0, %s28
    %s31 = sadd.s32 1, %s22
    %s32 = scalar_select %p29, %s31, %s22
    %p33 = scmp.ge.s32.totalorder %s32, 2
    %s34 = scalar_select %p33, 0, %s32
    %s35 = smul.u32 %s22, 2
    %s36 = sadd.s32 %s35, %s23
    %s37 = smul.u32 %s34, 2
    %s38 = sadd.s32 %s37, %s30
    %s39 = ssub.s32 %s36, %s38
    %p40 = scmp.eq.s32.totalorder %s39, 0
    %s42 = sadd.s32 %s41, 1
    %s43 = scalar_select %p40, %s41, %s42
    %p46 = pneg %p40
    %p47 = scmp.eq.s32.totalorder %s15, 3
    %p48 = por %p46, %p47
    %p49 = scmp.ne.s32.totalorder %s41, %s44
    %p50 = scmp.eq.s32.totalorder %s15, 0
    %p51 = por %p49, %p50
    %p52 = scmp.ne.s32.totalorder %s41, %s44
    %p53 = scmp.eq.s32.totalorder %s20, 3
    %p54 = por %p52, %p53
    %p55 = scmp.ne.s32.totalorder %s44, %s45
    %p56 = scmp.eq.s32.totalorder %s20, 0
    %p57 = por %p55, %p56
    %p58 = scmp.ne.s32.totalorder %s44, %s45
    %p59 = scmp.eq.s32.totalorder %s21, 3
    %p60 = por %p58, %p59
    %p62 = scmp.ne.s32.totalorder %s45, %s61
    %p63 = scmp.eq.s32.totalorder %s21, 0
    %p64 = por %p62, %p63
    %s65 = smul.u32 %s22, 16
    %s66 = smul.u32 %s23, 8
    %s67 = ssub.s32 %s66, 1
    %p68 = scmp.gt.s32.totalorder %s67, 0
    %s69 = scalar_select %p68, %s67, 0
    %s70 = sadd.s32 %s65, %s69
    %s71 = smul.u32 %s34, 16
    %s72 = smul.u32 %s30, 8
    %s73 = ssub.s32 %s72, 1
    %p74 = scmp.gt.s32.totalorder %s73, 0
    %s75 = scalar_select %p74, %s73, 0
    %s76 = sadd.s32 %s71, %s75
    %s77 = ssub.s32 %s70, %s76
    %p78 = scmp.eq.s32.totalorder %s77, 0
    %s80 = sadd.s32 %s79, 1
    %s81 = scalar_select %p78, %s79, %s80
    %p84 = pneg %p78
    %p85 = scmp.eq.s32.totalorder %s15, 3
    %p86 = por %p84, %p85
    %p87 = scmp.ne.s32.totalorder %s79, %s82
    %p88 = scmp.eq.s32.totalorder %s15, 0
    %p89 = por %p87, %p88
    %p90 = scmp.ne.s32.totalorder %s79, %s82
    %p91 = scmp.eq.s32.totalorder %s20, 3
    %p92 = por %p90, %p91
    %p93 = scmp.ne.s32.totalorder %s82, %s83
    %p94 = scmp.eq.s32.totalorder %s20, 0
    %p95 = por %p93, %p94
    %p96 = scmp.ne.s32.totalorder %s82, %s83
    %p97 = scmp.eq.s32.totalorder %s21, 3
    %p98 = por %p96, %p97
    %p100 = scmp.ne.s32.totalorder %s83, %s99
    %p101 = scmp.eq.s32.totalorder %s21, 0
    %p102 = por %p100, %p101
    %s103 = smul.u32 %s22, 16
    %s104 = smul.u32 %s23, 8
    %s105 = sadd.s32 %s104, 8
    %p106 = scmp.lt.s32.totalorder %s105, 15
    %s107 = scalar_select %p106, %s105, 15
    %s108 = sadd.s32 %s103, %s107
    %s109 = smul.u32 %s34, 16
    %s110 = smul.u32 %s30, 8
    %s111 = sadd.s32 %s110, 8
    %p112 = scmp.lt.s32.totalorder %s111, 15
    %s113 = scalar_select %p112, %s111, 15
    %s114 = sadd.s32 %s109, %s113
    %s115 = ssub.s32 %s108, %s114
    %p116 = scmp.eq.s32.totalorder %s115, 0
    %s118 = sadd.s32 %s117, 1
    %s119 = scalar_select %p116, %s117, %s118
    %p122 = pneg %p116
    %p123 = scmp.eq.s32.totalorder %s15, 3
    %p124 = por %p122, %p123
    %p125 = scmp.ne.s32.totalorder %s117, %s120
    %p126 = scmp.eq.s32.totalorder %s15, 0
    %p127 = por %p125, %p126
    %p128 = scmp.ne.s32.totalorder %s117, %s120
    %p129 = scmp.eq.s32.totalorder %s20, 3
    %p130 = por %p128, %p129
    %p131 = scmp.ne.s32.totalorder %s120, %s121
    %p132 = scmp.eq.s32.totalorder %s20, 0
    %p133 = por %p131, %p132
    %p134 = scmp.ne.s32.totalorder %s120, %s121
    %p135 = scmp.eq.s32.totalorder %s21, 3
    %p136 = por %p134, %p135
    %p138 = scmp.ne.s32.totalorder %s121, %s137
    %p139 = scmp.eq.s32.totalorder %s21, 0
    %p140 = por %p138, %p139
    %s142 = sadd.s32 %s141, 1
    %p145 = scmp.eq.s32.totalorder %s15, 3
    %p146 = scmp.ne.s32.totalorder %s141, %s143
    %p147 = scmp.eq.s32.totalorder %s15, 0
    %p148 = por %p146, %p147
    %p149 = scmp.ne.s32.totalorder %s141, %s143
    %p150 = scmp.eq.s32.totalorder %s20, 3
    %p151 = por %p149, %p150
    %p152 = scmp.ne.s32.totalorder %s143, %s144
    %p153 = scmp.eq.s32.totalorder %s20, 0
    %p154 = por %p152, %p153
    %p155 = scmp.ne.s32.totalorder %s143, %s144
    %p156 = scmp.eq.s32.totalorder %s21, 3
    %p157 = por %p155, %p156
    %p159 = scmp.ne.s32.totalorder %s144, %s158
    %p160 = scmp.eq.s32.totalorder %s21, 0
    %p161 = por %p159, %p160
    %s163 = sadd.s32 %s162, 1
    %p166 = scmp.eq.s32.totalorder %s15, 3
    %p167 = scmp.ne.s32.totalorder %s162, %s164
    %p168 = scmp.eq.s32.totalorder %s15, 0
    %p169 = por %p167, %p168
    %p170 = scmp.ne.s32.totalorder %s162, %s164
    %p171 = scmp.eq.s32.totalorder %s20, 3
    %p172 = por %p170, %p171
    %p173 = scmp.ne.s32.totalorder %s164, %s165
    %p174 = scmp.eq.s32.totalorder %s20, 0
    %p175 = por %p173, %p174
    %p176 = scmp.ne.s32.totalorder %s164, %s165
    %p177 = scmp.eq.s32.totalorder %s21, 3
    %p178 = por %p176, %p177
    %p180 = scmp.ne.s32.totalorder %s165, %s179
    %p181 = scmp.eq.s32.totalorder %s21, 0
    %p182 = por %p180, %p181
    %s184 = sadd.s32 %s183, 1
    %p187 = scmp.eq.s32.totalorder %s15, 3
    %p188 = scmp.ne.s32.totalorder %s183, %s185
    %p189 = scmp.eq.s32.totalorder %s15, 0
    %p190 = por %p188, %p189
    %p191 = scmp.ne.s32.totalorder %s183, %s185
    %p192 = scmp.eq.s32.totalorder %s20, 3
    %p193 = por %p191, %p192
    %p194 = scmp.ne.s32.totalorder %s185, %s186
    %p195 = scmp.eq.s32.totalorder %s20, 0
    %p196 = por %p194, %p195
    %p197 = scmp.ne.s32.totalorder %s185, %s186
    %p198 = scmp.eq.s32.totalorder %s21, 3
    %p199 = por %p197, %p198
    %p201 = scmp.ne.s32.totalorder %s186, %s200
    %p202 = scmp.eq.s32.totalorder %s21, 0
    %p203 = por %p201, %p202
    %s205 = sadd.s32 %s204, 1
    %p208 = scmp.eq.s32.totalorder %s15, 3
    %p209 = scmp.ne.s32.totalorder %s204, %s206
    %p210 = scmp.eq.s32.totalorder %s15, 0
    %p211 = por %p209, %p210
    %p212 = scmp.ne.s32.totalorder %s204, %s206
    %p213 = scmp.eq.s32.totalorder %s20, 3
    %p214 = por %p212, %p213
    %p215 = scmp.ne.s32.totalorder %s206, %s207
    %p216 = scmp.eq.s32.totalorder %s20, 0
    %p217 = por %p215, %p216
    %p218 = scmp.ne.s32.totalorder %s206, %s207
    %p219 = scmp.eq.s32.totalorder %s21, 3
    %p220 = por %p218, %p219
    %p222 = scmp.ne.s32.totalorder %s207, %s221
    %p223 = scmp.eq.s32.totalorder %s21, 0
    %p224 = por %p222, %p223
    %s226 = sadd.s32 %s225, 1
    %p229 = scmp.eq.s32.totalorder %s15, 3
    %p230 = scmp.ne.s32.totalorder %s225, %s227
    %p231 = scmp.eq.s32.totalorder %s15, 0
    %p232 = por %p230, %p231
    %p233 = scmp.ne.s32.totalorder %s225, %s227
    %p234 = scmp.eq.s32.totalorder %s20, 3
    %p235 = por %p233, %p234
    %p236 = scmp.ne.s32.totalorder %s227, %s228
    %p237 = scmp.eq.s32.totalorder %s20, 0
    %p238 = por %p236, %p237
    %p239 = scmp.ne.s32.totalorder %s227, %s228
    %p240 = scmp.eq.s32.totalorder %s21, 3
    %p241 = por %p239, %p240
    %p243 = scmp.ne.s32.totalorder %s228, %s242
    %p244 = scmp.eq.s32.totalorder %s21, 0
    %p245 = por %p243, %p244
    %s247 = sadd.s32 %s246, 1
    %p250 = scmp.eq.s32.totalorder %s15, 3
    %p251 = scmp.ne.s32.totalorder %s246, %s248
    %p252 = scmp.eq.s32.totalorder %s15, 0
    %p253 = por %p251, %p252
    %p254 = scmp.ne.s32.totalorder %s246, %s248
    %p255 = scmp.eq.s32.totalorder %s20, 3
    %p256 = por %p254, %p255
    %p257 = scmp.ne.s32.totalorder %s248, %s249
    %p258 = scmp.eq.s32.totalorder %s20, 0
    %p259 = por %p257, %p258
    %p260 = scmp.ne.s32.totalorder %s248, %s249
    %p261 = scmp.eq.s32.totalorder %s21, 3
    %p262 = por %p260, %p261
    %p264 = scmp.ne.s32.totalorder %s249, %s263
    %p265 = scmp.eq.s32.totalorder %s21, 0
    %p266 = por %p264, %p265
    %s267 = smul.u32 %s22, 2
    %s268 = sadd.s32 %s267, %s23
    %s269 = smul.u32 %s34, 2
    %s270 = sadd.s32 %s269, %s30
    %s271 = ssub.s32 %s268, %s270
    %p272 = scmp.eq.s32.totalorder %s271, 0
    %s274 = sadd.s32 %s273, 1
    %s275 = scalar_select %p272, %s273, %s274
    %p278 = pneg %p272
    %p279 = scmp.eq.s32.totalorder %s15, 3
    %p280 = por %p278, %p279
    %p281 = scmp.ne.s32.totalorder %s273, %s276
    %p282 = scmp.eq.s32.totalorder %s15, 0
    %p283 = por %p281, %p282
    %p284 = scmp.ne.s32.totalorder %s273, %s276
    %p285 = scmp.eq.s32.totalorder %s20, 3
    %p286 = por %p284, %p285
    %p287 = scmp.ne.s32.totalorder %s276, %s277
    %p288 = scmp.eq.s32.totalorder %s20, 0
    %p289 = por %p287, %p288
    %p290 = scmp.ne.s32.totalorder %s276, %s277
    %p291 = scmp.eq.s32.totalorder %s21, 3
    %p292 = por %p290, %p291
    %p294 = scmp.ne.s32.totalorder %s277, %s293
    %p295 = scmp.eq.s32.totalorder %s21, 0
    %p296 = por %p294, %p295
    %p297 = scmp.le.s32.totalorder 1, %s15
    %p298 = scmp.lt.s32.totalorder %s15, 5
    %p299 = pnand %p297, %p298
    %p300 = pneg %p299
    // Predicated region
    $region9: #{autoshape_forward.4} parent=5 // pred_check
      _
    $region10: #{autoshape_forward.4} parent=5 // pred_check_branch
      %302 = sbr.rel (%p299) target = $region12
    $region11: #{autoshape_forward.4} parent=5 // pred_region
      %s303 = ssub.s32 %s15, 1
      // Predicated region
      $region13: #{autoshape_forward.4} parent=11 // pred_check
        %p304 = pneg %p154
      $region14: #{autoshape_forward.4} parent=11 // pred_check_branch
        %306 = sbr.rel (%p304) target = $region16
      $region15: #{autoshape_forward.4} parent=11 // pred_region
        _
      $region16: #{autoshape_forward.4} parent=11 // pred_fallthru
        _
      // Predicated region
      $region17: #{autoshape_forward.4} parent=11 // pred_check
        %p307 = pneg %p175
      $region18: #{autoshape_forward.4} parent=11 // pred_check_branch
        %309 = sbr.rel (%p307) target = $region20
      $region19: #{autoshape_forward.4} parent=11 // pred_region
        _
      $region20: #{autoshape_forward.4} parent=11 // pred_fallthru
        _
      // Predicated region
      $region21: #{autoshape_forward.4} parent=11 // pred_check
        %p310 = pneg %p196
      $region22: #{autoshape_forward.4} parent=11 // pred_check_branch
        %312 = sbr.rel (%p310) target = $region24
      $region23: #{autoshape_forward.4} parent=11 // pred_region
        _
      $region24: #{autoshape_forward.4} parent=11 // pred_fallthru
        _
      // Predicated region
      $region25: #{autoshape_forward.4} parent=11 // pred_check
        %p313 = pneg %p217
      $region26: #{autoshape_forward.4} parent=11 // pred_check_branch
        %315 = sbr.rel (%p313) target = $region28
      $region27: #{autoshape_forward.4} parent=11 // pred_region
        _
      $region28: #{autoshape_forward.4} parent=11 // pred_fallthru
        _
      // Predicated region
      $region29: #{autoshape_forward.4} parent=11 // pred_check
        %p316 = pneg %p238
      $region30: #{autoshape_forward.4} parent=11 // pred_check_branch
        %318 = sbr.rel (%p316) target = $region32
      $region31: #{autoshape_forward.4} parent=11 // pred_region
        _
      $region32: #{autoshape_forward.4} parent=11 // pred_fallthru
        _
      // Predicated region
      $region33: #{autoshape_forward.4} parent=11 // pred_check
        %p319 = pneg %p259
      $region34: #{autoshape_forward.4} parent=11 // pred_check_branch
        %321 = sbr.rel (%p319) target = $region36
      $region35: #{autoshape_forward.4} parent=11 // pred_region
        _
      $region36: #{autoshape_forward.4} parent=11 // pred_fallthru
        _
    $region12: #{autoshape_forward.4} parent=5 // pred_fallthru
      _
    %p322 = scmp.lt.s32.totalorder %s15, 4
    // Predicated region
    $region37: #{autoshape_forward.4} parent=5 // pred_check
      %p323 = pneg %p322
    $region38: #{autoshape_forward.4} parent=5 // pred_check_branch
      %325 = sbr.rel (%p323) target = $region40
    $region39: #{autoshape_forward.4} parent=5 // pred_region
      // Predicated region
      $region41: #{autoshape_forward.4} parent=39 // pred_check
        %p326 = pneg %p51
      $region42: #{autoshape_forward.4} parent=39 // pred_check_branch
        %328 = sbr.rel (%p326) target = $region44
      $region43: #{autoshape_forward.4} parent=39 // pred_region
        %s329 = smul.u32 %s22, 2
        %s330 = sadd.s32 %s329, %s23
        %s331 = smul.u32 16, %s330
        %p332 = scmp.lt.s32.totalorder %s331, 63
        %s333 = scalar_select %p332, %s331, 63
        %s334 = smul.addr %s333, 4
        %s335 = scalar_lea.vmem %s0, %s334
        %s336 = smul.u32 %s22, 2
        %s337 = sadd.s32 %s336, %s23
        %s338 = smul.u32 16, %s337
      $region44: #{autoshape_forward.4} parent=39 // pred_fallthru
        _
      // Predicated region
      $region45: #{autoshape_forward.4} parent=39 // pred_check
        %p339 = pneg %p89
      $region46: #{autoshape_forward.4} parent=39 // pred_check_branch
        %341 = sbr.rel (%p339) target = $region48
      $region47: #{autoshape_forward.4} parent=39 // pred_region
        %s342 = smul.u32 %s22, 16
        %s343 = smul.u32 %s23, 8
        %s344 = ssub.s32 %s343, 1
        %p345 = scmp.gt.s32.totalorder %s344, 0
        %s346 = scalar_select %p345, %s344, 0
        %s347 = sadd.s32 %s342, %s346
        %s348 = smul.u32 2, %s347
        %p349 = scmp.lt.s32.totalorder %s348, 63
        %s350 = scalar_select %p349, %s348, 63
        %s351 = smul.addr %s350, 4
        %s352 = scalar_lea.vmem %s1, %s351
        %s353 = smul.u32 %s22, 16
        %s354 = smul.u32 %s23, 8
        %s355 = ssub.s32 %s354, 1
        %p356 = scmp.gt.s32.totalorder %s355, 0
        %s357 = scalar_select %p356, %s355, 0
        %s358 = sadd.s32 %s353, %s357
        %s359 = smul.u32 2, %s358
      $region48: #{autoshape_forward.4} parent=39 // pred_fallthru
        _
      // Predicated region
      $region49: #{autoshape_forward.4} parent=39 // pred_check
        %p360 = pneg %p127
      $region50: #{autoshape_forward.4} parent=39 // pred_check_branch
        %362 = sbr.rel (%p360) target = $region52
      $region51: #{autoshape_forward.4} parent=39 // pred_region
        %s363 = smul.u32 %s22, 16
        %s364 = smul.u32 %s23, 8
        %s365 = sadd.s32 %s364, 8
        %p366 = scmp.lt.s32.totalorder %s365, 15
        %s367 = scalar_select %p366, %s365, 15
        %s368 = sadd.s32 %s363, %s367
        %s369 = smul.u32 2, %s368
        %p370 = scmp.lt.s32.totalorder %s369, 63
        %s371 = scalar_select %p370, %s369, 63
        %s372 = smul.addr %s371, 4
        %s373 = scalar_lea.vmem %s2, %s372
        %s374 = smul.u32 %s22, 16
        %s375 = smul.u32 %s23, 8
        %s376 = sadd.s32 %s375, 8
        %p377 = scmp.lt.s32.totalorder %s376, 15
        %s378 = scalar_select %p377, %s376, 15
        %s379 = sadd.s32 %s374, %s378
        %s380 = smul.u32 2, %s379
      $region52: #{autoshape_forward.4} parent=39 // pred_fallthru
        _
    $region40: #{autoshape_forward.4} parent=5 // pred_fallthru
      _
    %p381 = scmp.le.s32.totalorder 1, %s15
    %p382 = scmp.lt.s32.totalorder %s15, 5
    %p383 = pnand %p381, %p382
    %p384 = pneg %p383
    // Predicated region
    $region53: #{autoshape_forward.4} parent=5 // pred_check
      _
    $region54: #{autoshape_forward.4} parent=5 // pred_check_branch
      %386 = sbr.rel (%p383) target = $region56
    $region55: #{autoshape_forward.4} parent=5 // pred_region
      %s387 = ssub.s32 %s15, 1
      %s388 = smul.u32 %s24, 2
      %s389 = sadd.s32 %s388, %s25
      %s390 = smul.u32 16, %s389
      %p391 = scmp.lt.s32.totalorder %s390, 63
      %s392 = scalar_select %p391, %s390, 63
      %s393 = smul.addr %s392, 4
      %s394 = scalar_lea.vmem %s0, %s393
      %p395 = pneg %p57
      %p396 = pneg %p54
      %s397 = smul.u32 %s24, 16
      %s398 = smul.u32 %s25, 8
      %s399 = ssub.s32 %s398, 1
      %p400 = scmp.gt.s32.totalorder %s399, 0
      %s401 = scalar_select %p400, %s399, 0
      %s402 = sadd.s32 %s397, %s401
      %s403 = smul.u32 2, %s402
      %p404 = scmp.lt.s32.totalorder %s403, 63
      %s405 = scalar_select %p404, %s403, 63
      %s406 = smul.addr %s405, 4
      %s407 = scalar_lea.vmem %s1, %s406
      %p408 = pneg %p95
      %p409 = pneg %p92
      %s410 = smul.u32 %s24, 16
      %s411 = smul.u32 %s25, 8
      %s412 = sadd.s32 %s411, 8
      %p413 = scmp.lt.s32.totalorder %s412, 15
      %s414 = scalar_select %p413, %s412, 15
      %s415 = sadd.s32 %s410, %s414
      %s416 = smul.u32 2, %s415
      %p417 = scmp.lt.s32.totalorder %s416, 63
      %s418 = scalar_select %p417, %s416, 63
      %s419 = smul.addr %s418, 4
      %s420 = scalar_lea.vmem %s2, %s419
      %p421 = pneg %p133
      %p422 = pneg %p130
      %p423 = pneg %p154
      %p424 = pneg %p151
      %p425 = pneg %p175
      %p426 = pneg %p172
      %p427 = pneg %p196
      %p428 = pneg %p193
      %p429 = pneg %p217
      %p430 = pneg %p214
      %p431 = pneg %p238
      %p432 = pneg %p235
      %p433 = pneg %p259
      %p434 = pneg %p256
      %p435 = pneg %p289
      %p436 = pneg %p286
      %s437 = smul.u32 %s24, 2
      %s438 = sadd.s32 %s437, %s25
      %s439 = smul.u32 16, %s438
      %p440 = scmp.lt.s32.totalorder %s439, 63
      %s441 = scalar_select %p440, %s439, 63
      %s442 = smul.addr %s441, 4
      %s443 = scalar_lea.vmem %s9, %s442
      %s444 = smul.u32 %s24, 2
      %s445 = sadd.s32 %s444, %s25
      %s446 = smul.u32 16, %s445
      %p447 = scmp.lt.s32.totalorder %s446, 63
      %s448 = scalar_select %p447, %s446, 63
      %s449 = smul.addr %s448, 4
      %s450 = scalar_lea.vmem %s0, %s449
      %s451 = smul.u32 %s24, 2
      %s452 = sadd.s32 %s451, %s25
      %s453 = smul.u32 16, %s452
      %s454 = smul.u32 %s24, 16
      %s455 = smul.u32 %s25, 8
      %s456 = ssub.s32 %s455, 1
      %p457 = scmp.gt.s32.totalorder %s456, 0
      %s458 = scalar_select %p457, %s456, 0
      %s459 = sadd.s32 %s454, %s458
      %s460 = smul.u32 2, %s459
      %p461 = scmp.lt.s32.totalorder %s460, 63
      %s462 = scalar_select %p461, %s460, 63
      %s463 = smul.addr %s462, 4
      %s464 = scalar_lea.vmem %s1, %s463
      %s465 = smul.u32 %s24, 16
      %s466 = smul.u32 %s25, 8
      %s467 = ssub.s32 %s466, 1
      %p468 = scmp.gt.s32.totalorder %s467, 0
      %s469 = scalar_select %p468, %s467, 0
      %s470 = sadd.s32 %s465, %s469
      %s471 = smul.u32 2, %s470
      %s472 = smul.u32 %s24, 16
      %s473 = smul.u32 %s25, 8
      %s474 = sadd.s32 %s473, 8
      %p475 = scmp.lt.s32.totalorder %s474, 15
      %s476 = scalar_select %p475, %s474, 15
      %s477 = sadd.s32 %s472, %s476
      %s478 = smul.u32 2, %s477
      %p479 = scmp.lt.s32.totalorder %s478, 63
      %s480 = scalar_select %p479, %s478, 63
      %s481 = smul.addr %s480, 4
      %s482 = scalar_lea.vmem %s2, %s481
      %s483 = smul.u32 %s24, 16
      %s484 = smul.u32 %s25, 8
      %s485 = sadd.s32 %s484, 8
      %p486 = scmp.lt.s32.totalorder %s485, 15
      %s487 = scalar_select %p486, %s485, 15
      %s488 = sadd.s32 %s483, %s487
      %s489 = smul.u32 2, %s488
      %s490 = smul.u32 %s24, 2
      %s491 = sadd.s32 %s490, %s25
      %s492 = smul.u32 16, %s491
      %p493 = scmp.lt.s32.totalorder %s492, 63
      %s494 = scalar_select %p493, %s492, 63
      %s495 = smul.addr %s494, 4
      %s496 = scalar_lea.vmem %s9, %s495
      %s497 = smul.u32 %s24, 2
      %s498 = sadd.s32 %s497, %s25
      %s499 = smul.u32 16, %s498
      %v503 = vld [vmem:[%s450] sm:$0xf]
      %v504 = vld [vmem:[%s450 + $0x4] sm:$0xf]
      %v505 = vld [vmem:[%s450 + $0x8] sm:$0xf]
      %v506 = vld [vmem:[%s450 + $0xc] sm:$0xf]
      %v507 = vld [vmem:[%s450 + $0x10] sm:$0xf]
      %v508 = vld [vmem:[%s450 + $0x14] sm:$0xf]
      %v509 = vld [vmem:[%s450 + $0x18] sm:$0xf]
      %v510 = vld [vmem:[%s450 + $0x1c] sm:$0xf]
      %v511 = vld [vmem:[%s450 + $0x20] sm:$0xf]
      %v512 = vld [vmem:[%s450 + $0x24] sm:$0xf]
      %v513 = vld [vmem:[%s450 + $0x28] sm:$0xf]
      %v514 = vld [vmem:[%s450 + $0x2c] sm:$0xf]
      %v515 = vld [vmem:[%s450 + $0x30] sm:$0xf]
      %v516 = vld [vmem:[%s450 + $0x34] sm:$0xf]
      %v517 = vld [vmem:[%s450 + $0x38] sm:$0xf]
      %v518 = vld [vmem:[%s450 + $0x3c] sm:$0xf]
      %v519 = vld [vmem:[%s464] sm:$0xf]
      %v520 = vld [vmem:[%s464 + $0x4] sm:$0xf]
      %v521 = vld [vmem:[%s482] sm:$0xf]
      %v522 = vld [vmem:[%s482 + $0x4] sm:$0xf]
      %v525 = vunpack.c.l.b16 %v519
      %v526 = vunpack.c.l.b16 %v520
      %v527 = vpack.c.b16 %v526, %v525
      %v544 = vunpack.c.l.b16 %v503
      %v545 = vunpack.c.l.b16 %v504
      %v546 = vunpack.c.l.b16 %v505
      %v547 = vunpack.c.l.b16 %v506
      %v548 = vunpack.c.l.b16 %v507
      %v549 = vunpack.c.l.b16 %v508
      %v550 = vunpack.c.l.b16 %v509
      %v551 = vunpack.c.l.b16 %v510
      %v552 = vunpack.c.l.b16 %v511
      %v553 = vunpack.c.l.b16 %v512
      %v554 = vunpack.c.l.b16 %v513
      %v555 = vunpack.c.l.b16 %v514
      %v556 = vunpack.c.l.b16 %v515
      %v557 = vunpack.c.l.b16 %v516
      %v558 = vunpack.c.l.b16 %v517
      %v559 = vunpack.c.l.b16 %v518
      %v560 = vpack.c.b16 %v545, %v544
      %v561 = vpack.c.b16 %v547, %v546
      %v562 = vpack.c.b16 %v549, %v548
      %v563 = vpack.c.b16 %v551, %v550
      %v564 = vpack.c.b16 %v553, %v552
      %v565 = vpack.c.b16 %v555, %v554
      %v566 = vpack.c.b16 %v557, %v556
      %v567 = vpack.c.b16 %v559, %v558
      %v570 = vunpack.c.l.b16 %v521
      %v571 = vunpack.c.l.b16 %v522
      %v572 = vpack.c.b16 %v571, %v570
      %v573 = vld [vmem:[%s3] sm:$0x3]
      %vm574 = vcmask 31744
      %v576 = vsel %vm574, %v527, 0
      %v579 = vsel %vm574, %v560, 0
      %v582 = vsel %vm574, %v561, 0
      %v585 = vsel %vm574, %v562, 0
      %v588 = vsel %vm574, %v563, 0
      %v591 = vsel %vm574, %v564, 0
      %v594 = vsel %vm574, %v565, 0
      %v597 = vsel %vm574, %v566, 0
      %v600 = vsel %vm574, %v567, 0
      %v603 = vsel %vm574, %v572, 0
      %vm605 = vcmask 1041408
      %v607 = vsel %vm605, %v573, 0
      %609 = vmatpush.bf16.msra.mxu0 0
      %610 = vmatpush.bf16.msra.mxu0 0
      %611 = vmatpush.bf16.msra.mxu0 0
      %612 = vmatpush.bf16.msra.mxu0 0
      %613 = vmatpush.bf16.msra.mxu0 0
      %614 = vmatpush.bf16.msra.mxu0 0
      %615 = vmatpush.bf16.msra.mxu0 0
      %616 = vmatpush.bf16.msra.mxu0 %v607
      %617 = vmatmul.bf16.gmra.mxu0 %v576
      %v618 = vpop.f32.mrf.mxu0
      %v619 = vadd.f32 0.0, %v618
      %v620 = vpop.f32.mrf.mxu0
      %v621 = vadd.f32 0.0, %v620
      %622 = vmatmul.bf16.gmra.mxu0 %v579
      %v623 = vpop.f32.mrf.mxu0
      %v624 = vadd.f32 0.0, %v623
      %v625 = vpop.f32.mrf.mxu0
      %v626 = vadd.f32 0.0, %v625
      %627 = vmatmul.bf16.gmra.mxu0 %v582
      %v628 = vpop.f32.mrf.mxu0
      %v629 = vadd.f32 0.0, %v628
      %v630 = vpop.f32.mrf.mxu0
      %v631 = vadd.f32 0.0, %v630
      %632 = vmatmul.bf16.gmra.mxu0 %v585
      %v633 = vpop.f32.mrf.mxu0
      %v634 = vadd.f32 0.0, %v633
      %v635 = vpop.f32.mrf.mxu0
      %v636 = vadd.f32 0.0, %v635
      %637 = vmatmul.bf16.gmra.mxu0 %v588
      %v638 = vpop.f32.mrf.mxu0
      %v639 = vadd.f32 0.0, %v638
      %v640 = vpop.f32.mrf.mxu0
      %v641 = vadd.f32 0.0, %v640
      %642 = vmatmul.bf16.gmra.mxu0 %v591
      %v643 = vpop.f32.mrf.mxu0
      %v644 = vadd.f32 0.0, %v643
      %v645 = vpop.f32.mrf.mxu0
      %v646 = vadd.f32 0.0, %v645
      %647 = vmatmul.bf16.gmra.mxu0 %v594
      %v648 = vpop.f32.mrf.mxu0
      %v649 = vadd.f32 0.0, %v648
      %v650 = vpop.f32.mrf.mxu0
      %v651 = vadd.f32 0.0, %v650
      %652 = vmatmul.bf16.gmra.mxu0 %v597
      %v653 = vpop.f32.mrf.mxu0
      %v654 = vadd.f32 0.0, %v653
      %v655 = vpop.f32.mrf.mxu0
      %v656 = vadd.f32 0.0, %v655
      %657 = vmatmul.bf16.gmra.mxu0 %v600
      %v658 = vpop.f32.mrf.mxu0
      %v659 = vadd.f32 0.0, %v658
      %v660 = vpop.f32.mrf.mxu0
      %v661 = vadd.f32 0.0, %v660
      %662 = vmatmul.bf16.gmra.mxu0 %v603
      %v663 = vpop.f32.mrf.mxu0
      %v664 = vadd.f32 0.0, %v663
      %v665 = vpop.f32.mrf.mxu0
      %v666 = vadd.f32 0.0, %v665
      %667 = vdwg.mxu0
      %v668 = vld [vmem:[%s4] sm:$0x1]
      %v670 = vperm.slane %v668, 0
      %v672 = vmul.f32 %v619, %v670
      %v673 = vmul.f32 %v621, %v670
      %v674 = vmul.f32 %v624, %v670
      %v675 = vmul.f32 %v626, %v670
      %v676 = vmul.f32 %v629, %v670
      %v677 = vmul.f32 %v631, %v670
      %v678 = vmul.f32 %v634, %v670
      %v679 = vmul.f32 %v636, %v670
      %v680 = vmul.f32 %v639, %v670
      %v681 = vmul.f32 %v641, %v670
      %v682 = vmul.f32 %v644, %v670
      %v683 = vmul.f32 %v646, %v670
      %v684 = vmul.f32 %v649, %v670
      %v685 = vmul.f32 %v651, %v670
      %v686 = vmul.f32 %v654, %v670
      %v687 = vmul.f32 %v656, %v670
      %v688 = vmul.f32 %v659, %v670
      %v689 = vmul.f32 %v661, %v670
      %v690 = vmul.f32 %v664, %v670
      %v691 = vmul.f32 %v666, %v670
      %v692 = vld [vmem:[%s5] sm:$0x1]
      %v694 = vperm.slane %v692, 0
      %v696 = vadd.f32 %v672, %v694
      %v697 = vadd.f32 %v673, %v694
      %v698 = vadd.f32 %v674, %v694
      %v699 = vadd.f32 %v675, %v694
      %v700 = vadd.f32 %v676, %v694
      %v701 = vadd.f32 %v677, %v694
      %v702 = vadd.f32 %v678, %v694
      %v703 = vadd.f32 %v679, %v694
      %v704 = vadd.f32 %v680, %v694
      %v705 = vadd.f32 %v681, %v694
      %v706 = vadd.f32 %v682, %v694
      %v707 = vadd.f32 %v683, %v694
      %v708 = vadd.f32 %v684, %v694
      %v709 = vadd.f32 %v685, %v694
      %v710 = vadd.f32 %v686, %v694
      %v711 = vadd.f32 %v687, %v694
      %v712 = vadd.f32 %v688, %v694
      %v713 = vadd.f32 %v689, %v694
      %v714 = vadd.f32 %v690, %v694
      %v715 = vadd.f32 %v691, %v694
      %v716 = vmul.f32 %v696, 0.5
      %v717 = vmul.f32 %v697, 0.5
      %v718 = vmul.f32 %v698, 0.5
      %v719 = vmul.f32 %v699, 0.5
      %v720 = vmul.f32 %v700, 0.5
      %v721 = vmul.f32 %v701, 0.5
      %v722 = vmul.f32 %v702, 0.5
      %v723 = vmul.f32 %v703, 0.5
      %v724 = vmul.f32 %v704, 0.5
      %v725 = vmul.f32 %v705, 0.5
      %v726 = vmul.f32 %v706, 0.5
      %v727 = vmul.f32 %v707, 0.5
      %v728 = vmul.f32 %v708, 0.5
      %v729 = vmul.f32 %v709, 0.5
      %v730 = vmul.f32 %v710, 0.5
      %v731 = vmul.f32 %v711, 0.5
      %v732 = vmul.f32 %v712, 0.5
      %v733 = vmul.f32 %v713, 0.5
      %v734 = vmul.f32 %v714, 0.5
      %v735 = vmul.f32 %v715, 0.5
      %v736 = vtanh.pop %v716
      %v737 = vtanh.pop %v717
      %v738 = vtanh.pop %v718
      %v739 = vtanh.pop %v719
      %v740 = vtanh.pop %v720
      %v741 = vtanh.pop %v721
      %v742 = vtanh.pop %v722
      %v743 = vtanh.pop %v723
      %v744 = vtanh.pop %v724
      %v745 = vtanh.pop %v725
      %v746 = vtanh.pop %v726
      %v747 = vtanh.pop %v727
      %v748 = vtanh.pop %v728
      %v749 = vtanh.pop %v729
      %v750 = vtanh.pop %v730
      %v751 = vtanh.pop %v731
      %v752 = vtanh.pop %v732
      %v753 = vtanh.pop %v733
      %v754 = vtanh.pop %v734
      %v755 = vtanh.pop %v735
      %v756 = vmul.f32 %v736, 0.5
      %v757 = vmul.f32 %v737, 0.5
      %v758 = vmul.f32 %v738, 0.5
      %v759 = vmul.f32 %v739, 0.5
      %v760 = vmul.f32 %v740, 0.5
      %v761 = vmul.f32 %v741, 0.5
      %v762 = vmul.f32 %v742, 0.5
      %v763 = vmul.f32 %v743, 0.5
      %v764 = vmul.f32 %v744, 0.5
      %v765 = vmul.f32 %v745, 0.5
      %v766 = vmul.f32 %v746, 0.5
      %v767 = vmul.f32 %v747, 0.5
      %v768 = vmul.f32 %v748, 0.5
      %v769 = vmul.f32 %v749, 0.5
      %v770 = vmul.f32 %v750, 0.5
      %v771 = vmul.f32 %v751, 0.5
      %v772 = vmul.f32 %v752, 0.5
      %v773 = vmul.f32 %v753, 0.5
      %v774 = vmul.f32 %v754, 0.5
      %v775 = vmul.f32 %v755, 0.5
      %v776 = vadd.f32 %v756, 0.5
      %v777 = vadd.f32 %v757, 0.5
      %v778 = vadd.f32 %v758, 0.5
      %v779 = vadd.f32 %v759, 0.5
      %v780 = vadd.f32 %v760, 0.5
      %v781 = vadd.f32 %v761, 0.5
      %v782 = vadd.f32 %v762, 0.5
      %v783 = vadd.f32 %v763, 0.5
      %v784 = vadd.f32 %v764, 0.5
      %v785 = vadd.f32 %v765, 0.5
      %v786 = vadd.f32 %v766, 0.5
      %v787 = vadd.f32 %v767, 0.5
      %v788 = vadd.f32 %v768, 0.5
      %v789 = vadd.f32 %v769, 0.5
      %v790 = vadd.f32 %v770, 0.5
      %v791 = vadd.f32 %v771, 0.5
      %v792 = vadd.f32 %v772, 0.5
      %v793 = vadd.f32 %v773, 0.5
      %v794 = vadd.f32 %v774, 0.5
      %v795 = vadd.f32 %v775, 0.5
      %v796 = vmul.f32 %v696, %v776
      %v797 = vmul.f32 %v697, %v777
      %v798 = vmul.f32 %v698, %v778
      %v799 = vmul.f32 %v699, %v779
      %v800 = vmul.f32 %v700, %v780
      %v801 = vmul.f32 %v701, %v781
      %v802 = vmul.f32 %v702, %v782
      %v803 = vmul.f32 %v703, %v783
      %v804 = vmul.f32 %v704, %v784
      %v805 = vmul.f32 %v705, %v785
      %v806 = vmul.f32 %v706, %v786
      %v807 = vmul.f32 %v707, %v787
      %v808 = vmul.f32 %v708, %v788
      %v809 = vmul.f32 %v709, %v789
      %v810 = vmul.f32 %v710, %v790
      %v811 = vmul.f32 %v711, %v791
      %v812 = vmul.f32 %v712, %v792
      %v813 = vmul.f32 %v713, %v793
      %v814 = vmul.f32 %v714, %v794
      %v815 = vmul.f32 %v715, %v795
      %v816 = vlaneseq
      %v817 = vshrl.u32 %v816, 7
      %v818 = vadd.s32 %v817, 8
      %v819 = vadd.s32 %v817, 16
      %v820 = vadd.s32 %v817, 24
      %v821 = vadd.s32 %v817, 32
      %v822 = vadd.s32 %v817, 40
      %v823 = vadd.s32 %v817, 48
      %v824 = vadd.s32 %v817, 56
      %v825 = vadd.s32 %v817, 64
      %v826 = vadd.s32 %v817, 72
      %v827 = vadd.s32 %v817, 80
      %v828 = vadd.s32 %v817, 88
      %v829 = vadd.s32 %v817, 96
      %v830 = vadd.s32 %v817, 104
      %v831 = vadd.s32 %v817, 112
      %v832 = vadd.s32 %v817, 120
      %v833 = vadd.s32 %v817, 128
      %v834 = vadd.s32 %v817, 136
      %v835 = vadd.s32 %v817, 144
      %v836 = vadd.s32 %v817, 152
      %vm837 = vcmp.ge.s32.totalorder %v817, 16
      %vm838 = vcmp.ge.s32.totalorder %v818, 16
      %vm839 = vcmp.ge.s32.totalorder %v819, 16
      %vm840 = vcmp.ge.s32.totalorder %v820, 16
      %vm841 = vcmp.ge.s32.totalorder %v821, 16
      %vm842 = vcmp.ge.s32.totalorder %v822, 16
      %vm843 = vcmp.ge.s32.totalorder %v823, 16
      %vm844 = vcmp.ge.s32.totalorder %v824, 16
      %vm845 = vcmp.ge.s32.totalorder %v825, 16
      %vm846 = vcmp.ge.s32.totalorder %v826, 16
      %vm847 = vcmp.ge.s32.totalorder %v827, 16
      %vm848 = vcmp.ge.s32.totalorder %v828, 16
      %vm849 = vcmp.ge.s32.totalorder %v829, 16
      %vm850 = vcmp.ge.s32.totalorder %v830, 16
      %vm851 = vcmp.ge.s32.totalorder %v831, 16
      %vm852 = vcmp.ge.s32.totalorder %v832, 16
      %vm853 = vcmp.ge.s32.totalorder %v833, 16
      %vm854 = vcmp.ge.s32.totalorder %v834, 16
      %vm855 = vcmp.ge.s32.totalorder %v835, 16
      %vm856 = vcmp.ge.s32.totalorder %v836, 16
      %p857 = scmp.ne.s32.totalorder %s25, 0
      %s858 = scalar_select %p857, 1, 0
      %v859 = vstv %s858
      %vm860 = vcmp.eq.s32.totalorder %v859, 1
      %vm861 = vmor %vm837, %vm860
      %vm862 = vmor %vm838, %vm860
      %vm863 = vmor %vm839, %vm860
      %vm864 = vmor %vm840, %vm860
      %vm865 = vmor %vm841, %vm860
      %vm866 = vmor %vm842, %vm860
      %vm867 = vmor %vm843, %vm860
      %vm868 = vmor %vm844, %vm860
      %vm869 = vmor %vm845, %vm860
      %vm870 = vmor %vm846, %vm860
      %vm871 = vmor %vm847, %vm860
      %vm872 = vmor %vm848, %vm860
      %vm873 = vmor %vm849, %vm860
      %vm874 = vmor %vm850, %vm860
      %vm875 = vmor %vm851, %vm860
      %vm876 = vmor %vm852, %vm860
      %vm877 = vmor %vm853, %vm860
      %vm878 = vmor %vm854, %vm860
      %vm879 = vmor %vm855, %vm860
      %vm880 = vmor %vm856, %vm860
      %vm881 = vcmp.lt.s32.totalorder %v817, 144
      %vm882 = vcmp.lt.s32.totalorder %v818, 144
      %vm883 = vcmp.lt.s32.totalorder %v819, 144
      %vm884 = vcmp.lt.s32.totalorder %v820, 144
      %vm885 = vcmp.lt.s32.totalorder %v821, 144
      %vm886 = vcmp.lt.s32.totalorder %v822, 144
      %vm887 = vcmp.lt.s32.totalorder %v823, 144
      %vm888 = vcmp.lt.s32.totalorder %v824, 144
      %vm889 = vcmp.lt.s32.totalorder %v825, 144
      %vm890 = vcmp.lt.s32.totalorder %v826, 144
      %vm891 = vcmp.lt.s32.totalorder %v827, 144
      %vm892 = vcmp.lt.s32.totalorder %v828, 144
      %vm893 = vcmp.lt.s32.totalorder %v829, 144
      %vm894 = vcmp.lt.s32.totalorder %v830, 144
      %vm895 = vcmp.lt.s32.totalorder %v831, 144
      %vm896 = vcmp.lt.s32.totalorder %v832, 144
      %vm897 = vcmp.lt.s32.totalorder %v833, 144
      %vm898 = vcmp.lt.s32.totalorder %v834, 144
      %vm899 = vcmp.lt.s32.totalorder %v835, 144
      %vm900 = vcmp.lt.s32.totalorder %v836, 144
      %p901 = scmp.ne.s32.totalorder %s25, 1
      %s902 = scalar_select %p901, 1, 0
      %v903 = vstv %s902
      %vm904 = vcmp.eq.s32.totalorder %v903, 1
      %vm905 = vmor %vm881, %vm904
      %vm906 = vmor %vm882, %vm904
      %vm907 = vmor %vm883, %vm904
      %vm908 = vmor %vm884, %vm904
      %vm909 = vmor %vm885, %vm904
      %vm910 = vmor %vm886, %vm904
      %vm911 = vmor %vm887, %vm904
      %vm912 = vmor %vm888, %vm904
      %vm913 = vmor %vm889, %vm904
      %vm914 = vmor %vm890, %vm904
      %vm915 = vmor %vm891, %vm904
      %vm916 = vmor %vm892, %vm904
      %vm917 = vmor %vm893, %vm904
      %vm918 = vmor %vm894, %vm904
      %vm919 = vmor %vm895, %vm904
      %vm920 = vmor %vm896, %vm904
      %vm921 = vmor %vm897, %vm904
      %vm922 = vmor %vm898, %vm904
      %vm923 = vmor %vm899, %vm904
      %vm924 = vmor %vm900, %vm904
      %vm925 = vmand %vm861, %vm905
      %vm926 = vmand %vm862, %vm906
      %vm927 = vmand %vm863, %vm907
      %vm928 = vmand %vm864, %vm908
      %vm929 = vmand %vm865, %vm909
      %vm930 = vmand %vm866, %vm910
      %vm931 = vmand %vm867, %vm911
      %vm932 = vmand %vm868, %vm912
      %vm933 = vmand %vm869, %vm913
      %vm934 = vmand %vm870, %vm914
      %vm935 = vmand %vm871, %vm915
      %vm936 = vmand %vm872, %vm916
      %vm937 = vmand %vm873, %vm917
      %vm938 = vmand %vm874, %vm918
      %vm939 = vmand %vm875, %vm919
      %vm940 = vmand %vm876, %vm920
      %vm941 = vmand %vm877, %vm921
      %vm942 = vmand %vm878, %vm922
      %vm943 = vmand %vm879, %vm923
      %vm944 = vmand %vm880, %vm924
      %v945 = vsel %vm925, 1, 0
      %v946 = vsel %vm926, 1, 0
      %v947 = vsel %vm927, 1, 0
      %v948 = vsel %vm928, 1, 0
      %v949 = vsel %vm929, 1, 0
      %v950 = vsel %vm930, 1, 0
      %v951 = vsel %vm931, 1, 0
      %v952 = vsel %vm932, 1, 0
      %v953 = vsel %vm933, 1, 0
      %v954 = vsel %vm934, 1, 0
      %v955 = vsel %vm935, 1, 0
      %v956 = vsel %vm936, 1, 0
      %v957 = vsel %vm937, 1, 0
      %v958 = vsel %vm938, 1, 0
      %v959 = vsel %vm939, 1, 0
      %v960 = vsel %vm940, 1, 0
      %v961 = vsel %vm941, 1, 0
      %v962 = vsel %vm942, 1, 0
      %v963 = vsel %vm943, 1, 0
      %v964 = vsel %vm944, 1, 0
      %vm965 = vcmp.eq.s32.totalorder %v945, 1
      %vm966 = vcmp.eq.s32.totalorder %v946, 1
      %vm967 = vcmp.eq.s32.totalorder %v947, 1
      %vm968 = vcmp.eq.s32.totalorder %v948, 1
      %vm969 = vcmp.eq.s32.totalorder %v949, 1
      %vm970 = vcmp.eq.s32.totalorder %v950, 1
      %vm971 = vcmp.eq.s32.totalorder %v951, 1
      %vm972 = vcmp.eq.s32.totalorder %v952, 1
      %vm973 = vcmp.eq.s32.totalorder %v953, 1
      %vm974 = vcmp.eq.s32.totalorder %v954, 1
      %vm975 = vcmp.eq.s32.totalorder %v955, 1
      %vm976 = vcmp.eq.s32.totalorder %v956, 1
      %vm977 = vcmp.eq.s32.totalorder %v957, 1
      %vm978 = vcmp.eq.s32.totalorder %v958, 1
      %vm979 = vcmp.eq.s32.totalorder %v959, 1
      %vm980 = vcmp.eq.s32.totalorder %v960, 1
      %vm981 = vcmp.eq.s32.totalorder %v961, 1
      %vm982 = vcmp.eq.s32.totalorder %v962, 1
      %vm983 = vcmp.eq.s32.totalorder %v963, 1
      %vm984 = vcmp.eq.s32.totalorder %v964, 1
      %v985 = vsel %vm965, %v796, 0.0
      %v986 = vsel %vm966, %v797, 0.0
      %v987 = vsel %vm967, %v798, 0.0
      %v988 = vsel %vm968, %v799, 0.0
      %v989 = vsel %vm969, %v800, 0.0
      %v990 = vsel %vm970, %v801, 0.0
      %v991 = vsel %vm971, %v802, 0.0
      %v992 = vsel %vm972, %v803, 0.0
      %v993 = vsel %vm973, %v804, 0.0
      %v994 = vsel %vm974, %v805, 0.0
      %v995 = vsel %vm975, %v806, 0.0
      %v996 = vsel %vm976, %v807, 0.0
      %v997 = vsel %vm977, %v808, 0.0
      %v998 = vsel %vm978, %v809, 0.0
      %v999 = vsel %vm979, %v810, 0.0
      %v1000 = vsel %vm980, %v811, 0.0
      %v1001 = vsel %vm981, %v812, 0.0
      %v1002 = vsel %vm982, %v813, 0.0
      %v1003 = vsel %vm983, %v814, 0.0
      %v1004 = vsel %vm984, %v815, 0.0
      %v1005 = vpack.c.bf16 %v985, %v985
      %v1006 = vpack.c.bf16 %v986, %v986
      %v1007 = vpack.c.bf16 %v987, %v987
      %v1008 = vpack.c.bf16 %v988, %v988
      %v1009 = vpack.c.bf16 %v989, %v989
      %v1010 = vpack.c.bf16 %v990, %v990
      %v1011 = vpack.c.bf16 %v991, %v991
      %v1012 = vpack.c.bf16 %v992, %v992
      %v1013 = vpack.c.bf16 %v993, %v993
      %v1014 = vpack.c.bf16 %v994, %v994
      %v1015 = vpack.c.bf16 %v995, %v995
      %v1016 = vpack.c.bf16 %v996, %v996
      %v1017 = vpack.c.bf16 %v997, %v997
      %v1018 = vpack.c.bf16 %v998, %v998
      %v1019 = vpack.c.bf16 %v999, %v999
      %v1020 = vpack.c.bf16 %v1000, %v1000
      %v1021 = vpack.c.bf16 %v1001, %v1001
      %v1022 = vpack.c.bf16 %v1002, %v1002
      %v1023 = vpack.c.bf16 %v1003, %v1003
      %v1024 = vpack.c.bf16 %v1004, %v1004
      %vm1025 = vcmask 24576
      %vm1026 = vsmask.f32 256
      %vm1027 = vmand %vm1025, %vm1026
      %v1028 = vld [vmem:[#allocation2] sm:$0x1]
      %v1029 = vsel %vm1027, 0, %v1028
      %1030 = vst [vmem:[#allocation2] sm:$0x1] %v1029
      %vm1031 = vsmask.f32 7938
      %vm1032 = vmand %vm1025, %vm1031
      %v1033 = vld [vmem:[#allocation2 + $0x50] sm:$0x1]
      %v1034 = vsel %vm1032, 0, %v1033
      %1035 = vst [vmem:[#allocation2 + $0x50] sm:$0x1] %v1034
      %vm1036 = vsmask.f32 4368
      %vm1037 = vmor %vm1026, %vm1036
      %v1039 = vshrl.u32 %v1005, 16
      %v1041 = vrot.slane %v1039, 7
      %v1042 = vshll.u32 %v1005, 16
      %v1044 = vor.u32 %v1041, %v1042
      %v1045 = vrot.slane %v1041, 4
      %v1047 = vshrl.u32 %v1006, 16
      %v1049 = vrot.slane %v1047, 7
      %v1050 = vshll.u32 %v1006, 16
      %v1052 = vor.u32 %v1049, %v1050
      %v1053 = vsel %vm1037, %v1045, %v1052
      %v1054 = vrot.slane %v1049, 4
      %v1056 = vshrl.u32 %v1007, 16
      %v1058 = vrot.slane %v1056, 7
      %v1059 = vshll.u32 %v1007, 16
      %v1061 = vor.u32 %v1058, %v1059
      %v1062 = vsel %vm1037, %v1054, %v1061
      %v1063 = vrot.slane %v1058, 4
      %v1065 = vshrl.u32 %v1008, 16
      %v1067 = vrot.slane %v1065, 7
      %v1068 = vshll.u32 %v1008, 16
      %v1070 = vor.u32 %v1067, %v1068
      %v1071 = vsel %vm1037, %v1063, %v1070
      %v1072 = vrot.slane %v1067, 4
      %v1074 = vshrl.u32 %v1009, 16
      %v1076 = vrot.slane %v1074, 7
      %v1077 = vshll.u32 %v1009, 16
      %v1079 = vor.u32 %v1076, %v1077
      %v1080 = vsel %vm1037, %v1072, %v1079
      %v1081 = vrot.slane %v1076, 4
      %v1083 = vshrl.u32 %v1010, 16
      %v1085 = vrot.slane %v1083, 7
      %v1086 = vshll.u32 %v1010, 16
      %v1088 = vor.u32 %v1085, %v1086
      %v1089 = vsel %vm1037, %v1081, %v1088
      %v1090 = vrot.slane %v1085, 4
      %v1092 = vshrl.u32 %v1011, 16
      %v1094 = vrot.slane %v1092, 7
      %v1095 = vshll.u32 %v1011, 16
      %v1097 = vor.u32 %v1094, %v1095
      %v1098 = vsel %vm1037, %v1090, %v1097
      %v1099 = vrot.slane %v1094, 4
      %v1101 = vshrl.u32 %v1012, 16
      %v1103 = vrot.slane %v1101, 7
      %v1104 = vshll.u32 %v1012, 16
      %v1106 = vor.u32 %v1103, %v1104
      %v1107 = vsel %vm1037, %v1099, %v1106
      %v1108 = vrot.slane %v1103, 4
      %v1110 = vshrl.u32 %v1013, 16
      %v1112 = vrot.slane %v1110, 7
      %v1113 = vshll.u32 %v1013, 16
      %v1115 = vor.u32 %v1112, %v1113
      %v1116 = vsel %vm1037, %v1108, %v1115
      %v1117 = vrot.slane %v1112, 4
      %v1119 = vshrl.u32 %v1014, 16
      %v1121 = vrot.slane %v1119, 7
      %v1122 = vshll.u32 %v1014, 16
      %v1124 = vor.u32 %v1121, %v1122
      %v1125 = vsel %vm1037, %v1117, %v1124
      %v1126 = vrot.slane %v1121, 4
      %v1128 = vshrl.u32 %v1015, 16
      %v1130 = vrot.slane %v1128, 7
      %v1131 = vshll.u32 %v1015, 16
      %v1133 = vor.u32 %v1130, %v1131
      %v1134 = vsel %vm1037, %v1126, %v1133
      %v1135 = vrot.slane %v1130, 4
      %v1137 = vshrl.u32 %v1016, 16
      %v1139 = vrot.slane %v1137, 7
      %v1140 = vshll.u32 %v1016, 16
      %v1142 = vor.u32 %v1139, %v1140
      %v1143 = vsel %vm1037, %v1135, %v1142
      %v1144 = vrot.slane %v1139, 4
      %v1146 = vshrl.u32 %v1017, 16
      %v1148 = vrot.slane %v1146, 7
      %v1149 = vshll.u32 %v1017, 16
      %v1151 = vor.u32 %v1148, %v1149
      %v1152 = vsel %vm1037, %v1144, %v1151
      %v1153 = vrot.slane %v1148, 4
      %v1155 = vshrl.u32 %v1018, 16
      %v1157 = vrot.slane %v1155, 7
      %v1158 = vshll.u32 %v1018, 16
      %v1160 = vor.u32 %v1157, %v1158
      %v1161 = vsel %vm1037, %v1153, %v1160
      %v1162 = vrot.slane %v1157, 4
      %v1164 = vshrl.u32 %v1019, 16
      %v1166 = vrot.slane %v1164, 7
      %v1167 = vshll.u32 %v1019, 16
      %v1169 = vor.u32 %v1166, %v1167
      %v1170 = vsel %vm1037, %v1162, %v1169
      %v1171 = vrot.slane %v1166, 4
      %v1173 = vshrl.u32 %v1020, 16
      %v1175 = vrot.slane %v1173, 7
      %v1176 = vshll.u32 %v1020, 16
      %v1178 = vor.u32 %v1175, %v1176
      %v1179 = vsel %vm1037, %v1171, %v1178
      %v1180 = vrot.slane %v1175, 4
      %v1182 = vshrl.u32 %v1021, 16
      %v1184 = vrot.slane %v1182, 7
      %v1185 = vshll.u32 %v1021, 16
      %v1187 = vor.u32 %v1184, %v1185
      %v1188 = vsel %vm1037, %v1180, %v1187
      %v1189 = vrot.slane %v1184, 4
      %v1191 = vshrl.u32 %v1022, 16
      %v1193 = vrot.slane %v1191, 7
      %v1194 = vshll.u32 %v1022, 16
      %v1196 = vor.u32 %v1193, %v1194
      %v1197 = vsel %vm1037, %v1189, %v1196
      %v1198 = vrot.slane %v1193, 4
      %v1200 = vshrl.u32 %v1023, 16
      %v1202 = vrot.slane %v1200, 7
      %v1203 = vshll.u32 %v1023, 16
      %v1205 = vor.u32 %v1202, %v1203
      %v1206 = vsel %vm1037, %v1198, %v1205
      %v1207 = vrot.slane %v1202, 4
      %v1209 = vshrl.u32 %v1024, 16
      %v1211 = vrot.slane %v1209, 7
      %v1212 = vshll.u32 %v1024, 16
      %v1214 = vor.u32 %v1211, %v1212
      %v1215 = vsel %vm1037, %v1207, %v1214
      %v1216 = vrot.slane %v1211, 4
      %vm1238 = vcmask 27648
      %vm1239 = vmand %vm1238, %vm1031
      %v1240 = vld [vmem:[#allocation2] sm:$0xf]
      %v1241 = vsel %vm1239, %v1044, %v1240
      %1242 = vst [vmem:[#allocation2] sm:$0xf] %v1241
      %vm1243 = vcmask 27648
      %1244 = vst.msk [vmem:[#allocation2 + $0x4] sm:$0xf] %vm1243, %v1053
      %1245 = vst.msk [vmem:[#allocation2 + $0x8] sm:$0xf] %vm1243, %v1062
      %1246 = vst.msk [vmem:[#allocation2 + $0xc] sm:$0xf] %vm1243, %v1071
      %1247 = vst.msk [vmem:[#allocation2 + $0x10] sm:$0xf] %vm1243, %v1080
      %1248 = vst.msk [vmem:[#allocation2 + $0x14] sm:$0xf] %vm1243, %v1089
      %1249 = vst.msk [vmem:[#allocation2 + $0x18] sm:$0xf] %vm1243, %v1098
      %1250 = vst.msk [vmem:[#allocation2 + $0x1c] sm:$0xf] %vm1243, %v1107
      %1251 = vst.msk [vmem:[#allocation2 + $0x20] sm:$0xf] %vm1243, %v1116
      %1252 = vst.msk [vmem:[#allocation2 + $0x24] sm:$0xf] %vm1243, %v1125
      %1253 = vst.msk [vmem:[#allocation2 + $0x28] sm:$0xf] %vm1243, %v1134
      %1254 = vst.msk [vmem:[#allocation2 + $0x2c] sm:$0xf] %vm1243, %v1143
      %1255 = vst.msk [vmem:[#allocation2 + $0x30] sm:$0xf] %vm1243, %v1152
      %1256 = vst.msk [vmem:[#allocation2 + $0x34] sm:$0xf] %vm1243, %v1161
      %1257 = vst.msk [vmem:[#allocation2 + $0x38] sm:$0xf] %vm1243, %v1170
      %1258 = vst.msk [vmem:[#allocation2 + $0x3c] sm:$0xf] %vm1243, %v1179
      %1259 = vst.msk [vmem:[#allocation2 + $0x40] sm:$0xf] %vm1243, %v1188
      %1260 = vst.msk [vmem:[#allocation2 + $0x44] sm:$0xf] %vm1243, %v1197
      %1261 = vst.msk [vmem:[#allocation2 + $0x48] sm:$0xf] %vm1243, %v1206
      %1262 = vst.msk [vmem:[#allocation2 + $0x4c] sm:$0xf] %vm1243, %v1215
      %v1263 = vld [vmem:[#allocation2 + $0x50] sm:$0x1]
      %v1264 = vsel %vm1027, %v1216, %v1263
      %1265 = vst [vmem:[#allocation2 + $0x50] sm:$0x1] %v1264
      %vm1266 = vcmp.lt.s32.totalorder %v817, 0
      %v1267 = vsub.s32 0, %v817
      %v1268 = vsel %vm1266, %v1267, %v817
      %v1269 = vshrl.u32 %v1268, 4
      %v1270 = vand.u32 %v1268, 15
      %v1271 = vsub.s32 0, %v1270
      %v1272 = vsel %vm1266, %v1271, %v1270
      %vm1273 = vcmp.lt.s32.totalorder %v818, 0
      %v1274 = vsub.s32 0, %v818
      %v1275 = vsel %vm1273, %v1274, %v818
      %v1276 = vshrl.u32 %v1275, 4
      %v1277 = vand.u32 %v1275, 15
      %v1278 = vsub.s32 0, %v1277
      %v1279 = vsel %vm1273, %v1278, %v1277
      %vm1280 = vcmp.lt.s32.totalorder %v819, 0
      %v1281 = vsub.s32 0, %v819
      %v1282 = vsel %vm1280, %v1281, %v819
      %v1283 = vshrl.u32 %v1282, 4
      %v1284 = vand.u32 %v1282, 15
      %v1285 = vsub.s32 0, %v1284
      %v1286 = vsel %vm1280, %v1285, %v1284
      %vm1287 = vcmp.lt.s32.totalorder %v820, 0
      %v1288 = vsub.s32 0, %v820
      %v1289 = vsel %vm1287, %v1288, %v820
      %v1290 = vshrl.u32 %v1289, 4
      %v1291 = vand.u32 %v1289, 15
      %v1292 = vsub.s32 0, %v1291
      %v1293 = vsel %vm1287, %v1292, %v1291
      %vm1294 = vcmp.lt.s32.totalorder %v821, 0
      %v1295 = vsub.s32 0, %v821
      %v1296 = vsel %vm1294, %v1295, %v821
      %v1297 = vshrl.u32 %v1296, 4
      %v1298 = vand.u32 %v1296, 15
      %v1299 = vsub.s32 0, %v1298
      %v1300 = vsel %vm1294, %v1299, %v1298
      %vm1301 = vcmp.lt.s32.totalorder %v822, 0
      %v1302 = vsub.s32 0, %v822
      %v1303 = vsel %vm1301, %v1302, %v822
      %v1304 = vshrl.u32 %v1303, 4
      %v1305 = vand.u32 %v1303, 15
      %v1306 = vsub.s32 0, %v1305
      %v1307 = vsel %vm1301, %v1306, %v1305
      %vm1308 = vcmp.lt.s32.totalorder %v823, 0
      %v1309 = vsub.s32 0, %v823
      %v1310 = vsel %vm1308, %v1309, %v823
      %v1311 = vshrl.u32 %v1310, 4
      %v1312 = vand.u32 %v1310, 15
      %v1313 = vsub.s32 0, %v1312
      %v1314 = vsel %vm1308, %v1313, %v1312
      %vm1315 = vcmp.lt.s32.totalorder %v824, 0
      %v1316 = vsub.s32 0, %v824
      %v1317 = vsel %vm1315, %v1316, %v824
      %v1318 = vshrl.u32 %v1317, 4
      %v1319 = vand.u32 %v1317, 15
      %v1320 = vsub.s32 0, %v1319
      %v1321 = vsel %vm1315, %v1320, %v1319
      %vm1322 = vcmp.lt.s32.totalorder %v825, 0
      %v1323 = vsub.s32 0, %v825
      %v1324 = vsel %vm1322, %v1323, %v825
      %v1325 = vshrl.u32 %v1324, 4
      %v1326 = vand.u32 %v1324, 15
      %v1327 = vsub.s32 0, %v1326
      %v1328 = vsel %vm1322, %v1327, %v1326
      %vm1329 = vcmp.lt.s32.totalorder %v826, 0
      %v1330 = vsub.s32 0, %v826
      %v1331 = vsel %vm1329, %v1330, %v826
      %v1332 = vshrl.u32 %v1331, 4
      %v1333 = vand.u32 %v1331, 15
      %v1334 = vsub.s32 0, %v1333
      %v1335 = vsel %vm1329, %v1334, %v1333
      %vm1336 = vcmp.lt.s32.totalorder %v827, 0
      %v1337 = vsub.s32 0, %v827
      %v1338 = vsel %vm1336, %v1337, %v827
      %v1339 = vshrl.u32 %v1338, 4
      %v1340 = vand.u32 %v1338, 15
      %v1341 = vsub.s32 0, %v1340
      %v1342 = vsel %vm1336, %v1341, %v1340
      %vm1343 = vcmp.lt.s32.totalorder %v828, 0
      %v1344 = vsub.s32 0, %v828
      %v1345 = vsel %vm1343, %v1344, %v828
      %v1346 = vshrl.u32 %v1345, 4
      %v1347 = vand.u32 %v1345, 15
      %v1348 = vsub.s32 0, %v1347
      %v1349 = vsel %vm1343, %v1348, %v1347
      %vm1350 = vcmp.lt.s32.totalorder %v829, 0
      %v1351 = vsub.s32 0, %v829
      %v1352 = vsel %vm1350, %v1351, %v829
      %v1353 = vshrl.u32 %v1352, 4
      %v1354 = vand.u32 %v1352, 15
      %v1355 = vsub.s32 0, %v1354
      %v1356 = vsel %vm1350, %v1355, %v1354
      %vm1357 = vcmp.lt.s32.totalorder %v830, 0
      %v1358 = vsub.s32 0, %v830
      %v1359 = vsel %vm1357, %v1358, %v830
      %v1360 = vshrl.u32 %v1359, 4
      %v1361 = vand.u32 %v1359, 15
      %v1362 = vsub.s32 0, %v1361
      %v1363 = vsel %vm1357, %v1362, %v1361
      %vm1364 = vcmp.lt.s32.totalorder %v831, 0
      %v1365 = vsub.s32 0, %v831
      %v1366 = vsel %vm1364, %v1365, %v831
      %v1367 = vshrl.u32 %v1366, 4
      %v1368 = vand.u32 %v1366, 15
      %v1369 = vsub.s32 0, %v1368
      %v1370 = vsel %vm1364, %v1369, %v1368
      %vm1371 = vcmp.lt.s32.totalorder %v832, 0
      %v1372 = vsub.s32 0, %v832
      %v1373 = vsel %vm1371, %v1372, %v832
      %v1374 = vshrl.u32 %v1373, 4
      %v1375 = vand.u32 %v1373, 15
      %v1376 = vsub.s32 0, %v1375
      %v1377 = vsel %vm1371, %v1376, %v1375
      %vm1378 = vcmp.ne.s32.totalorder %v1272, 0
      %vm1379 = vcmp.ne.s32.totalorder %v1279, 0
      %vm1380 = vcmp.ne.s32.totalorder %v1286, 0
      %vm1381 = vcmp.ne.s32.totalorder %v1293, 0
      %vm1382 = vcmp.ne.s32.totalorder %v1300, 0
      %vm1383 = vcmp.ne.s32.totalorder %v1307, 0
      %vm1384 = vcmp.ne.s32.totalorder %v1314, 0
      %vm1385 = vcmp.ne.s32.totalorder %v1321, 0
      %vm1386 = vcmp.ne.s32.totalorder %v1328, 0
      %vm1387 = vcmp.ne.s32.totalorder %v1335, 0
      %vm1388 = vcmp.ne.s32.totalorder %v1342, 0
      %vm1389 = vcmp.ne.s32.totalorder %v1349, 0
      %vm1390 = vcmp.ne.s32.totalorder %v1356, 0
      %vm1391 = vcmp.ne.s32.totalorder %v1363, 0
      %vm1392 = vcmp.ne.s32.totalorder %v1370, 0
      %vm1393 = vcmp.ne.s32.totalorder %v1377, 0
      %vm1394 = vcmp.lt.s32.totalorder %v1272, 0
      %vm1395 = vcmp.lt.s32.totalorder %v1279, 0
      %vm1396 = vcmp.lt.s32.totalorder %v1286, 0
      %vm1397 = vcmp.lt.s32.totalorder %v1293, 0
      %vm1398 = vcmp.lt.s32.totalorder %v1300, 0
      %vm1399 = vcmp.lt.s32.totalorder %v1307, 0
      %vm1400 = vcmp.lt.s32.totalorder %v1314, 0
      %vm1401 = vcmp.lt.s32.totalorder %v1321, 0
      %vm1402 = vcmp.lt.s32.totalorder %v1328, 0
      %vm1403 = vcmp.lt.s32.totalorder %v1335, 0
      %vm1404 = vcmp.lt.s32.totalorder %v1342, 0
      %vm1405 = vcmp.lt.s32.totalorder %v1349, 0
      %vm1406 = vcmp.lt.s32.totalorder %v1356, 0
      %vm1407 = vcmp.lt.s32.totalorder %v1363, 0
      %vm1408 = vcmp.lt.s32.totalorder %v1370, 0
      %vm1409 = vcmp.lt.s32.totalorder %v1377, 0
      %vm1410 = vmand %vm1394, %vm1378
      %vm1411 = vmand %vm1395, %vm1379
      %vm1412 = vmand %vm1396, %vm1380
      %vm1413 = vmand %vm1397, %vm1381
      %vm1414 = vmand %vm1398, %vm1382
      %vm1415 = vmand %vm1399, %vm1383
      %vm1416 = vmand %vm1400, %vm1384
      %vm1417 = vmand %vm1401, %vm1385
      %vm1418 = vmand %vm1402, %vm1386
      %vm1419 = vmand %vm1403, %vm1387
      %vm1420 = vmand %vm1404, %vm1388
      %vm1421 = vmand %vm1405, %vm1389
      %vm1422 = vmand %vm1406, %vm1390
      %vm1423 = vmand %vm1407, %vm1391
      %vm1424 = vmand %vm1408, %vm1392
      %vm1425 = vmand %vm1409, %vm1393
      %v1426 = vadd.s32 %v1272, 16
      %v1427 = vadd.s32 %v1279, 16
      %v1428 = vadd.s32 %v1286, 16
      %v1429 = vadd.s32 %v1293, 16
      %v1430 = vadd.s32 %v1300, 16
      %v1431 = vadd.s32 %v1307, 16
      %v1432 = vadd.s32 %v1314, 16
      %v1433 = vadd.s32 %v1321, 16
      %v1434 = vadd.s32 %v1328, 16
      %v1435 = vadd.s32 %v1335, 16
      %v1436 = vadd.s32 %v1342, 16
      %v1437 = vadd.s32 %v1349, 16
      %v1438 = vadd.s32 %v1356, 16
      %v1439 = vadd.s32 %v1363, 16
      %v1440 = vadd.s32 %v1370, 16
      %v1441 = vadd.s32 %v1377, 16
      %v1442 = vsel %vm1410, %v1426, %v1272
      %v1443 = vsel %vm1411, %v1427, %v1279
      %v1444 = vsel %vm1412, %v1428, %v1286
      %v1445 = vsel %vm1413, %v1429, %v1293
      %v1446 = vsel %vm1414, %v1430, %v1300
      %v1447 = vsel %vm1415, %v1431, %v1307
      %v1448 = vsel %vm1416, %v1432, %v1314
      %v1449 = vsel %vm1417, %v1433, %v1321
      %v1450 = vsel %vm1418, %v1434, %v1328
      %v1451 = vsel %vm1419, %v1435, %v1335
      %v1452 = vsel %vm1420, %v1436, %v1342
      %v1453 = vsel %vm1421, %v1437, %v1349
      %v1454 = vsel %vm1422, %v1438, %v1356
      %v1455 = vsel %vm1423, %v1439, %v1363
      %v1456 = vsel %vm1424, %v1440, %v1370
      %v1457 = vsel %vm1425, %v1441, %v1377
      %vm1458 = vcmp.ne.s32.totalorder %v1442, 0
      %vm1459 = vcmp.ne.s32.totalorder %v1443, 0
      %vm1460 = vcmp.ne.s32.totalorder %v1444, 0
      %vm1461 = vcmp.ne.s32.totalorder %v1445, 0
      %vm1462 = vcmp.ne.s32.totalorder %v1446, 0
      %vm1463 = vcmp.ne.s32.totalorder %v1447, 0
      %vm1464 = vcmp.ne.s32.totalorder %v1448, 0
      %vm1465 = vcmp.ne.s32.totalorder %v1449, 0
      %vm1466 = vcmp.ne.s32.totalorder %v1450, 0
      %vm1467 = vcmp.ne.s32.totalorder %v1451, 0
      %vm1468 = vcmp.ne.s32.totalorder %v1452, 0
      %vm1469 = vcmp.ne.s32.totalorder %v1453, 0
      %vm1470 = vcmp.ne.s32.totalorder %v1454, 0
      %vm1471 = vcmp.ne.s32.totalorder %v1455, 0
      %vm1472 = vcmp.ne.s32.totalorder %v1456, 0
      %vm1473 = vcmp.ne.s32.totalorder %v1457, 0
      %vm1474 = vcmp.ne.s32.totalorder %v1442, 15
      %vm1475 = vcmp.ne.s32.totalorder %v1443, 15
      %vm1476 = vcmp.ne.s32.totalorder %v1444, 15
      %vm1477 = vcmp.ne.s32.totalorder %v1445, 15
      %vm1478 = vcmp.ne.s32.totalorder %v1446, 15
      %vm1479 = vcmp.ne.s32.totalorder %v1447, 15
      %vm1480 = vcmp.ne.s32.totalorder %v1448, 15
      %vm1481 = vcmp.ne.s32.totalorder %v1449, 15
      %vm1482 = vcmp.ne.s32.totalorder %v1450, 15
      %vm1483 = vcmp.ne.s32.totalorder %v1451, 15
      %vm1484 = vcmp.ne.s32.totalorder %v1452, 15
      %vm1485 = vcmp.ne.s32.totalorder %v1453, 15
      %vm1486 = vcmp.ne.s32.totalorder %v1454, 15
      %vm1487 = vcmp.ne.s32.totalorder %v1455, 15
      %vm1488 = vcmp.ne.s32.totalorder %v1456, 15
      %vm1489 = vcmp.ne.s32.totalorder %v1457, 15
      %v1490 = vld [vmem:[#allocation2] sm:$0xf]
      %v1491 = vld [vmem:[#allocation2 + $0x4] sm:$0xf]
      %v1492 = vld [vmem:[#allocation2 + $0x8] sm:$0xf]
      %v1493 = vld [vmem:[#allocation2 + $0xc] sm:$0xf]
      %v1494 = vld [vmem:[#allocation2 + $0x10] sm:$0xf]
      %v1495 = vld [vmem:[#allocation2 + $0x14] sm:$0xf]
      %v1496 = vld [vmem:[#allocation2 + $0x18] sm:$0xf]
      %v1497 = vld [vmem:[#allocation2 + $0x1c] sm:$0xf]
      %v1498 = vld [vmem:[#allocation2 + $0x20] sm:$0xf]
      %v1499 = vld [vmem:[#allocation2 + $0x24] sm:$0xf]
      %v1500 = vld [vmem:[#allocation2 + $0x28] sm:$0xf]
      %v1501 = vld [vmem:[#allocation2 + $0x2c] sm:$0xf]
      %v1502 = vld [vmem:[#allocation2 + $0x30] sm:$0xf]
      %v1503 = vld [vmem:[#allocation2 + $0x34] sm:$0xf]
      %v1504 = vld [vmem:[#allocation2 + $0x38] sm:$0xf]
      %v1505 = vld [vmem:[#allocation2 + $0x3c] sm:$0xf]
      %v1506 = vsel %vm1458, 1, 0
      %v1507 = vsel %vm1459, 1, 0
      %v1508 = vsel %vm1460, 1, 0
      %v1509 = vsel %vm1461, 1, 0
      %v1510 = vsel %vm1462, 1, 0
      %v1511 = vsel %vm1463, 1, 0
      %v1512 = vsel %vm1464, 1, 0
      %v1513 = vsel %vm1465, 1, 0
      %v1514 = vsel %vm1466, 1, 0
      %v1515 = vsel %vm1467, 1, 0
      %v1516 = vsel %vm1468, 1, 0
      %v1517 = vsel %vm1469, 1, 0
      %v1518 = vsel %vm1470, 1, 0
      %v1519 = vsel %vm1471, 1, 0
      %v1520 = vsel %vm1472, 1, 0
      %v1521 = vsel %vm1473, 1, 0
      %vm1522 = vcmp.eq.s32.totalorder %v1506, 1
      %vm1523 = vcmp.eq.s32.totalorder %v1507, 1
      %vm1524 = vcmp.eq.s32.totalorder %v1508, 1
      %vm1525 = vcmp.eq.s32.totalorder %v1509, 1
      %vm1526 = vcmp.eq.s32.totalorder %v1510, 1
      %vm1527 = vcmp.eq.s32.totalorder %v1511, 1
      %vm1528 = vcmp.eq.s32.totalorder %v1512, 1
      %vm1529 = vcmp.eq.s32.totalorder %v1513, 1
      %vm1530 = vcmp.eq.s32.totalorder %v1514, 1
      %vm1531 = vcmp.eq.s32.totalorder %v1515, 1
      %vm1532 = vcmp.eq.s32.totalorder %v1516, 1
      %vm1533 = vcmp.eq.s32.totalorder %v1517, 1
      %vm1534 = vcmp.eq.s32.totalorder %v1518, 1
      %vm1535 = vcmp.eq.s32.totalorder %v1519, 1
      %vm1536 = vcmp.eq.s32.totalorder %v1520, 1
      %vm1537 = vcmp.eq.s32.totalorder %v1521, 1
      %vm1538 = vmpackc.low %vm1522, %vm1522
      %vm1539 = vmpackc.low %vm1523, %vm1523
      %vm1540 = vmpackc.low %vm1524, %vm1524
      %vm1541 = vmpackc.low %vm1525, %vm1525
      %vm1542 = vmpackc.low %vm1526, %vm1526
      %vm1543 = vmpackc.low %vm1527, %vm1527
      %vm1544 = vmpackc.low %vm1528, %vm1528
      %vm1545 = vmpackc.low %vm1529, %vm1529
      %vm1546 = vmpackc.low %vm1530, %vm1530
      %vm1547 = vmpackc.low %vm1531, %vm1531
      %vm1548 = vmpackc.low %vm1532, %vm1532
      %vm1549 = vmpackc.low %vm1533, %vm1533
      %vm1550 = vmpackc.low %vm1534, %vm1534
      %vm1551 = vmpackc.low %vm1535, %vm1535
      %vm1552 = vmpackc.low %vm1536, %vm1536
      %vm1553 = vmpackc.low %vm1537, %vm1537
      %v1554 = vsel %vm1538, %v1490, 0
      %v1555 = vsel %vm1539, %v1491, 0
      %v1556 = vsel %vm1540, %v1492, 0
      %v1557 = vsel %vm1541, %v1493, 0
      %v1558 = vsel %vm1542, %v1494, 0
      %v1559 = vsel %vm1543, %v1495, 0
      %v1560 = vsel %vm1544, %v1496, 0
      %v1561 = vsel %vm1545, %v1497, 0
      %v1562 = vsel %vm1546, %v1498, 0
      %v1563 = vsel %vm1547, %v1499, 0
      %v1564 = vsel %vm1548, %v1500, 0
      %v1565 = vsel %vm1549, %v1501, 0
      %v1566 = vsel %vm1550, %v1502, 0
      %v1567 = vsel %vm1551, %v1503, 0
      %v1568 = vsel %vm1552, %v1504, 0
      %v1569 = vsel %vm1553, %v1505, 0
      %1570 = vst.msk [vmem:[#allocation3] sm:$0xf] %vm1243, %v1554
      %1571 = vst.msk [vmem:[#allocation3 + $0x4] sm:$0xf] %vm1243, %v1555
      %1572 = vst.msk [vmem:[#allocation3 + $0x8] sm:$0xf] %vm1243, %v1556
      %1573 = vst.msk [vmem:[#allocation3 + $0xc] sm:$0xf] %vm1243, %v1557
      %1574 = vst.msk [vmem:[#allocation3 + $0x10] sm:$0xf] %vm1243, %v1558
      %1575 = vst.msk [vmem:[#allocation3 + $0x14] sm:$0xf] %vm1243, %v1559
      %1576 = vst.msk [vmem:[#allocation3 + $0x18] sm:$0xf] %vm1243, %v1560
      %1577 = vst.msk [vmem:[#allocation3 + $0x1c] sm:$0xf] %vm1243, %v1561
      %1578 = vst.msk [vmem:[#allocation3 + $0x20] sm:$0xf] %vm1243, %v1562
      %1579 = vst.msk [vmem:[#allocation3 + $0x24] sm:$0xf] %vm1243, %v1563
      %1580 = vst.msk [vmem:[#allocation3 + $0x28] sm:$0xf] %vm1243, %v1564
      %1581 = vst.msk [vmem:[#allocation3 + $0x2c] sm:$0xf] %vm1243, %v1565
      %1582 = vst.msk [vmem:[#allocation3 + $0x30] sm:$0xf] %vm1243, %v1566
      %1583 = vst.msk [vmem:[#allocation3 + $0x34] sm:$0xf] %vm1243, %v1567
      %1584 = vst.msk [vmem:[#allocation3 + $0x38] sm:$0xf] %vm1243, %v1568
      %1585 = vst.msk [vmem:[#allocation3 + $0x3c] sm:$0xf] %vm1243, %v1569
      %v1586 = vld [vmem:[#allocation2] sm:$0xf]
      %v1587 = vld [vmem:[#allocation2 + $0x4] sm:$0xf]
      %v1588 = vld [vmem:[#allocation2 + $0x8] sm:$0xf]
      %v1589 = vld [vmem:[#allocation2 + $0xc] sm:$0xf]
      %v1590 = vld [vmem:[#allocation2 + $0x10] sm:$0xf]
      %v1591 = vld [vmem:[#allocation2 + $0x14] sm:$0xf]
      %v1592 = vld [vmem:[#allocation2 + $0x18] sm:$0xf]
      %v1593 = vld [vmem:[#allocation2 + $0x1c] sm:$0xf]
      %v1594 = vld [vmem:[#allocation2 + $0x20] sm:$0xf]
      %v1595 = vld [vmem:[#allocation2 + $0x24] sm:$0xf]
      %v1596 = vld [vmem:[#allocation2 + $0x28] sm:$0xf]
      %v1597 = vld [vmem:[#allocation2 + $0x2c] sm:$0xf]
      %v1598 = vld [vmem:[#allocation2 + $0x30] sm:$0xf]
      %v1599 = vld [vmem:[#allocation2 + $0x34] sm:$0xf]
      %v1600 = vld [vmem:[#allocation2 + $0x38] sm:$0xf]
      %v1601 = vld [vmem:[#allocation2 + $0x3c] sm:$0xf]
      %v1602 = vld [vmem:[#allocation2 + $0x40] sm:$0x1]
      %vm1603 = vsmask.f32 3328
      %vm1604 = vsmask.f32 7440
      %vm1605 = vmor %vm1603, %vm1604
      %v1607 = vshrl.u32 %v1586, 16
      %v1609 = vrot.slane %v1607, 4
      %v1610 = vshll.u32 %v1586, 16
      %v1612 = vrot.slane %v1610, 5
      %v1613 = vor.u32 %v1609, %v1612
      %v1614 = vrot.slane %v1613, 4
      %v1616 = vshll.u32 %v1587, 16
      %v1618 = vrot.slane %v1616, 5
      %v1619 = vsel %vm1605, %v1614, %v1618
      %v1620 = vshrl.u32 %v1587, 16
      %v1622 = vrot.slane %v1620, 4
      %v1623 = vor.u32 %v1622, %v1618
      %v1624 = vrot.slane %v1623, 4
      %v1626 = vshll.u32 %v1588, 16
      %v1628 = vrot.slane %v1626, 5
      %v1629 = vsel %vm1605, %v1624, %v1628
      %v1630 = vshrl.u32 %v1588, 16
      %v1632 = vrot.slane %v1630, 4
      %v1633 = vor.u32 %v1632, %v1628
      %v1634 = vrot.slane %v1633, 4
      %v1636 = vshll.u32 %v1589, 16
      %v1638 = vrot.slane %v1636, 5
      %v1639 = vsel %vm1605, %v1634, %v1638
      %v1640 = vshrl.u32 %v1589, 16
      %v1642 = vrot.slane %v1640, 4
      %v1643 = vor.u32 %v1642, %v1638
      %v1644 = vrot.slane %v1643, 4
      %v1646 = vshll.u32 %v1590, 16
      %v1648 = vrot.slane %v1646, 5
      %v1649 = vsel %vm1605, %v1644, %v1648
      %v1650 = vshrl.u32 %v1590, 16
      %v1652 = vrot.slane %v1650, 4
      %v1653 = vor.u32 %v1652, %v1648
      %v1654 = vrot.slane %v1653, 4
      %v1656 = vshll.u32 %v1591, 16
      %v1658 = vrot.slane %v1656, 5
      %v1659 = vsel %vm1605, %v1654, %v1658
      %v1660 = vshrl.u32 %v1591, 16
      %v1662 = vrot.slane %v1660, 4
      %v1663 = vor.u32 %v1662, %v1658
      %v1664 = vrot.slane %v1663, 4
      %v1666 = vshll.u32 %v1592, 16
      %v1668 = vrot.slane %v1666, 5
      %v1669 = vsel %vm1605, %v1664, %v1668
      %v1670 = vshrl.u32 %v1592, 16
      %v1672 = vrot.slane %v1670, 4
      %v1673 = vor.u32 %v1672, %v1668
      %v1674 = vrot.slane %v1673, 4
      %v1676 = vshll.u32 %v1593, 16
      %v1678 = vrot.slane %v1676, 5
      %v1679 = vsel %vm1605, %v1674, %v1678
      %v1680 = vshrl.u32 %v1593, 16
      %v1682 = vrot.slane %v1680, 4
      %v1683 = vor.u32 %v1682, %v1678
      %v1684 = vrot.slane %v1683, 4
      %v1686 = vshll.u32 %v1594, 16
      %v1688 = vrot.slane %v1686, 5
      %v1689 = vsel %vm1605, %v1684, %v1688
      %v1690 = vshrl.u32 %v1594, 16
      %v1692 = vrot.slane %v1690, 4
      %v1693 = vor.u32 %v1692, %v1688
      %v1694 = vrot.slane %v1693, 4
      %v1696 = vshll.u32 %v1595, 16
      %v1698 = vrot.slane %v1696, 5
      %v1699 = vsel %vm1605, %v1694, %v1698
      %v1700 = vshrl.u32 %v1595, 16
      %v1702 = vrot.slane %v1700, 4
      %v1703 = vor.u32 %v1702, %v1698
      %v1704 = vrot.slane %v1703, 4
      %v1706 = vshll.u32 %v1596, 16
      %v1708 = vrot.slane %v1706, 5
      %v1709 = vsel %vm1605, %v1704, %v1708
      %v1710 = vshrl.u32 %v1596, 16
      %v1712 = vrot.slane %v1710, 4
      %v1713 = vor.u32 %v1712, %v1708
      %v1714 = vrot.slane %v1713, 4
      %v1716 = vshll.u32 %v1597, 16
      %v1718 = vrot.slane %v1716, 5
      %v1719 = vsel %vm1605, %v1714, %v1718
      %v1720 = vshrl.u32 %v1597, 16
      %v1722 = vrot.slane %v1720, 4
      %v1723 = vor.u32 %v1722, %v1718
      %v1724 = vrot.slane %v1723, 4
      %v1726 = vshll.u32 %v1598, 16
      %v1728 = vrot.slane %v1726, 5
      %v1729 = vsel %vm1605, %v1724, %v1728
      %v1730 = vshrl.u32 %v1598, 16
      %v1732 = vrot.slane %v1730, 4
      %v1733 = vor.u32 %v1732, %v1728
      %v1734 = vrot.slane %v1733, 4
      %v1736 = vshll.u32 %v1599, 16
      %v1738 = vrot.slane %v1736, 5
      %v1739 = vsel %vm1605, %v1734, %v1738
      %v1740 = vshrl.u32 %v1599, 16
      %v1742 = vrot.slane %v1740, 4
      %v1743 = vor.u32 %v1742, %v1738
      %v1744 = vrot.slane %v1743, 4
      %v1746 = vshll.u32 %v1600, 16
      %v1748 = vrot.slane %v1746, 5
      %v1749 = vsel %vm1605, %v1744, %v1748
      %v1750 = vshrl.u32 %v1600, 16
      %v1752 = vrot.slane %v1750, 4
      %v1753 = vor.u32 %v1752, %v1748
      %v1754 = vrot.slane %v1753, 4
      %v1756 = vshll.u32 %v1601, 16
      %v1758 = vrot.slane %v1756, 5
      %v1759 = vsel %vm1605, %v1754, %v1758
      %v1760 = vshrl.u32 %v1601, 16
      %v1762 = vrot.slane %v1760, 4
      %v1763 = vor.u32 %v1762, %v1758
      %v1764 = vrot.slane %v1763, 4
      %v1766 = vshll.u32 %v1602, 16
      %v1768 = vrot.slane %v1766, 5
      %v1769 = vsel %vm1605, %v1764, %v1768
      %1770 = vrot.lane.b32.xlu0 %v1619, 4
      %v1771 = vpop.permute.xlu0 %1770
      %1772 = vrot.lane.b32.xlu0 %v1629, 4
      %v1773 = vpop.permute.xlu0 %1772
      %1774 = vrot.lane.b32.xlu0 %v1639, 4
      %v1775 = vpop.permute.xlu0 %1774
      %1776 = vrot.lane.b32.xlu0 %v1649, 4
      %v1777 = vpop.permute.xlu0 %1776
      %1778 = vrot.lane.b32.xlu0 %v1659, 4
      %v1779 = vpop.permute.xlu0 %1778
      %1780 = vrot.lane.b32.xlu0 %v1669, 4
      %v1781 = vpop.permute.xlu0 %1780
      %1782 = vrot.lane.b32.xlu0 %v1679, 4
      %v1783 = vpop.permute.xlu0 %1782
      %1784 = vrot.lane.b32.xlu0 %v1689, 4
      %v1785 = vpop.permute.xlu0 %1784
      %1786 = vrot.lane.b32.xlu0 %v1699, 4
      %v1787 = vpop.permute.xlu0 %1786
      %1788 = vrot.lane.b32.xlu0 %v1709, 4
      %v1789 = vpop.permute.xlu0 %1788
      %1790 = vrot.lane.b32.xlu0 %v1719, 4
      %v1791 = vpop.permute.xlu0 %1790
      %1792 = vrot.lane.b32.xlu0 %v1729, 4
      %v1793 = vpop.permute.xlu0 %1792
      %1794 = vrot.lane.b32.xlu0 %v1739, 4
      %v1795 = vpop.permute.xlu0 %1794
      %1796 = vrot.lane.b32.xlu0 %v1749, 4
      %v1797 = vpop.permute.xlu0 %1796
      %1798 = vrot.lane.b32.xlu0 %v1759, 4
      %v1799 = vpop.permute.xlu0 %1798
      %1800 = vrot.lane.b32.xlu0 %v1769, 4
      %v1801 = vpop.permute.xlu0 %1800
      %vm1818 = vcmask 60448
      %1819 = vst.msk [vmem:[#allocation3] sm:$0xf] %vm1818, %v1771
      %1820 = vst.msk [vmem:[#allocation3 + $0x4] sm:$0xf] %vm1818, %v1773
      %1821 = vst.msk [vmem:[#allocation3 + $0x8] sm:$0xf] %vm1818, %v1775
      %1822 = vst.msk [vmem:[#allocation3 + $0xc] sm:$0xf] %vm1818, %v1777
      %1823 = vst.msk [vmem:[#allocation3 + $0x10] sm:$0xf] %vm1818, %v1779
      %1824 = vst.msk [vmem:[#allocation3 + $0x14] sm:$0xf] %vm1818, %v1781
      %1825 = vst.msk [vmem:[#allocation3 + $0x18] sm:$0xf] %vm1818, %v1783
      %1826 = vst.msk [vmem:[#allocation3 + $0x1c] sm:$0xf] %vm1818, %v1785
      %1827 = vst.msk [vmem:[#allocation3 + $0x20] sm:$0xf] %vm1818, %v1787
      %1828 = vst.msk [vmem:[#allocation3 + $0x24] sm:$0xf] %vm1818, %v1789
      %1829 = vst.msk [vmem:[#allocation3 + $0x28] sm:$0xf] %vm1818, %v1791
      %1830 = vst.msk [vmem:[#allocation3 + $0x2c] sm:$0xf] %vm1818, %v1793
      %1831 = vst.msk [vmem:[#allocation3 + $0x30] sm:$0xf] %vm1818, %v1795
      %1832 = vst.msk [vmem:[#allocation3 + $0x34] sm:$0xf] %vm1818, %v1797
      %1833 = vst.msk [vmem:[#allocation3 + $0x38] sm:$0xf] %vm1818, %v1799
      %1834 = vst.msk [vmem:[#allocation3 + $0x3c] sm:$0xf] %vm1818, %v1801
      %v1835 = vld [vmem:[#allocation2] sm:$0xe]
      %v1836 = vld [vmem:[#allocation2 + $0x4] sm:$0xf]
      %v1837 = vld [vmem:[#allocation2 + $0x8] sm:$0xf]
      %v1838 = vld [vmem:[#allocation2 + $0xc] sm:$0xf]
      %v1839 = vld [vmem:[#allocation2 + $0x10] sm:$0xf]
      %v1840 = vld [vmem:[#allocation2 + $0x14] sm:$0xf]
      %v1841 = vld [vmem:[#allocation2 + $0x18] sm:$0xf]
      %v1842 = vld [vmem:[#allocation2 + $0x1c] sm:$0xf]
      %v1843 = vld [vmem:[#allocation2 + $0x20] sm:$0xf]
      %v1844 = vld [vmem:[#allocation2 + $0x24] sm:$0xf]
      %v1845 = vld [vmem:[#allocation2 + $0x28] sm:$0xf]
      %v1846 = vld [vmem:[#allocation2 + $0x2c] sm:$0xf]
      %v1847 = vld [vmem:[#allocation2 + $0x30] sm:$0xf]
      %v1848 = vld [vmem:[#allocation2 + $0x34] sm:$0xf]
      %v1849 = vld [vmem:[#allocation2 + $0x38] sm:$0xf]
      %v1850 = vld [vmem:[#allocation2 + $0x3c] sm:$0xf]
      %v1851 = vld [vmem:[#allocation2 + $0x40] sm:$0x1]
      %v1852 = vsel %vm1474, 1, 0
      %v1853 = vsel %vm1475, 1, 0
      %v1854 = vsel %vm1476, 1, 0
      %v1855 = vsel %vm1477, 1, 0
      %v1856 = vsel %vm1478, 1, 0
      %v1857 = vsel %vm1479, 1, 0
      %v1858 = vsel %vm1480, 1, 0
      %v1859 = vsel %vm1481, 1, 0
      %v1860 = vsel %vm1482, 1, 0
      %v1861 = vsel %vm1483, 1, 0
      %v1862 = vsel %vm1484, 1, 0
      %v1863 = vsel %vm1485, 1, 0
      %v1864 = vsel %vm1486, 1, 0
      %v1865 = vsel %vm1487, 1, 0
      %v1866 = vsel %vm1488, 1, 0
      %v1867 = vsel %vm1489, 1, 0
      %vm1868 = vcmp.eq.s32.totalorder %v1852, 1
      %vm1869 = vcmp.eq.s32.totalorder %v1853, 1
      %vm1870 = vcmp.eq.s32.totalorder %v1854, 1
      %vm1871 = vcmp.eq.s32.totalorder %v1855, 1
      %vm1872 = vcmp.eq.s32.totalorder %v1856, 1
      %vm1873 = vcmp.eq.s32.totalorder %v1857, 1
      %vm1874 = vcmp.eq.s32.totalorder %v1858, 1
      %vm1875 = vcmp.eq.s32.totalorder %v1859, 1
      %vm1876 = vcmp.eq.s32.totalorder %v1860, 1
      %vm1877 = vcmp.eq.s32.totalorder %v1861, 1
      %vm1878 = vcmp.eq.s32.totalorder %v1862, 1
      %vm1879 = vcmp.eq.s32.totalorder %v1863, 1
      %vm1880 = vcmp.eq.s32.totalorder %v1864, 1
      %vm1881 = vcmp.eq.s32.totalorder %v1865, 1
      %vm1882 = vcmp.eq.s32.totalorder %v1866, 1
      %vm1883 = vcmp.eq.s32.totalorder %v1867, 1
      %vm1884 = vmpackc.low %vm1868, %vm1868
      %vm1885 = vmpackc.low %vm1869, %vm1869
      %vm1886 = vmpackc.low %vm1870, %vm1870
      %vm1887 = vmpackc.low %vm1871, %vm1871
      %vm1888 = vmpackc.low %vm1872, %vm1872
      %vm1889 = vmpackc.low %vm1873, %vm1873
      %vm1890 = vmpackc.low %vm1874, %vm1874
      %vm1891 = vmpackc.low %vm1875, %vm1875
      %vm1892 = vmpackc.low %vm1876, %vm1876
      %vm1893 = vmpackc.low %vm1877, %vm1877
      %vm1894 = vmpackc.low %vm1878, %vm1878
      %vm1895 = vmpackc.low %vm1879, %vm1879
      %vm1896 = vmpackc.low %vm1880, %vm1880
      %vm1897 = vmpackc.low %vm1881, %vm1881
      %vm1898 = vmpackc.low %vm1882, %vm1882
      %vm1899 = vmpackc.low %vm1883, %vm1883
      %v1900 = vsel %vm1884, 65537, 0
      %v1901 = vsel %vm1885, 65537, 0
      %v1902 = vsel %vm1886, 65537, 0
      %v1903 = vsel %vm1887, 65537, 0
      %v1904 = vsel %vm1888, 65537, 0
      %v1905 = vsel %vm1889, 65537, 0
      %v1906 = vsel %vm1890, 65537, 0
      %v1907 = vsel %vm1891, 65537, 0
      %v1908 = vsel %vm1892, 65537, 0
      %v1909 = vsel %vm1893, 65537, 0
      %v1910 = vsel %vm1894, 65537, 0
      %v1911 = vsel %vm1895, 65537, 0
      %v1912 = vsel %vm1896, 65537, 0
      %v1913 = vsel %vm1897, 65537, 0
      %v1914 = vsel %vm1898, 65537, 0
      %v1915 = vsel %vm1899, 65537, 0
      %vm1916 = vcmask 1040384
      %vm1917 = vcmask 1044484
      %vm1918 = vmor %vm1916, %vm1917
      %v1919 = vrot.slane %v1900, 7
      %v1920 = vrot.slane %v1919, 4
      %v1921 = vrot.slane %v1901, 7
      %v1922 = vsel %vm1918, %v1920, %v1921
      %v1923 = vrot.slane %v1921, 4
      %v1924 = vrot.slane %v1902, 7
      %v1925 = vsel %vm1918, %v1923, %v1924
      %v1926 = vrot.slane %v1924, 4
      %v1927 = vrot.slane %v1903, 7
      %v1928 = vsel %vm1918, %v1926, %v1927
      %v1929 = vrot.slane %v1927, 4
      %v1930 = vrot.slane %v1904, 7
      %v1931 = vsel %vm1918, %v1929, %v1930
      %v1932 = vrot.slane %v1930, 4
      %v1933 = vrot.slane %v1905, 7
      %v1934 = vsel %vm1918, %v1932, %v1933
      %v1935 = vrot.slane %v1933, 4
      %v1936 = vrot.slane %v1906, 7
      %v1937 = vsel %vm1918, %v1935, %v1936
      %v1938 = vrot.slane %v1936, 4
      %v1939 = vrot.slane %v1907, 7
      %v1940 = vsel %vm1918, %v1938, %v1939
      %v1941 = vrot.slane %v1939, 4
      %v1942 = vrot.slane %v1908, 7
      %v1943 = vsel %vm1918, %v1941, %v1942
      %v1944 = vrot.slane %v1942, 4
      %v1945 = vrot.slane %v1909, 7
      %v1946 = vsel %vm1918, %v1944, %v1945
      %v1947 = vrot.slane %v1945, 4
      %v1948 = vrot.slane %v1910, 7
      %v1949 = vsel %vm1918, %v1947, %v1948
      %v1950 = vrot.slane %v1948, 4
      %v1951 = vrot.slane %v1911, 7
      %v1952 = vsel %vm1918, %v1950, %v1951
      %v1953 = vrot.slane %v1951, 4
      %v1954 = vrot.slane %v1912, 7
      %v1955 = vsel %vm1918, %v1953, %v1954
      %v1956 = vrot.slane %v1954, 4
      %v1957 = vrot.slane %v1913, 7
      %v1958 = vsel %vm1918, %v1956, %v1957
      %v1959 = vrot.slane %v1957, 4
      %v1960 = vrot.slane %v1914, 7
      %v1961 = vsel %vm1918, %v1959, %v1960
      %v1962 = vrot.slane %v1960, 4
      %v1963 = vrot.slane %v1915, 7
      %v1964 = vsel %vm1918, %v1962, %v1963
      %v1965 = vrot.slane %v1963, 4
      %v1966 = vunpack.c.l.b16 %v1919
      %v1967 = vunpack.c.h.b16 %v1919
      %v1968 = vunpack.c.l.b16 0
      %v1969 = vunpack.c.h.b16 0
      %vm1970 = vcmp.ne.s32.totalorder %v1966, %v1968
      %vm1971 = vcmp.ne.s32.totalorder %v1967, %v1969
      %vm1972 = vmpackc.low %vm1971, %vm1970
      %v1973 = vunpack.c.l.b16 %v1922
      %v1974 = vunpack.c.h.b16 %v1922
      %v1975 = vunpack.c.l.b16 0
      %v1976 = vunpack.c.h.b16 0
      %vm1977 = vcmp.ne.s32.totalorder %v1973, %v1975
      %vm1978 = vcmp.ne.s32.totalorder %v1974, %v1976
      %vm1979 = vmpackc.low %vm1978, %vm1977
      %v1980 = vunpack.c.l.b16 %v1925
      %v1981 = vunpack.c.h.b16 %v1925
      %v1982 = vunpack.c.l.b16 0
      %v1983 = vunpack.c.h.b16 0
      %vm1984 = vcmp.ne.s32.totalorder %v1980, %v1982
      %vm1985 = vcmp.ne.s32.totalorder %v1981, %v1983
      %vm1986 = vmpackc.low %vm1985, %vm1984
      %v1987 = vunpack.c.l.b16 %v1928
      %v1988 = vunpack.c.h.b16 %v1928
      %v1989 = vunpack.c.l.b16 0
      %v1990 = vunpack.c.h.b16 0
      %vm1991 = vcmp.ne.s32.totalorder %v1987, %v1989
      %vm1992 = vcmp.ne.s32.totalorder %v1988, %v1990
      %vm1993 = vmpackc.low %vm1992, %vm1991
      %v1994 = vunpack.c.l.b16 %v1931
      %v1995 = vunpack.c.h.b16 %v1931
      %v1996 = vunpack.c.l.b16 0
      %v1997 = vunpack.c.h.b16 0
      %vm1998 = vcmp.ne.s32.totalorder %v1994, %v1996
      %vm1999 = vcmp.ne.s32.totalorder %v1995, %v1997
      %vm2000 = vmpackc.low %vm1999, %vm1998
      %v2001 = vunpack.c.l.b16 %v1934
      %v2002 = vunpack.c.h.b16 %v1934
      %v2003 = vunpack.c.l.b16 0
      %v2004 = vunpack.c.h.b16 0
      %vm2005 = vcmp.ne.s32.totalorder %v2001, %v2003
      %vm2006 = vcmp.ne.s32.totalorder %v2002, %v2004
      %vm2007 = vmpackc.low %vm2006, %vm2005
      %v2008 = vunpack.c.l.b16 %v1937
      %v2009 = vunpack.c.h.b16 %v1937
      %v2010 = vunpack.c.l.b16 0
      %v2011 = vunpack.c.h.b16 0
      %vm2012 = vcmp.ne.s32.totalorder %v2008, %v2010
      %vm2013 = vcmp.ne.s32.totalorder %v2009, %v2011
      %vm2014 = vmpackc.low %vm2013, %vm2012
      %v2015 = vunpack.c.l.b16 %v1940
      %v2016 = vunpack.c.h.b16 %v1940
      %v2017 = vunpack.c.l.b16 0
      %v2018 = vunpack.c.h.b16 0
      %vm2019 = vcmp.ne.s32.totalorder %v2015, %v2017
      %vm2020 = vcmp.ne.s32.totalorder %v2016, %v2018
      %vm2021 = vmpackc.low %vm2020, %vm2019
      %v2022 = vunpack.c.l.b16 %v1943
      %v2023 = vunpack.c.h.b16 %v1943
      %v2024 = vunpack.c.l.b16 0
      %v2025 = vunpack.c.h.b16 0
      %vm2026 = vcmp.ne.s32.totalorder %v2022, %v2024
      %vm2027 = vcmp.ne.s32.totalorder %v2023, %v2025
      %vm2028 = vmpackc.low %vm2027, %vm2026
      %v2029 = vunpack.c.l.b16 %v1946
      %v2030 = vunpack.c.h.b16 %v1946
      %v2031 = vunpack.c.l.b16 0
      %v2032 = vunpack.c.h.b16 0
      %vm2033 = vcmp.ne.s32.totalorder %v2029, %v2031
      %vm2034 = vcmp.ne.s32.totalorder %v2030, %v2032
      %vm2035 = vmpackc.low %vm2034, %vm2033
      %v2036 = vunpack.c.l.b16 %v1949
      %v2037 = vunpack.c.h.b16 %v1949
      %v2038 = vunpack.c.l.b16 0
      %v2039 = vunpack.c.h.b16 0
      %vm2040 = vcmp.ne.s32.totalorder %v2036, %v2038
      %vm2041 = vcmp.ne.s32.totalorder %v2037, %v2039
      %vm2042 = vmpackc.low %vm2041, %vm2040
      %v2043 = vunpack.c.l.b16 %v1952
      %v2044 = vunpack.c.h.b16 %v1952
      %v2045 = vunpack.c.l.b16 0
      %v2046 = vunpack.c.h.b16 0
      %vm2047 = vcmp.ne.s32.totalorder %v2043, %v2045
      %vm2048 = vcmp.ne.s32.totalorder %v2044, %v2046
      %vm2049 = vmpackc.low %vm2048, %vm2047
      %v2050 = vunpack.c.l.b16 %v1955
      %v2051 = vunpack.c.h.b16 %v1955
      %v2052 = vunpack.c.l.b16 0
      %v2053 = vunpack.c.h.b16 0
      %vm2054 = vcmp.ne.s32.totalorder %v2050, %v2052
      %vm2055 = vcmp.ne.s32.totalorder %v2051, %v2053
      %vm2056 = vmpackc.low %vm2055, %vm2054
      %v2057 = vunpack.c.l.b16 %v1958
      %v2058 = vunpack.c.h.b16 %v1958
      %v2059 = vunpack.c.l.b16 0
      %v2060 = vunpack.c.h.b16 0
      %vm2061 = vcmp.ne.s32.totalorder %v2057, %v2059
      %vm2062 = vcmp.ne.s32.totalorder %v2058, %v2060
      %vm2063 = vmpackc.low %vm2062, %vm2061
      %v2064 = vunpack.c.l.b16 %v1961
      %v2065 = vunpack.c.h.b16 %v1961
      %v2066 = vunpack.c.l.b16 0
      %v2067 = vunpack.c.h.b16 0
      %vm2068 = vcmp.ne.s32.totalorder %v2064, %v2066
      %vm2069 = vcmp.ne.s32.totalorder %v2065, %v2067
      %vm2070 = vmpackc.low %vm2069, %vm2068
      %v2071 = vunpack.c.l.b16 %v1964
      %v2072 = vunpack.c.h.b16 %v1964
      %v2073 = vunpack.c.l.b16 0
      %v2074 = vunpack.c.h.b16 0
      %vm2075 = vcmp.ne.s32.totalorder %v2071, %v2073
      %vm2076 = vcmp.ne.s32.totalorder %v2072, %v2074
      %vm2077 = vmpackc.low %vm2076, %vm2075
      %v2078 = vunpack.c.l.b16 %v1965
      %v2079 = vunpack.c.h.b16 %v1965
      %v2080 = vunpack.c.l.b16 0
      %v2081 = vunpack.c.h.b16 0
      %vm2082 = vcmp.ne.s32.totalorder %v2078, %v2080
      %vm2083 = vcmp.ne.s32.totalorder %v2079, %v2081
      %vm2084 = vmpackc.low %vm2083, %vm2082
      %v2085 = vsel %vm1972, %v1835, 0
      %v2086 = vsel %vm1979, %v1836, 0
      %v2087 = vsel %vm1986, %v1837, 0
      %v2088 = vsel %vm1993, %v1838, 0
      %v2089 = vsel %vm2000, %v1839, 0
      %v2090 = vsel %vm2007, %v1840, 0
      %v2091 = vsel %vm2014, %v1841, 0
      %v2092 = vsel %vm2021, %v1842, 0
      %v2093 = vsel %vm2028, %v1843, 0
      %v2094 = vsel %vm2035, %v1844, 0
      %v2095 = vsel %vm2042, %v1845, 0
      %v2096 = vsel %vm2049, %v1846, 0
      %v2097 = vsel %vm2056, %v1847, 0
      %v2098 = vsel %vm2063, %v1848, 0
      %v2099 = vsel %vm2070, %v1849, 0
      %v2100 = vsel %vm2077, %v1850, 0
      %v2101 = vsel %vm2084, %v1851, 0
      %vm2119 = vcmask 1042432
      %vm2120 = vcmask 1046532
      %vm2121 = vmor %vm2119, %vm2120
      %v2122 = vrot.slane %v2085, 5
      %v2123 = vrot.slane %v2122, 4
      %v2124 = vrot.slane %v2086, 5
      %v2125 = vsel %vm2121, %v2123, %v2124
      %v2126 = vrot.slane %v2124, 4
      %v2127 = vrot.slane %v2087, 5
      %v2128 = vsel %vm2121, %v2126, %v2127
      %v2129 = vrot.slane %v2127, 4
      %v2130 = vrot.slane %v2088, 5
      %v2131 = vsel %vm2121, %v2129, %v2130
      %v2132 = vrot.slane %v2130, 4
      %v2133 = vrot.slane %v2089, 5
      %v2134 = vsel %vm2121, %v2132, %v2133
      %v2135 = vrot.slane %v2133, 4
      %v2136 = vrot.slane %v2090, 5
      %v2137 = vsel %vm2121, %v2135, %v2136
      %v2138 = vrot.slane %v2136, 4
      %v2139 = vrot.slane %v2091, 5
      %v2140 = vsel %vm2121, %v2138, %v2139
      %v2141 = vrot.slane %v2139, 4
      %v2142 = vrot.slane %v2092, 5
      %v2143 = vsel %vm2121, %v2141, %v2142
      %v2144 = vrot.slane %v2142, 4
      %v2145 = vrot.slane %v2093, 5
      %v2146 = vsel %vm2121, %v2144, %v2145
      %v2147 = vrot.slane %v2145, 4
      %v2148 = vrot.slane %v2094, 5
      %v2149 = vsel %vm2121, %v2147, %v2148
      %v2150 = vrot.slane %v2148, 4
      %v2151 = vrot.slane %v2095, 5
      %v2152 = vsel %vm2121, %v2150, %v2151
      %v2153 = vrot.slane %v2151, 4
      %v2154 = vrot.slane %v2096, 5
      %v2155 = vsel %vm2121, %v2153, %v2154
      %v2156 = vrot.slane %v2154, 4
      %v2157 = vrot.slane %v2097, 5
      %v2158 = vsel %vm2121, %v2156, %v2157
      %v2159 = vrot.slane %v2157, 4
      %v2160 = vrot.slane %v2098, 5
      %v2161 = vsel %vm2121, %v2159, %v2160
      %v2162 = vrot.slane %v2160, 4
      %v2163 = vrot.slane %v2099, 5
      %v2164 = vsel %vm2121, %v2162, %v2163
      %v2165 = vrot.slane %v2163, 4
      %v2166 = vrot.slane %v2100, 5
      %v2167 = vsel %vm2121, %v2165, %v2166
      %v2168 = vrot.slane %v2166, 4
      %v2169 = vrot.slane %v2101, 5
      %v2170 = vsel %vm2121, %v2168, %v2169
      %2171 = vrot.lane.b32.xlu0 %v2125, 8
      %v2172 = vpop.permute.xlu0 %2171
      %2173 = vrot.lane.b32.xlu0 %v2128, 8
      %v2174 = vpop.permute.xlu0 %2173
      %2175 = vrot.lane.b32.xlu0 %v2131, 8
      %v2176 = vpop.permute.xlu0 %2175
      %2177 = vrot.lane.b32.xlu0 %v2134, 8
      %v2178 = vpop.permute.xlu0 %2177
      %2179 = vrot.lane.b32.xlu0 %v2137, 8
      %v2180 = vpop.permute.xlu0 %2179
      %2181 = vrot.lane.b32.xlu0 %v2140, 8
      %v2182 = vpop.permute.xlu0 %2181
      %2183 = vrot.lane.b32.xlu0 %v2143, 8
      %v2184 = vpop.permute.xlu0 %2183
      %2185 = vrot.lane.b32.xlu0 %v2146, 8
      %v2186 = vpop.permute.xlu0 %2185
      %2187 = vrot.lane.b32.xlu0 %v2149, 8
      %v2188 = vpop.permute.xlu0 %2187
      %2189 = vrot.lane.b32.xlu0 %v2152, 8
      %v2190 = vpop.permute.xlu0 %2189
      %2191 = vrot.lane.b32.xlu0 %v2155, 8
      %v2192 = vpop.permute.xlu0 %2191
      %2193 = vrot.lane.b32.xlu0 %v2158, 8
      %v2194 = vpop.permute.xlu0 %2193
      %2195 = vrot.lane.b32.xlu0 %v2161, 8
      %v2196 = vpop.permute.xlu0 %2195
      %2197 = vrot.lane.b32.xlu0 %v2164, 8
      %v2198 = vpop.permute.xlu0 %2197
      %2199 = vrot.lane.b32.xlu0 %v2167, 8
      %v2200 = vpop.permute.xlu0 %2199
      %2201 = vrot.lane.b32.xlu0 %v2170, 8
      %v2202 = vpop.permute.xlu0 %2201
      %vm2219 = vcmask 93248
      %2220 = vst.msk [vmem:[#allocation3] sm:$0xf] %vm2219, %v2172
      %2221 = vst.msk [vmem:[#allocation3 + $0x4] sm:$0xf] %vm2219, %v2174
      %2222 = vst.msk [vmem:[#allocation3 + $0x8] sm:$0xf] %vm2219, %v2176
      %2223 = vst.msk [vmem:[#allocation3 + $0xc] sm:$0xf] %vm2219, %v2178
      %2224 = vst.msk [vmem:[#allocation3 + $0x10] sm:$0xf] %vm2219, %v2180
      %2225 = vst.msk [vmem:[#allocation3 + $0x14] sm:$0xf] %vm2219, %v2182
      %2226 = vst.msk [vmem:[#allocation3 + $0x18] sm:$0xf] %vm2219, %v2184
      %2227 = vst.msk [vmem:[#allocation3 + $0x1c] sm:$0xf] %vm2219, %v2186
      %2228 = vst.msk [vmem:[#allocation3 + $0x20] sm:$0xf] %vm2219, %v2188
      %2229 = vst.msk [vmem:[#allocation3 + $0x24] sm:$0xf] %vm2219, %v2190
      %2230 = vst.msk [vmem:[#allocation3 + $0x28] sm:$0xf] %vm2219, %v2192
      %2231 = vst.msk [vmem:[#allocation3 + $0x2c] sm:$0xf] %vm2219, %v2194
      %2232 = vst.msk [vmem:[#allocation3 + $0x30] sm:$0xf] %vm2219, %v2196
      %2233 = vst.msk [vmem:[#allocation3 + $0x34] sm:$0xf] %vm2219, %v2198
      %2234 = vst.msk [vmem:[#allocation3 + $0x38] sm:$0xf] %vm2219, %v2200
      %2235 = vst.msk [vmem:[#allocation3 + $0x3c] sm:$0xf] %vm2219, %v2202
      %v2236 = vld [vmem:[#allocation2 + $0x8] sm:$0xf]
      %v2237 = vld [vmem:[#allocation2 + $0xc] sm:$0xf]
      %v2238 = vld [vmem:[#allocation2 + $0x10] sm:$0xf]
      %v2239 = vld [vmem:[#allocation2 + $0x14] sm:$0xf]
      %v2240 = vld [vmem:[#allocation2 + $0x18] sm:$0xf]
      %v2241 = vld [vmem:[#allocation2 + $0x1c] sm:$0xf]
      %v2242 = vld [vmem:[#allocation2 + $0x20] sm:$0xf]
      %v2243 = vld [vmem:[#allocation2 + $0x24] sm:$0xf]
      %v2244 = vld [vmem:[#allocation2 + $0x28] sm:$0xf]
      %v2245 = vld [vmem:[#allocation2 + $0x2c] sm:$0xf]
      %v2246 = vld [vmem:[#allocation2 + $0x30] sm:$0xf]
      %v2247 = vld [vmem:[#allocation2 + $0x34] sm:$0xf]
      %v2248 = vld [vmem:[#allocation2 + $0x38] sm:$0xf]
      %v2249 = vld [vmem:[#allocation2 + $0x3c] sm:$0xf]
      %v2250 = vld [vmem:[#allocation2 + $0x40] sm:$0xf]
      %v2251 = vld [vmem:[#allocation2 + $0x44] sm:$0xf]
      %v2252 = vsel %vm1538, %v2236, 0
      %v2253 = vsel %vm1539, %v2237, 0
      %v2254 = vsel %vm1540, %v2238, 0
      %v2255 = vsel %vm1541, %v2239, 0
      %v2256 = vsel %vm1542, %v2240, 0
      %v2257 = vsel %vm1543, %v2241, 0
      %v2258 = vsel %vm1544, %v2242, 0
      %v2259 = vsel %vm1545, %v2243, 0
      %v2260 = vsel %vm1546, %v2244, 0
      %v2261 = vsel %vm1547, %v2245, 0
      %v2262 = vsel %vm1548, %v2246, 0
      %v2263 = vsel %vm1549, %v2247, 0
      %v2264 = vsel %vm1550, %v2248, 0
      %v2265 = vsel %vm1551, %v2249, 0
      %v2266 = vsel %vm1552, %v2250, 0
      %v2267 = vsel %vm1553, %v2251, 0
      %2284 = vrot.lane.b32.xlu0 %v2252, 12
      %v2285 = vpop.permute.xlu0 %2284
      %2286 = vrot.lane.b32.xlu0 %v2253, 12
      %v2287 = vpop.permute.xlu0 %2286
      %2288 = vrot.lane.b32.xlu0 %v2254, 12
      %v2289 = vpop.permute.xlu0 %2288
      %2290 = vrot.lane.b32.xlu0 %v2255, 12
      %v2291 = vpop.permute.xlu0 %2290
      %2292 = vrot.lane.b32.xlu0 %v2256, 12
      %v2293 = vpop.permute.xlu0 %2292
      %2294 = vrot.lane.b32.xlu0 %v2257, 12
      %v2295 = vpop.permute.xlu0 %2294
      %2296 = vrot.lane.b32.xlu0 %v2258, 12
      %v2297 = vpop.permute.xlu0 %2296
      %2298 = vrot.lane.b32.xlu0 %v2259, 12
      %v2299 = vpop.permute.xlu0 %2298
      %2300 = vrot.lane.b32.xlu0 %v2260, 12
      %v2301 = vpop.permute.xlu0 %2300
      %2302 = vrot.lane.b32.xlu0 %v2261, 12
      %v2303 = vpop.permute.xlu0 %2302
      %2304 = vrot.lane.b32.xlu0 %v2262, 12
      %v2305 = vpop.permute.xlu0 %2304
      %2306 = vrot.lane.b32.xlu0 %v2263, 12
      %v2307 = vpop.permute.xlu0 %2306
      %2308 = vrot.lane.b32.xlu0 %v2264, 12
      %v2309 = vpop.permute.xlu0 %2308
      %2310 = vrot.lane.b32.xlu0 %v2265, 12
      %v2311 = vpop.permute.xlu0 %2310
      %2312 = vrot.lane.b32.xlu0 %v2266, 12
      %v2313 = vpop.permute.xlu0 %2312
      %2314 = vrot.lane.b32.xlu0 %v2267, 12
      %v2315 = vpop.permute.xlu0 %2314
      %vm2332 = vcmask 126048
      %2333 = vst.msk [vmem:[#allocation3] sm:$0xf] %vm2332, %v2285
      %2334 = vst.msk [vmem:[#allocation3 + $0x4] sm:$0xf] %vm2332, %v2287
      %2335 = vst.msk [vmem:[#allocation3 + $0x8] sm:$0xf] %vm2332, %v2289
      %2336 = vst.msk [vmem:[#allocation3 + $0xc] sm:$0xf] %vm2332, %v2291
      %2337 = vst.msk [vmem:[#allocation3 + $0x10] sm:$0xf] %vm2332, %v2293
      %2338 = vst.msk [vmem:[#allocation3 + $0x14] sm:$0xf] %vm2332, %v2295
      %2339 = vst.msk [vmem:[#allocation3 + $0x18] sm:$0xf] %vm2332, %v2297
      %2340 = vst.msk [vmem:[#allocation3 + $0x1c] sm:$0xf] %vm2332, %v2299
      %2341 = vst.msk [vmem:[#allocation3 + $0x20] sm:$0xf] %vm2332, %v2301
      %2342 = vst.msk [vmem:[#allocation3 + $0x24] sm:$0xf] %vm2332, %v2303
      %2343 = vst.msk [vmem:[#allocation3 + $0x28] sm:$0xf] %vm2332, %v2305
      %2344 = vst.msk [vmem:[#allocation3 + $0x2c] sm:$0xf] %vm2332, %v2307
      %2345 = vst.msk [vmem:[#allocation3 + $0x30] sm:$0xf] %vm2332, %v2309
      %2346 = vst.msk [vmem:[#allocation3 + $0x34] sm:$0xf] %vm2332, %v2311
      %2347 = vst.msk [vmem:[#allocation3 + $0x38] sm:$0xf] %vm2332, %v2313
      %2348 = vst.msk [vmem:[#allocation3 + $0x3c] sm:$0xf] %vm2332, %v2315
      %v2349 = vld [vmem:[#allocation2 + $0x8] sm:$0xf]
      %v2350 = vld [vmem:[#allocation2 + $0xc] sm:$0xf]
      %v2351 = vld [vmem:[#allocation2 + $0x10] sm:$0xf]
      %v2352 = vld [vmem:[#allocation2 + $0x14] sm:$0xf]
      %v2353 = vld [vmem:[#allocation2 + $0x18] sm:$0xf]
      %v2354 = vld [vmem:[#allocation2 + $0x1c] sm:$0xf]
      %v2355 = vld [vmem:[#allocation2 + $0x20] sm:$0xf]
      %v2356 = vld [vmem:[#allocation2 + $0x24] sm:$0xf]
      %v2357 = vld [vmem:[#allocation2 + $0x28] sm:$0xf]
      %v2358 = vld [vmem:[#allocation2 + $0x2c] sm:$0xf]
      %v2359 = vld [vmem:[#allocation2 + $0x30] sm:$0xf]
      %v2360 = vld [vmem:[#allocation2 + $0x34] sm:$0xf]
      %v2361 = vld [vmem:[#allocation2 + $0x38] sm:$0xf]
      %v2362 = vld [vmem:[#allocation2 + $0x3c] sm:$0xf]
      %v2363 = vld [vmem:[#allocation2 + $0x40] sm:$0xf]
      %v2364 = vld [vmem:[#allocation2 + $0x44] sm:$0xf]
      %v2365 = vld [vmem:[#allocation2 + $0x48] sm:$0x1]
      %v2367 = vshrl.u32 %v2349, 16
      %v2369 = vrot.slane %v2367, 4
      %v2370 = vshll.u32 %v2349, 16
      %v2372 = vrot.slane %v2370, 5
      %v2373 = vor.u32 %v2369, %v2372
      %v2374 = vrot.slane %v2373, 4
      %v2376 = vshll.u32 %v2350, 16
      %v2378 = vrot.slane %v2376, 5
      %v2379 = vsel %vm1605, %v2374, %v2378
      %v2380 = vshrl.u32 %v2350, 16
      %v2382 = vrot.slane %v2380, 4
      %v2383 = vor.u32 %v2382, %v2378
      %v2384 = vrot.slane %v2383, 4
      %v2386 = vshll.u32 %v2351, 16
      %v2388 = vrot.slane %v2386, 5
      %v2389 = vsel %vm1605, %v2384, %v2388
      %v2390 = vshrl.u32 %v2351, 16
      %v2392 = vrot.slane %v2390, 4
      %v2393 = vor.u32 %v2392, %v2388
      %v2394 = vrot.slane %v2393, 4
      %v2396 = vshll.u32 %v2352, 16
      %v2398 = vrot.slane %v2396, 5
      %v2399 = vsel %vm1605, %v2394, %v2398
      %v2400 = vshrl.u32 %v2352, 16
      %v2402 = vrot.slane %v2400, 4
      %v2403 = vor.u32 %v2402, %v2398
      %v2404 = vrot.slane %v2403, 4
      %v2406 = vshll.u32 %v2353, 16
      %v2408 = vrot.slane %v2406, 5
      %v2409 = vsel %vm1605, %v2404, %v2408
      %v2410 = vshrl.u32 %v2353, 16
      %v2412 = vrot.slane %v2410, 4
      %v2413 = vor.u32 %v2412, %v2408
      %v2414 = vrot.slane %v2413, 4
      %v2416 = vshll.u32 %v2354, 16
      %v2418 = vrot.slane %v2416, 5
      %v2419 = vsel %vm1605, %v2414, %v2418
      %v2420 = vshrl.u32 %v2354, 16
      %v2422 = vrot.slane %v2420, 4
      %v2423 = vor.u32 %v2422, %v2418
      %v2424 = vrot.slane %v2423, 4
      %v2426 = vshll.u32 %v2355, 16
      %v2428 = vrot.slane %v2426, 5
      %v2429 = vsel %vm1605, %v2424, %v2428
      %v2430 = vshrl.u32 %v2355, 16
      %v2432 = vrot.slane %v2430, 4
      %v2433 = vor.u32 %v2432, %v2428
      %v2434 = vrot.slane %v2433, 4
      %v2436 = vshll.u32 %v2356, 16
      %v2438 = vrot.slane %v2436, 5
      %v2439 = vsel %vm1605, %v2434, %v2438
      %v2440 = vshrl.u32 %v2356, 16
      %v2442 = vrot.slane %v2440, 4
      %v2443 = vor.u32 %v2442, %v2438
      %v2444 = vrot.slane %v2443, 4
      %v2446 = vshll.u32 %v2357, 16
      %v2448 = vrot.slane %v2446, 5
      %v2449 = vsel %vm1605, %v2444, %v2448
      %v2450 = vshrl.u32 %v2357, 16
      %v2452 = vrot.slane %v2450, 4
      %v2453 = vor.u32 %v2452, %v2448
      %v2454 = vrot.slane %v2453, 4
      %v2456 = vshll.u32 %v2358, 16
      %v2458 = vrot.slane %v2456, 5
      %v2459 = vsel %vm1605, %v2454, %v2458
      %v2460 = vshrl.u32 %v2358, 16
      %v2462 = vrot.slane %v2460, 4
      %v2463 = vor.u32 %v2462, %v2458
      %v2464 = vrot.slane %v2463, 4
      %v2466 = vshll.u32 %v2359, 16
      %v2468 = vrot.slane %v2466, 5
      %v2469 = vsel %vm1605, %v2464, %v2468
      %v2470 = vshrl.u32 %v2359, 16
      %v2472 = vrot.slane %v2470, 4
      %v2473 = vor.u32 %v2472, %v2468
      %v2474 = vrot.slane %v2473, 4
      %v2476 = vshll.u32 %v2360, 16
      %v2478 = vrot.slane %v2476, 5
      %v2479 = vsel %vm1605, %v2474, %v2478
      %v2480 = vshrl.u32 %v2360, 16
      %v2482 = vrot.slane %v2480, 4
      %v2483 = vor.u32 %v2482, %v2478
      %v2484 = vrot.slane %v2483, 4
      %v2486 = vshll.u32 %v2361, 16
      %v2488 = vrot.slane %v2486, 5
      %v2489 = vsel %vm1605, %v2484, %v2488
      %v2490 = vshrl.u32 %v2361, 16
      %v2492 = vrot.slane %v2490, 4
      %v2493 = vor.u32 %v2492, %v2488
      %v2494 = vrot.slane %v2493, 4
      %v2496 = vshll.u32 %v2362, 16
      %v2498 = vrot.slane %v2496, 5
      %v2499 = vsel %vm1605, %v2494, %v2498
      %v2500 = vshrl.u32 %v2362, 16
      %v2502 = vrot.slane %v2500, 4
      %v2503 = vor.u32 %v2502, %v2498
      %v2504 = vrot.slane %v2503, 4
      %v2506 = vshll.u32 %v2363, 16
      %v2508 = vrot.slane %v2506, 5
      %v2509 = vsel %vm1605, %v2504, %v2508
      %v2510 = vshrl.u32 %v2363, 16
      %v2512 = vrot.slane %v2510, 4
      %v2513 = vor.u32 %v2512, %v2508
      %v2514 = vrot.slane %v2513, 4
      %v2516 = vshll.u32 %v2364, 16
      %v2518 = vrot.slane %v2516, 5
      %v2519 = vsel %vm1605, %v2514, %v2518
      %v2520 = vshrl.u32 %v2364, 16
      %v2522 = vrot.slane %v2520, 4
      %v2523 = vor.u32 %v2522, %v2518
      %v2524 = vrot.slane %v2523, 4
      %v2526 = vshll.u32 %v2365, 16
      %v2528 = vrot.slane %v2526, 5
      %v2529 = vsel %vm1605, %v2524, %v2528
      %2530 = vrot.lane.b32.xlu0 %v2379, 16
      %v2531 = vpop.permute.xlu0 %2530
      %2532 = vrot.lane.b32.xlu0 %v2389, 16
      %v2533 = vpop.permute.xlu0 %2532
      %2534 = vrot.lane.b32.xlu0 %v2399, 16
      %v2535 = vpop.permute.xlu0 %2534
      %2536 = vrot.lane.b32.xlu0 %v2409, 16
      %v2537 = vpop.permute.xlu0 %2536
      %2538 = vrot.lane.b32.xlu0 %v2419, 16
      %v2539 = vpop.permute.xlu0 %2538
      %2540 = vrot.lane.b32.xlu0 %v2429, 16
      %v2541 = vpop.permute.xlu0 %2540
      %2542 = vrot.lane.b32.xlu0 %v2439, 16
      %v2543 = vpop.permute.xlu0 %2542
      %2544 = vrot.lane.b32.xlu0 %v2449, 16
      %v2545 = vpop.permute.xlu0 %2544
      %2546 = vrot.lane.b32.xlu0 %v2459, 16
      %v2547 = vpop.permute.xlu0 %2546
      %2548 = vrot.lane.b32.xlu0 %v2469, 16
      %v2549 = vpop.permute.xlu0 %2548
      %2550 = vrot.lane.b32.xlu0 %v2479, 16
      %v2551 = vpop.permute.xlu0 %2550
      %2552 = vrot.lane.b32.xlu0 %v2489, 16
      %v2553 = vpop.permute.xlu0 %2552
      %2554 = vrot.lane.b32.xlu0 %v2499, 16
      %v2555 = vpop.permute.xlu0 %2554
      %2556 = vrot.lane.b32.xlu0 %v2509, 16
      %v2557 = vpop.permute.xlu0 %2556
      %2558 = vrot.lane.b32.xlu0 %v2519, 16
      %v2559 = vpop.permute.xlu0 %2558
      %2560 = vrot.lane.b32.xlu0 %v2529, 16
      %v2561 = vpop.permute.xlu0 %2560
      %vm2578 = vcmask 158848
      %2579 = vst.msk [vmem:[#allocation3] sm:$0xf] %vm2578, %v2531
      %2580 = vst.msk [vmem:[#allocation3 + $0x4] sm:$0xf] %vm2578, %v2533
      %2581 = vst.msk [vmem:[#allocation3 + $0x8] sm:$0xf] %vm2578, %v2535
      %2582 = vst.msk [vmem:[#allocation3 + $0xc] sm:$0xf] %vm2578, %v2537
      %2583 = vst.msk [vmem:[#allocation3 + $0x10] sm:$0xf] %vm2578, %v2539
      %2584 = vst.msk [vmem:[#allocation3 + $0x14] sm:$0xf] %vm2578, %v2541
      %2585 = vst.msk [vmem:[#allocation3 + $0x18] sm:$0xf] %vm2578, %v2543
      %2586 = vst.msk [vmem:[#allocation3 + $0x1c] sm:$0xf] %vm2578, %v2545
      %2587 = vst.msk [vmem:[#allocation3 + $0x20] sm:$0xf] %vm2578, %v2547
      %2588 = vst.msk [vmem:[#allocation3 + $0x24] sm:$0xf] %vm2578, %v2549
      %2589 = vst.msk [vmem:[#allocation3 + $0x28] sm:$0xf] %vm2578, %v2551
      %2590 = vst.msk [vmem:[#allocation3 + $0x2c] sm:$0xf] %vm2578, %v2553
      %2591 = vst.msk [vmem:[#allocation3 + $0x30] sm:$0xf] %vm2578, %v2555
      %2592 = vst.msk [vmem:[#allocation3 + $0x34] sm:$0xf] %vm2578, %v2557
      %2593 = vst.msk [vmem:[#allocation3 + $0x38] sm:$0xf] %vm2578, %v2559
      %2594 = vst.msk [vmem:[#allocation3 + $0x3c] sm:$0xf] %vm2578, %v2561
      %v2595 = vld [vmem:[#allocation2 + $0x8] sm:$0xe]
      %v2596 = vld [vmem:[#allocation2 + $0xc] sm:$0xf]
      %v2597 = vld [vmem:[#allocation2 + $0x10] sm:$0xf]
      %v2598 = vld [vmem:[#allocation2 + $0x14] sm:$0xf]
      %v2599 = vld [vmem:[#allocation2 + $0x18] sm:$0xf]
      %v2600 = vld [vmem:[#allocation2 + $0x1c] sm:$0xf]
      %v2601 = vld [vmem:[#allocation2 + $0x20] sm:$0xf]
      %v2602 = vld [vmem:[#allocation2 + $0x24] sm:$0xf]
      %v2603 = vld [vmem:[#allocation2 + $0x28] sm:$0xf]
      %v2604 = vld [vmem:[#allocation2 + $0x2c] sm:$0xf]
      %v2605 = vld [vmem:[#allocation2 + $0x30] sm:$0xf]
      %v2606 = vld [vmem:[#allocation2 + $0x34] sm:$0xf]
      %v2607 = vld [vmem:[#allocation2 + $0x38] sm:$0xf]
      %v2608 = vld [vmem:[#allocation2 + $0x3c] sm:$0xf]
      %v2609 = vld [vmem:[#allocation2 + $0x40] sm:$0xf]
      %v2610 = vld [vmem:[#allocation2 + $0x44] sm:$0xf]
      %v2611 = vld [vmem:[#allocation2 + $0x48] sm:$0x1]
      %v2612 = vsel %vm1972, %v2595, 0
      %v2613 = vsel %vm1979, %v2596, 0
      %v2614 = vsel %vm1986, %v2597, 0
      %v2615 = vsel %vm1993, %v2598, 0
      %v2616 = vsel %vm2000, %v2599, 0
      %v2617 = vsel %vm2007, %v2600, 0
      %v2618 = vsel %vm2014, %v2601, 0
      %v2619 = vsel %vm2021, %v2602, 0
      %v2620 = vsel %vm2028, %v2603, 0
      %v2621 = vsel %vm2035, %v2604, 0
      %v2622 = vsel %vm2042, %v2605, 0
      %v2623 = vsel %vm2049, %v2606, 0
      %v2624 = vsel %vm2056, %v2607, 0
      %v2625 = vsel %vm2063, %v2608, 0
      %v2626 = vsel %vm2070, %v2609, 0
      %v2627 = vsel %vm2077, %v2610, 0
      %v2628 = vsel %vm2084, %v2611, 0
      %v2646 = vrot.slane %v2612, 5
      %v2647 = vrot.slane %v2646, 4
      %v2648 = vrot.slane %v2613, 5
      %v2649 = vsel %vm2121, %v2647, %v2648
      %v2650 = vrot.slane %v2648, 4
      %v2651 = vrot.slane %v2614, 5
      %v2652 = vsel %vm2121, %v2650, %v2651
      %v2653 = vrot.slane %v2651, 4
      %v2654 = vrot.slane %v2615, 5
      %v2655 = vsel %vm2121, %v2653, %v2654
      %v2656 = vrot.slane %v2654, 4
      %v2657 = vrot.slane %v2616, 5
      %v2658 = vsel %vm2121, %v2656, %v2657
      %v2659 = vrot.slane %v2657, 4
      %v2660 = vrot.slane %v2617, 5
      %v2661 = vsel %vm2121, %v2659, %v2660
      %v2662 = vrot.slane %v2660, 4
      %v2663 = vrot.slane %v2618, 5
      %v2664 = vsel %vm2121, %v2662, %v2663
      %v2665 = vrot.slane %v2663, 4
      %v2666 = vrot.slane %v2619, 5
      %v2667 = vsel %vm2121, %v2665, %v2666
      %v2668 = vrot.slane %v2666, 4
      %v2669 = vrot.slane %v2620, 5
      %v2670 = vsel %vm2121, %v2668, %v2669
      %v2671 = vrot.slane %v2669, 4
      %v2672 = vrot.slane %v2621, 5
      %v2673 = vsel %vm2121, %v2671, %v2672
      %v2674 = vrot.slane %v2672, 4
      %v2675 = vrot.slane %v2622, 5
      %v2676 = vsel %vm2121, %v2674, %v2675
      %v2677 = vrot.slane %v2675, 4
      %v2678 = vrot.slane %v2623, 5
      %v2679 = vsel %vm2121, %v2677, %v2678
      %v2680 = vrot.slane %v2678, 4
      %v2681 = vrot.slane %v2624, 5
      %v2682 = vsel %vm2121, %v2680, %v2681
      %v2683 = vrot.slane %v2681, 4
      %v2684 = vrot.slane %v2625, 5
      %v2685 = vsel %vm2121, %v2683, %v2684
      %v2686 = vrot.slane %v2684, 4
      %v2687 = vrot.slane %v2626, 5
      %v2688 = vsel %vm2121, %v2686, %v2687
      %v2689 = vrot.slane %v2687, 4
      %v2690 = vrot.slane %v2627, 5
      %v2691 = vsel %vm2121, %v2689, %v2690
      %v2692 = vrot.slane %v2690, 4
      %v2693 = vrot.slane %v2628, 5
      %v2694 = vsel %vm2121, %v2692, %v2693
      %2695 = vrot.lane.b32.xlu0 %v2649, 20
      %v2696 = vpop.permute.xlu0 %2695
      %2697 = vrot.lane.b32.xlu0 %v2652, 20
      %v2698 = vpop.permute.xlu0 %2697
      %2699 = vrot.lane.b32.xlu0 %v2655, 20
      %v2700 = vpop.permute.xlu0 %2699
      %2701 = vrot.lane.b32.xlu0 %v2658, 20
      %v2702 = vpop.permute.xlu0 %2701
      %2703 = vrot.lane.b32.xlu0 %v2661, 20
      %v2704 = vpop.permute.xlu0 %2703
      %2705 = vrot.lane.b32.xlu0 %v2664, 20
      %v2706 = vpop.permute.xlu0 %2705
      %2707 = vrot.lane.b32.xlu0 %v2667, 20
      %v2708 = vpop.permute.xlu0 %2707
      %2709 = vrot.lane.b32.xlu0 %v2670, 20
      %v2710 = vpop.permute.xlu0 %2709
      %2711 = vrot.lane.b32.xlu0 %v2673, 20
      %v2712 = vpop.permute.xlu0 %2711
      %2713 = vrot.lane.b32.xlu0 %v2676, 20
      %v2714 = vpop.permute.xlu0 %2713
      %2715 = vrot.lane.b32.xlu0 %v2679, 20
      %v2716 = vpop.permute.xlu0 %2715
      %2717 = vrot.lane.b32.xlu0 %v2682, 20
      %v2718 = vpop.permute.xlu0 %2717
      %2719 = vrot.lane.b32.xlu0 %v2685, 20
      %v2720 = vpop.permute.xlu0 %2719
      %2721 = vrot.lane.b32.xlu0 %v2688, 20
      %v2722 = vpop.permute.xlu0 %2721
      %2723 = vrot.lane.b32.xlu0 %v2691, 20
      %v2724 = vpop.permute.xlu0 %2723
      %2725 = vrot.lane.b32.xlu0 %v2694, 20
      %v2726 = vpop.permute.xlu0 %2725
      %vm2743 = vcmask 191648
      %2744 = vst.msk [vmem:[#allocation3] sm:$0xf] %vm2743, %v2696
      %2745 = vst.msk [vmem:[#allocation3 + $0x4] sm:$0xf] %vm2743, %v2698
      %2746 = vst.msk [vmem:[#allocation3 + $0x8] sm:$0xf] %vm2743, %v2700
      %2747 = vst.msk [vmem:[#allocation3 + $0xc] sm:$0xf] %vm2743, %v2702
      %2748 = vst.msk [vmem:[#allocation3 + $0x10] sm:$0xf] %vm2743, %v2704
      %2749 = vst.msk [vmem:[#allocation3 + $0x14] sm:$0xf] %vm2743, %v2706
      %2750 = vst.msk [vmem:[#allocation3 + $0x18] sm:$0xf] %vm2743, %v2708
      %2751 = vst.msk [vmem:[#allocation3 + $0x1c] sm:$0xf] %vm2743, %v2710
      %2752 = vst.msk [vmem:[#allocation3 + $0x20] sm:$0xf] %vm2743, %v2712
      %2753 = vst.msk [vmem:[#allocation3 + $0x24] sm:$0xf] %vm2743, %v2714
      %2754 = vst.msk [vmem:[#allocation3 + $0x28] sm:$0xf] %vm2743, %v2716
      %2755 = vst.msk [vmem:[#allocation3 + $0x2c] sm:$0xf] %vm2743, %v2718
      %2756 = vst.msk [vmem:[#allocation3 + $0x30] sm:$0xf] %vm2743, %v2720
      %2757 = vst.msk [vmem:[#allocation3 + $0x34] sm:$0xf] %vm2743, %v2722
      %2758 = vst.msk [vmem:[#allocation3 + $0x38] sm:$0xf] %vm2743, %v2724
      %2759 = vst.msk [vmem:[#allocation3 + $0x3c] sm:$0xf] %vm2743, %v2726
      %v2760 = vld [vmem:[#allocation2 + $0x10] sm:$0xf]
      %v2761 = vld [vmem:[#allocation2 + $0x14] sm:$0xf]
      %v2762 = vld [vmem:[#allocation2 + $0x18] sm:$0xf]
      %v2763 = vld [vmem:[#allocation2 + $0x1c] sm:$0xf]
      %v2764 = vld [vmem:[#allocation2 + $0x20] sm:$0xf]
      %v2765 = vld [vmem:[#allocation2 + $0x24] sm:$0xf]
      %v2766 = vld [vmem:[#allocation2 + $0x28] sm:$0xf]
      %v2767 = vld [vmem:[#allocation2 + $0x2c] sm:$0xf]
      %v2768 = vld [vmem:[#allocation2 + $0x30] sm:$0xf]
      %v2769 = vld [vmem:[#allocation2 + $0x34] sm:$0xf]
      %v2770 = vld [vmem:[#allocation2 + $0x38] sm:$0xf]
      %v2771 = vld [vmem:[#allocation2 + $0x3c] sm:$0xf]
      %v2772 = vld [vmem:[#allocation2 + $0x40] sm:$0xf]
      %v2773 = vld [vmem:[#allocation2 + $0x44] sm:$0xf]
      %v2774 = vld [vmem:[#allocation2 + $0x48] sm:$0xf]
      %v2775 = vld [vmem:[#allocation2 + $0x4c] sm:$0xf]
      %v2776 = vsel %vm1538, %v2760, 0
      %v2777 = vsel %vm1539, %v2761, 0
      %v2778 = vsel %vm1540, %v2762, 0
      %v2779 = vsel %vm1541, %v2763, 0
      %v2780 = vsel %vm1542, %v2764, 0
      %v2781 = vsel %vm1543, %v2765, 0
      %v2782 = vsel %vm1544, %v2766, 0
      %v2783 = vsel %vm1545, %v2767, 0
      %v2784 = vsel %vm1546, %v2768, 0
      %v2785 = vsel %vm1547, %v2769, 0
      %v2786 = vsel %vm1548, %v2770, 0
      %v2787 = vsel %vm1549, %v2771, 0
      %v2788 = vsel %vm1550, %v2772, 0
      %v2789 = vsel %vm1551, %v2773, 0
      %v2790 = vsel %vm1552, %v2774, 0
      %v2791 = vsel %vm1553, %v2775, 0
      %2808 = vrot.lane.b32.xlu0 %v2776, 24
      %v2809 = vpop.permute.xlu0 %2808
      %2810 = vrot.lane.b32.xlu0 %v2777, 24
      %v2811 = vpop.permute.xlu0 %2810
      %2812 = vrot.lane.b32.xlu0 %v2778, 24
      %v2813 = vpop.permute.xlu0 %2812
      %2814 = vrot.lane.b32.xlu0 %v2779, 24
      %v2815 = vpop.permute.xlu0 %2814
      %2816 = vrot.lane.b32.xlu0 %v2780, 24
      %v2817 = vpop.permute.xlu0 %2816
      %2818 = vrot.lane.b32.xlu0 %v2781, 24
      %v2819 = vpop.permute.xlu0 %2818
      %2820 = vrot.lane.b32.xlu0 %v2782, 24
      %v2821 = vpop.permute.xlu0 %2820
      %2822 = vrot.lane.b32.xlu0 %v2783, 24
      %v2823 = vpop.permute.xlu0 %2822
      %2824 = vrot.lane.b32.xlu0 %v2784, 24
      %v2825 = vpop.permute.xlu0 %2824
      %2826 = vrot.lane.b32.xlu0 %v2785, 24
      %v2827 = vpop.permute.xlu0 %2826
      %2828 = vrot.lane.b32.xlu0 %v2786, 24
      %v2829 = vpop.permute.xlu0 %2828
      %2830 = vrot.lane.b32.xlu0 %v2787, 24
      %v2831 = vpop.permute.xlu0 %2830
      %2832 = vrot.lane.b32.xlu0 %v2788, 24
      %v2833 = vpop.permute.xlu0 %2832
      %2834 = vrot.lane.b32.xlu0 %v2789, 24
      %v2835 = vpop.permute.xlu0 %2834
      %2836 = vrot.lane.b32.xlu0 %v2790, 24
      %v2837 = vpop.permute.xlu0 %2836
      %2838 = vrot.lane.b32.xlu0 %v2791, 24
      %v2839 = vpop.permute.xlu0 %2838
      %vm2856 = vcmask 224448
      %2857 = vst.msk [vmem:[#allocation3] sm:$0xf] %vm2856, %v2809
      %2858 = vst.msk [vmem:[#allocation3 + $0x4] sm:$0xf] %vm2856, %v2811
      %2859 = vst.msk [vmem:[#allocation3 + $0x8] sm:$0xf] %vm2856, %v2813
      %2860 = vst.msk [vmem:[#allocation3 + $0xc] sm:$0xf] %vm2856, %v2815
      %2861 = vst.msk [vmem:[#allocation3 + $0x10] sm:$0xf] %vm2856, %v2817
      %2862 = vst.msk [vmem:[#allocation3 + $0x14] sm:$0xf] %vm2856, %v2819
      %2863 = vst.msk [vmem:[#allocation3 + $0x18] sm:$0xf] %vm2856, %v2821
      %2864 = vst.msk [vmem:[#allocation3 + $0x1c] sm:$0xf] %vm2856, %v2823
      %2865 = vst.msk [vmem:[#allocation3 + $0x20] sm:$0xf] %vm2856, %v2825
      %2866 = vst.msk [vmem:[#allocation3 + $0x24] sm:$0xf] %vm2856, %v2827
      %2867 = vst.msk [vmem:[#allocation3 + $0x28] sm:$0xf] %vm2856, %v2829
      %2868 = vst.msk [vmem:[#allocation3 + $0x2c] sm:$0xf] %vm2856, %v2831
      %2869 = vst.msk [vmem:[#allocation3 + $0x30] sm:$0xf] %vm2856, %v2833
      %2870 = vst.msk [vmem:[#allocation3 + $0x34] sm:$0xf] %vm2856, %v2835
      %2871 = vst.msk [vmem:[#allocation3 + $0x38] sm:$0xf] %vm2856, %v2837
      %2872 = vst.msk [vmem:[#allocation3 + $0x3c] sm:$0xf] %vm2856, %v2839
      %v2873 = vld [vmem:[#allocation2 + $0x10] sm:$0xf]
      %v2874 = vld [vmem:[#allocation2 + $0x14] sm:$0xf]
      %v2875 = vld [vmem:[#allocation2 + $0x18] sm:$0xf]
      %v2876 = vld [vmem:[#allocation2 + $0x1c] sm:$0xf]
      %v2877 = vld [vmem:[#allocation2 + $0x20] sm:$0xf]
      %v2878 = vld [vmem:[#allocation2 + $0x24] sm:$0xf]
      %v2879 = vld [vmem:[#allocation2 + $0x28] sm:$0xf]
      %v2880 = vld [vmem:[#allocation2 + $0x2c] sm:$0xf]
      %v2881 = vld [vmem:[#allocation2 + $0x30] sm:$0xf]
      %v2882 = vld [vmem:[#allocation2 + $0x34] sm:$0xf]
      %v2883 = vld [vmem:[#allocation2 + $0x38] sm:$0xf]
      %v2884 = vld [vmem:[#allocation2 + $0x3c] sm:$0xf]
      %v2885 = vld [vmem:[#allocation2 + $0x40] sm:$0xf]
      %v2886 = vld [vmem:[#allocation2 + $0x44] sm:$0xf]
      %v2887 = vld [vmem:[#allocation2 + $0x48] sm:$0xf]
      %v2888 = vld [vmem:[#allocation2 + $0x4c] sm:$0xf]
      %v2889 = vld [vmem:[#allocation2 + $0x50] sm:$0x1]
      %v2891 = vshrl.u32 %v2873, 16
      %v2893 = vrot.slane %v2891, 4
      %v2894 = vshll.u32 %v2873, 16
      %v2896 = vrot.slane %v2894, 5
      %v2897 = vor.u32 %v2893, %v2896
      %v2898 = vrot.slane %v2897, 4
      %v2900 = vshll.u32 %v2874, 16
      %v2902 = vrot.slane %v2900, 5
      %v2903 = vsel %vm1605, %v2898, %v2902
      %v2904 = vshrl.u32 %v2874, 16
      %v2906 = vrot.slane %v2904, 4
      %v2907 = vor.u32 %v2906, %v2902
      %v2908 = vrot.slane %v2907, 4
      %v2910 = vshll.u32 %v2875, 16
      %v2912 = vrot.slane %v2910, 5
      %v2913 = vsel %vm1605, %v2908, %v2912
      %v2914 = vshrl.u32 %v2875, 16
      %v2916 = vrot.slane %v2914, 4
      %v2917 = vor.u32 %v2916, %v2912
      %v2918 = vrot.slane %v2917, 4
      %v2920 = vshll.u32 %v2876, 16
      %v2922 = vrot.slane %v2920, 5
      %v2923 = vsel %vm1605, %v2918, %v2922
      %v2924 = vshrl.u32 %v2876, 16
      %v2926 = vrot.slane %v2924, 4
      %v2927 = vor.u32 %v2926, %v2922
      %v2928 = vrot.slane %v2927, 4
      %v2930 = vshll.u32 %v2877, 16
      %v2932 = vrot.slane %v2930, 5
      %v2933 = vsel %vm1605, %v2928, %v2932
      %v2934 = vshrl.u32 %v2877, 16
      %v2936 = vrot.slane %v2934, 4
      %v2937 = vor.u32 %v2936, %v2932
      %v2938 = vrot.slane %v2937, 4
      %v2940 = vshll.u32 %v2878, 16
      %v2942 = vrot.slane %v2940, 5
      %v2943 = vsel %vm1605, %v2938, %v2942
      %v2944 = vshrl.u32 %v2878, 16
      %v2946 = vrot.slane %v2944, 4
      %v2947 = vor.u32 %v2946, %v2942
      %v2948 = vrot.slane %v2947, 4
      %v2950 = vshll.u32 %v2879, 16
      %v2952 = vrot.slane %v2950, 5
      %v2953 = vsel %vm1605, %v2948, %v2952
      %v2954 = vshrl.u32 %v2879, 16
      %v2956 = vrot.slane %v2954, 4
      %v2957 = vor.u32 %v2956, %v2952
      %v2958 = vrot.slane %v2957, 4
      %v2960 = vshll.u32 %v2880, 16
      %v2962 = vrot.slane %v2960, 5
      %v2963 = vsel %vm1605, %v2958, %v2962
      %v2964 = vshrl.u32 %v2880, 16
      %v2966 = vrot.slane %v2964, 4
      %v2967 = vor.u32 %v2966, %v2962
      %v2968 = vrot.slane %v2967, 4
      %v2970 = vshll.u32 %v2881, 16
      %v2972 = vrot.slane %v2970, 5
      %v2973 = vsel %vm1605, %v2968, %v2972
      %v2974 = vshrl.u32 %v2881, 16
      %v2976 = vrot.slane %v2974, 4
      %v2977 = vor.u32 %v2976, %v2972
      %v2978 = vrot.slane %v2977, 4
      %v2980 = vshll.u32 %v2882, 16
      %v2982 = vrot.slane %v2980, 5
      %v2983 = vsel %vm1605, %v2978, %v2982
      %v2984 = vshrl.u32 %v2882, 16
      %v2986 = vrot.slane %v2984, 4
      %v2987 = vor.u32 %v2986, %v2982
      %v2988 = vrot.slane %v2987, 4
      %v2990 = vshll.u32 %v2883, 16
      %v2992 = vrot.slane %v2990, 5
      %v2993 = vsel %vm1605, %v2988, %v2992
      %v2994 = vshrl.u32 %v2883, 16
      %v2996 = vrot.slane %v2994, 4
      %v2997 = vor.u32 %v2996, %v2992
      %v2998 = vrot.slane %v2997, 4
      %v3000 = vshll.u32 %v2884, 16
      %v3002 = vrot.slane %v3000, 5
      %v3003 = vsel %vm1605, %v2998, %v3002
      %v3004 = vshrl.u32 %v2884, 16
      %v3006 = vrot.slane %v3004, 4
      %v3007 = vor.u32 %v3006, %v3002
      %v3008 = vrot.slane %v3007, 4
      %v3010 = vshll.u32 %v2885, 16
      %v3012 = vrot.slane %v3010, 5
      %v3013 = vsel %vm1605, %v3008, %v3012
      %v3014 = vshrl.u32 %v2885, 16
      %v3016 = vrot.slane %v3014, 4
      %v3017 = vor.u32 %v3016, %v3012
      %v3018 = vrot.slane %v3017, 4
      %v3020 = vshll.u32 %v2886, 16
      %v3022 = vrot.slane %v3020, 5
      %v3023 = vsel %vm1605, %v3018, %v3022
      %v3024 = vshrl.u32 %v2886, 16
      %v3026 = vrot.slane %v3024, 4
      %v3027 = vor.u32 %v3026, %v3022
      %v3028 = vrot.slane %v3027, 4
      %v3030 = vshll.u32 %v2887, 16
      %v3032 = vrot.slane %v3030, 5
      %v3033 = vsel %vm1605, %v3028, %v3032
      %v3034 = vshrl.u32 %v2887, 16
      %v3036 = vrot.slane %v3034, 4
      %v3037 = vor.u32 %v3036, %v3032
      %v3038 = vrot.slane %v3037, 4
      %v3040 = vshll.u32 %v2888, 16
      %v3042 = vrot.slane %v3040, 5
      %v3043 = vsel %vm1605, %v3038, %v3042
      %v3044 = vshrl.u32 %v2888, 16
      %v3046 = vrot.slane %v3044, 4
      %v3047 = vor.u32 %v3046, %v3042
      %v3048 = vrot.slane %v3047, 4
      %v3050 = vshll.u32 %v2889, 16
      %v3052 = vrot.slane %v3050, 5
      %v3053 = vsel %vm1605, %v3048, %v3052
      %3054 = vrot.lane.b32.xlu0 %v2903, 28
      %v3055 = vpop.permute.xlu0 %3054
      %3056 = vrot.lane.b32.xlu0 %v2913, 28
      %v3057 = vpop.permute.xlu0 %3056
      %3058 = vrot.lane.b32.xlu0 %v2923, 28
      %v3059 = vpop.permute.xlu0 %3058
      %3060 = vrot.lane.b32.xlu0 %v2933, 28
      %v3061 = vpop.permute.xlu0 %3060
      %3062 = vrot.lane.b32.xlu0 %v2943, 28
      %v3063 = vpop.permute.xlu0 %3062
      %3064 = vrot.lane.b32.xlu0 %v2953, 28
      %v3065 = vpop.permute.xlu0 %3064
      %3066 = vrot.lane.b32.xlu0 %v2963, 28
      %v3067 = vpop.permute.xlu0 %3066
      %3068 = vrot.lane.b32.xlu0 %v2973, 28
      %v3069 = vpop.permute.xlu0 %3068
      %3070 = vrot.lane.b32.xlu0 %v2983, 28
      %v3071 = vpop.permute.xlu0 %3070
      %3072 = vrot.lane.b32.xlu0 %v2993, 28
      %v3073 = vpop.permute.xlu0 %3072
      %3074 = vrot.lane.b32.xlu0 %v3003, 28
      %v3075 = vpop.permute.xlu0 %3074
      %3076 = vrot.lane.b32.xlu0 %v3013, 28
      %v3077 = vpop.permute.xlu0 %3076
      %3078 = vrot.lane.b32.xlu0 %v3023, 28
      %v3079 = vpop.permute.xlu0 %3078
      %3080 = vrot.lane.b32.xlu0 %v3033, 28
      %v3081 = vpop.permute.xlu0 %3080
      %3082 = vrot.lane.b32.xlu0 %v3043, 28
      %v3083 = vpop.permute.xlu0 %3082
      %3084 = vrot.lane.b32.xlu0 %v3053, 28
      %v3085 = vpop.permute.xlu0 %3084
      %vm3102 = vcmask 257248
      %3103 = vst.msk [vmem:[#allocation3] sm:$0xf] %vm3102, %v3055
      %3104 = vst.msk [vmem:[#allocation3 + $0x4] sm:$0xf] %vm3102, %v3057
      %3105 = vst.msk [vmem:[#allocation3 + $0x8] sm:$0xf] %vm3102, %v3059
      %3106 = vst.msk [vmem:[#allocation3 + $0xc] sm:$0xf] %vm3102, %v3061
      %3107 = vst.msk [vmem:[#allocation3 + $0x10] sm:$0xf] %vm3102, %v3063
      %3108 = vst.msk [vmem:[#allocation3 + $0x14] sm:$0xf] %vm3102, %v3065
      %3109 = vst.msk [vmem:[#allocation3 + $0x18] sm:$0xf] %vm3102, %v3067
      %3110 = vst.msk [vmem:[#allocation3 + $0x1c] sm:$0xf] %vm3102, %v3069
      %3111 = vst.msk [vmem:[#allocation3 + $0x20] sm:$0xf] %vm3102, %v3071
      %3112 = vst.msk [vmem:[#allocation3 + $0x24] sm:$0xf] %vm3102, %v3073
      %3113 = vst.msk [vmem:[#allocation3 + $0x28] sm:$0xf] %vm3102, %v3075
      %3114 = vst.msk [vmem:[#allocation3 + $0x2c] sm:$0xf] %vm3102, %v3077
      %3115 = vst.msk [vmem:[#allocation3 + $0x30] sm:$0xf] %vm3102, %v3079
      %3116 = vst.msk [vmem:[#allocation3 + $0x34] sm:$0xf] %vm3102, %v3081
      %3117 = vst.msk [vmem:[#allocation3 + $0x38] sm:$0xf] %vm3102, %v3083
      %3118 = vst.msk [vmem:[#allocation3 + $0x3c] sm:$0xf] %vm3102, %v3085
      %v3119 = vld [vmem:[#allocation2 + $0x10] sm:$0xe]
      %v3120 = vld [vmem:[#allocation2 + $0x14] sm:$0xf]
      %v3121 = vld [vmem:[#allocation2 + $0x18] sm:$0xf]
      %v3122 = vld [vmem:[#allocation2 + $0x1c] sm:$0xf]
      %v3123 = vld [vmem:[#allocation2 + $0x20] sm:$0xf]
      %v3124 = vld [vmem:[#allocation2 + $0x24] sm:$0xf]
      %v3125 = vld [vmem:[#allocation2 + $0x28] sm:$0xf]
      %v3126 = vld [vmem:[#allocation2 + $0x2c] sm:$0xf]
      %v3127 = vld [vmem:[#allocation2 + $0x30] sm:$0xf]
      %v3128 = vld [vmem:[#allocation2 + $0x34] sm:$0xf]
      %v3129 = vld [vmem:[#allocation2 + $0x38] sm:$0xf]
      %v3130 = vld [vmem:[#allocation2 + $0x3c] sm:$0xf]
      %v3131 = vld [vmem:[#allocation2 + $0x40] sm:$0xf]
      %v3132 = vld [vmem:[#allocation2 + $0x44] sm:$0xf]
      %v3133 = vld [vmem:[#allocation2 + $0x48] sm:$0xf]
      %v3134 = vld [vmem:[#allocation2 + $0x4c] sm:$0xf]
      %v3135 = vld [vmem:[#allocation2 + $0x50] sm:$0x1]
      %v3136 = vsel %vm1972, %v3119, 0
      %v3137 = vsel %vm1979, %v3120, 0
      %v3138 = vsel %vm1986, %v3121, 0
      %v3139 = vsel %vm1993, %v3122, 0
      %v3140 = vsel %vm2000, %v3123, 0
      %v3141 = vsel %vm2007, %v3124, 0
      %v3142 = vsel %vm2014, %v3125, 0
      %v3143 = vsel %vm2021, %v3126, 0
      %v3144 = vsel %vm2028, %v3127, 0
      %v3145 = vsel %vm2035, %v3128, 0
      %v3146 = vsel %vm2042, %v3129, 0
      %v3147 = vsel %vm2049, %v3130, 0
      %v3148 = vsel %vm2056, %v3131, 0
      %v3149 = vsel %vm2063, %v3132, 0
      %v3150 = vsel %vm2070, %v3133, 0
      %v3151 = vsel %vm2077, %v3134, 0
      %v3152 = vsel %vm2084, %v3135, 0
      %v3170 = vrot.slane %v3136, 5
      %v3171 = vrot.slane %v3170, 4
      %v3172 = vrot.slane %v3137, 5
      %v3173 = vsel %vm2121, %v3171, %v3172
      %v3174 = vrot.slane %v3172, 4
      %v3175 = vrot.slane %v3138, 5
      %v3176 = vsel %vm2121, %v3174, %v3175
      %v3177 = vrot.slane %v3175, 4
      %v3178 = vrot.slane %v3139, 5
      %v3179 = vsel %vm2121, %v3177, %v3178
      %v3180 = vrot.slane %v3178, 4
      %v3181 = vrot.slane %v3140, 5
      %v3182 = vsel %vm2121, %v3180, %v3181
      %v3183 = vrot.slane %v3181, 4
      %v3184 = vrot.slane %v3141, 5
      %v3185 = vsel %vm2121, %v3183, %v3184
      %v3186 = vrot.slane %v3184, 4
      %v3187 = vrot.slane %v3142, 5
      %v3188 = vsel %vm2121, %v3186, %v3187
      %v3189 = vrot.slane %v3187, 4
      %v3190 = vrot.slane %v3143, 5
      %v3191 = vsel %vm2121, %v3189, %v3190
      %v3192 = vrot.slane %v3190, 4
      %v3193 = vrot.slane %v3144, 5
      %v3194 = vsel %vm2121, %v3192, %v3193
      %v3195 = vrot.slane %v3193, 4
      %v3196 = vrot.slane %v3145, 5
      %v3197 = vsel %vm2121, %v3195, %v3196
      %v3198 = vrot.slane %v3196, 4
      %v3199 = vrot.slane %v3146, 5
      %v3200 = vsel %vm2121, %v3198, %v3199
      %v3201 = vrot.slane %v3199, 4
      %v3202 = vrot.slane %v3147, 5
      %v3203 = vsel %vm2121, %v3201, %v3202
      %v3204 = vrot.slane %v3202, 4
      %v3205 = vrot.slane %v3148, 5
      %v3206 = vsel %vm2121, %v3204, %v3205
      %v3207 = vrot.slane %v3205, 4
      %v3208 = vrot.slane %v3149, 5
      %v3209 = vsel %vm2121, %v3207, %v3208
      %v3210 = vrot.slane %v3208, 4
      %v3211 = vrot.slane %v3150, 5
      %v3212 = vsel %vm2121, %v3210, %v3211
      %v3213 = vrot.slane %v3211, 4
      %v3214 = vrot.slane %v3151, 5
      %v3215 = vsel %vm2121, %v3213, %v3214
      %v3216 = vrot.slane %v3214, 4
      %v3217 = vrot.slane %v3152, 5
      %v3218 = vsel %vm2121, %v3216, %v3217
      %3219 = vrot.lane.b32.xlu0 %v3173, 32
      %v3220 = vpop.permute.xlu0 %3219
      %3221 = vrot.lane.b32.xlu0 %v3176, 32
      %v3222 = vpop.permute.xlu0 %3221
      %3223 = vrot.lane.b32.xlu0 %v3179, 32
      %v3224 = vpop.permute.xlu0 %3223
      %3225 = vrot.lane.b32.xlu0 %v3182, 32
      %v3226 = vpop.permute.xlu0 %3225
      %3227 = vrot.lane.b32.xlu0 %v3185, 32
      %v3228 = vpop.permute.xlu0 %3227
      %3229 = vrot.lane.b32.xlu0 %v3188, 32
      %v3230 = vpop.permute.xlu0 %3229
      %3231 = vrot.lane.b32.xlu0 %v3191, 32
      %v3232 = vpop.permute.xlu0 %3231
      %3233 = vrot.lane.b32.xlu0 %v3194, 32
      %v3234 = vpop.permute.xlu0 %3233
      %3235 = vrot.lane.b32.xlu0 %v3197, 32
      %v3236 = vpop.permute.xlu0 %3235
      %3237 = vrot.lane.b32.xlu0 %v3200, 32
      %v3238 = vpop.permute.xlu0 %3237
      %3239 = vrot.lane.b32.xlu0 %v3203, 32
      %v3240 = vpop.permute.xlu0 %3239
      %3241 = vrot.lane.b32.xlu0 %v3206, 32
      %v3242 = vpop.permute.xlu0 %3241
      %3243 = vrot.lane.b32.xlu0 %v3209, 32
      %v3244 = vpop.permute.xlu0 %3243
      %3245 = vrot.lane.b32.xlu0 %v3212, 32
      %v3246 = vpop.permute.xlu0 %3245
      %3247 = vrot.lane.b32.xlu0 %v3215, 32
      %v3248 = vpop.permute.xlu0 %3247
      %3249 = vrot.lane.b32.xlu0 %v3218, 32
      %v3250 = vpop.permute.xlu0 %3249
      %vm3267 = vcmask 290048
      %3268 = vst.msk [vmem:[#allocation3] sm:$0xf] %vm3267, %v3220
      %3269 = vst.msk [vmem:[#allocation3 + $0x4] sm:$0xf] %vm3267, %v3222
      %3270 = vst.msk [vmem:[#allocation3 + $0x8] sm:$0xf] %vm3267, %v3224
      %3271 = vst.msk [vmem:[#allocation3 + $0xc] sm:$0xf] %vm3267, %v3226
      %3272 = vst.msk [vmem:[#allocation3 + $0x10] sm:$0xf] %vm3267, %v3228
      %3273 = vst.msk [vmem:[#allocation3 + $0x14] sm:$0xf] %vm3267, %v3230
      %3274 = vst.msk [vmem:[#allocation3 + $0x18] sm:$0xf] %vm3267, %v3232
      %3275 = vst.msk [vmem:[#allocation3 + $0x1c] sm:$0xf] %vm3267, %v3234
      %3276 = vst.msk [vmem:[#allocation3 + $0x20] sm:$0xf] %vm3267, %v3236
      %3277 = vst.msk [vmem:[#allocation3 + $0x24] sm:$0xf] %vm3267, %v3238
      %3278 = vst.msk [vmem:[#allocation3 + $0x28] sm:$0xf] %vm3267, %v3240
      %3279 = vst.msk [vmem:[#allocation3 + $0x2c] sm:$0xf] %vm3267, %v3242
      %3280 = vst.msk [vmem:[#allocation3 + $0x30] sm:$0xf] %vm3267, %v3244
      %3281 = vst.msk [vmem:[#allocation3 + $0x34] sm:$0xf] %vm3267, %v3246
      %3282 = vst.msk [vmem:[#allocation3 + $0x38] sm:$0xf] %vm3267, %v3248
      %3283 = vst.msk [vmem:[#allocation3 + $0x3c] sm:$0xf] %vm3267, %v3250
      %v3284 = vld [vmem:[#allocation3] sm:$0xf]
      %v3285 = vld [vmem:[#allocation3 + $0x4] sm:$0xf]
      %v3286 = vld [vmem:[#allocation3 + $0x8] sm:$0xf]
      %v3287 = vld [vmem:[#allocation3 + $0xc] sm:$0xf]
      %v3288 = vld [vmem:[#allocation3 + $0x10] sm:$0xf]
      %v3289 = vld [vmem:[#allocation3 + $0x14] sm:$0xf]
      %v3290 = vld [vmem:[#allocation3 + $0x18] sm:$0xf]
      %v3291 = vld [vmem:[#allocation3 + $0x1c] sm:$0xf]
      %v3292 = vld [vmem:[#allocation3 + $0x20] sm:$0xf]
      %v3293 = vld [vmem:[#allocation3 + $0x24] sm:$0xf]
      %v3294 = vld [vmem:[#allocation3 + $0x28] sm:$0xf]
      %v3295 = vld [vmem:[#allocation3 + $0x2c] sm:$0xf]
      %v3296 = vld [vmem:[#allocation3 + $0x30] sm:$0xf]
      %v3297 = vld [vmem:[#allocation3 + $0x34] sm:$0xf]
      %v3298 = vld [vmem:[#allocation3 + $0x38] sm:$0xf]
      %v3299 = vld [vmem:[#allocation3 + $0x3c] sm:$0xf]
      %v3300 = vld [vmem:[%s6] sm:$0xf]
      %v3301 = vld [vmem:[%s6 + $0x4] sm:$0xf]
      %v3302 = vld [vmem:[%s6 + $0x8] sm:$0xf]
      %v3303 = vld [vmem:[%s6 + $0xc] sm:$0xf]
      %v3304 = vld [vmem:[%s6 + $0x10] sm:$0x3]
      %v3321 = vunpack.c.l.b16 %v3284
      %v3322 = vunpack.c.l.b16 %v3285
      %v3323 = vunpack.c.l.b16 %v3286
      %v3324 = vunpack.c.l.b16 %v3287
      %v3325 = vunpack.c.l.b16 %v3288
      %v3326 = vunpack.c.l.b16 %v3289
      %v3327 = vunpack.c.l.b16 %v3290
      %v3328 = vunpack.c.l.b16 %v3291
      %v3329 = vunpack.c.l.b16 %v3292
      %v3330 = vunpack.c.l.b16 %v3293
      %v3331 = vunpack.c.l.b16 %v3294
      %v3332 = vunpack.c.l.b16 %v3295
      %v3333 = vunpack.c.l.b16 %v3296
      %v3334 = vunpack.c.l.b16 %v3297
      %v3335 = vunpack.c.l.b16 %v3298
      %v3336 = vunpack.c.l.b16 %v3299
      %v3337 = vpack.c.b16 %v3322, %v3321
      %v3338 = vpack.c.b16 %v3324, %v3323
      %v3339 = vpack.c.b16 %v3326, %v3325
      %v3340 = vpack.c.b16 %v3328, %v3327
      %v3341 = vpack.c.b16 %v3330, %v3329
      %v3342 = vpack.c.b16 %v3332, %v3331
      %v3343 = vpack.c.b16 %v3334, %v3333
      %v3344 = vpack.c.b16 %v3336, %v3335
      %v3350 = vunpack.c.l.b16 %v3300
      %v3351 = vunpack.c.l.b16 %v3301
      %v3352 = vunpack.c.l.b16 %v3302
      %v3353 = vunpack.c.l.b16 %v3303
      %v3354 = vunpack.c.l.b16 %v3304
      %v3355 = vpack.c.b16 %v3351, %v3350
      %v3356 = vpack.c.b16 %v3353, %v3352
      %v3357 = vpack.c.b16 %v3354, %v3354
      %vm3360 = vcmask 293888
      %v3362 = vsel %vm3360, %v3337, 0
      %v3365 = vsel %vm3360, %v3338, 0
      %v3368 = vsel %vm3360, %v3339, 0
      %v3371 = vsel %vm3360, %v3340, 0
      %v3374 = vsel %vm3360, %v3341, 0
      %v3377 = vsel %vm3360, %v3342, 0
      %v3380 = vsel %vm3360, %v3343, 0
      %v3383 = vsel %vm3360, %v3344, 0
      %v3386 = vsel %vm605, %v3357, 0
      %3388 = vmatpush.bf16.msra.mxu0 0
      %3389 = vmatpush.bf16.msra.mxu0 0
      %3390 = vmatpush.bf16.msra.mxu0 0
      %3391 = vmatpush.bf16.msra.mxu0 0
      %3392 = vmatpush.bf16.msra.mxu0 0
      %3393 = vmatpush.bf16.msra.mxu0 %v3386
      %3394 = vmatpush.bf16.msra.mxu0 %v3356
      %3395 = vmatpush.bf16.msra.mxu0 %v3355
      %3396 = vmatmul.bf16.gmra.mxu0 %v3362
      %v3397 = vpop.f32.mrf.mxu0
      %v3398 = vadd.f32 0.0, %v3397
      %v3399 = vpop.f32.mrf.mxu0
      %v3400 = vadd.f32 0.0, %v3399
      %3401 = vmatmul.bf16.gmra.mxu0 %v3365
      %v3402 = vpop.f32.mrf.mxu0
      %v3403 = vadd.f32 0.0, %v3402
      %v3404 = vpop.f32.mrf.mxu0
      %v3405 = vadd.f32 0.0, %v3404
      %3406 = vmatmul.bf16.gmra.mxu0 %v3368
      %v3407 = vpop.f32.mrf.mxu0
      %v3408 = vadd.f32 0.0, %v3407
      %v3409 = vpop.f32.mrf.mxu0
      %v3410 = vadd.f32 0.0, %v3409
      %3411 = vmatmul.bf16.gmra.mxu0 %v3371
      %v3412 = vpop.f32.mrf.mxu0
      %v3413 = vadd.f32 0.0, %v3412
      %v3414 = vpop.f32.mrf.mxu0
      %v3415 = vadd.f32 0.0, %v3414
      %3416 = vmatmul.bf16.gmra.mxu0 %v3374
      %v3417 = vpop.f32.mrf.mxu0
      %v3418 = vadd.f32 0.0, %v3417
      %v3419 = vpop.f32.mrf.mxu0
      %v3420 = vadd.f32 0.0, %v3419
      %3421 = vmatmul.bf16.gmra.mxu0 %v3377
      %v3422 = vpop.f32.mrf.mxu0
      %v3423 = vadd.f32 0.0, %v3422
      %v3424 = vpop.f32.mrf.mxu0
      %v3425 = vadd.f32 0.0, %v3424
      %3426 = vmatmul.bf16.gmra.mxu0 %v3380
      %v3427 = vpop.f32.mrf.mxu0
      %v3428 = vadd.f32 0.0, %v3427
      %v3429 = vpop.f32.mrf.mxu0
      %v3430 = vadd.f32 0.0, %v3429
      %3431 = vmatmul.bf16.gmra.mxu0 %v3383
      %v3432 = vpop.f32.mrf.mxu0
      %v3433 = vadd.f32 0.0, %v3432
      %v3434 = vpop.f32.mrf.mxu0
      %v3435 = vadd.f32 0.0, %v3434
      %3436 = vdwg.mxu0
      %v3437 = vld [vmem:[%s7] sm:$0x1]
      %v3439 = vperm.slane %v3437, 0
      %v3441 = vmul.f32 %v3398, %v3439
      %v3442 = vmul.f32 %v3400, %v3439
      %v3443 = vmul.f32 %v3403, %v3439
      %v3444 = vmul.f32 %v3405, %v3439
      %v3445 = vmul.f32 %v3408, %v3439
      %v3446 = vmul.f32 %v3410, %v3439
      %v3447 = vmul.f32 %v3413, %v3439
      %v3448 = vmul.f32 %v3415, %v3439
      %v3449 = vmul.f32 %v3418, %v3439
      %v3450 = vmul.f32 %v3420, %v3439
      %v3451 = vmul.f32 %v3423, %v3439
      %v3452 = vmul.f32 %v3425, %v3439
      %v3453 = vmul.f32 %v3428, %v3439
      %v3454 = vmul.f32 %v3430, %v3439
      %v3455 = vmul.f32 %v3433, %v3439
      %v3456 = vmul.f32 %v3435, %v3439
      %v3457 = vld [vmem:[%s8] sm:$0x1]
      %v3459 = vperm.slane %v3457, 0
      %v3461 = vadd.f32 %v3441, %v3459
      %v3462 = vadd.f32 %v3442, %v3459
      %v3463 = vadd.f32 %v3443, %v3459
      %v3464 = vadd.f32 %v3444, %v3459
      %v3465 = vadd.f32 %v3445, %v3459
      %v3466 = vadd.f32 %v3446, %v3459
      %v3467 = vadd.f32 %v3447, %v3459
      %v3468 = vadd.f32 %v3448, %v3459
      %v3469 = vadd.f32 %v3449, %v3459
      %v3470 = vadd.f32 %v3450, %v3459
      %v3471 = vadd.f32 %v3451, %v3459
      %v3472 = vadd.f32 %v3452, %v3459
      %v3473 = vadd.f32 %v3453, %v3459
      %v3474 = vadd.f32 %v3454, %v3459
      %v3475 = vadd.f32 %v3455, %v3459
      %v3476 = vadd.f32 %v3456, %v3459
      %v3477 = vmul.f32 %v3461, 0.5
      %v3478 = vmul.f32 %v3462, 0.5
      %v3479 = vmul.f32 %v3463, 0.5
      %v3480 = vmul.f32 %v3464, 0.5
      %v3481 = vmul.f32 %v3465, 0.5
      %v3482 = vmul.f32 %v3466, 0.5
      %v3483 = vmul.f32 %v3467, 0.5
      %v3484 = vmul.f32 %v3468, 0.5
      %v3485 = vmul.f32 %v3469, 0.5
      %v3486 = vmul.f32 %v3470, 0.5
      %v3487 = vmul.f32 %v3471, 0.5
      %v3488 = vmul.f32 %v3472, 0.5
      %v3489 = vmul.f32 %v3473, 0.5
      %v3490 = vmul.f32 %v3474, 0.5
      %v3491 = vmul.f32 %v3475, 0.5
      %v3492 = vmul.f32 %v3476, 0.5
      %v3493 = vtanh.pop %v3477
      %v3494 = vtanh.pop %v3478
      %v3495 = vtanh.pop %v3479
      %v3496 = vtanh.pop %v3480
      %v3497 = vtanh.pop %v3481
      %v3498 = vtanh.pop %v3482
      %v3499 = vtanh.pop %v3483
      %v3500 = vtanh.pop %v3484
      %v3501 = vtanh.pop %v3485
      %v3502 = vtanh.pop %v3486
      %v3503 = vtanh.pop %v3487
      %v3504 = vtanh.pop %v3488
      %v3505 = vtanh.pop %v3489
      %v3506 = vtanh.pop %v3490
      %v3507 = vtanh.pop %v3491
      %v3508 = vtanh.pop %v3492
      %v3509 = vmul.f32 %v3493, 0.5
      %v3510 = vmul.f32 %v3494, 0.5
      %v3511 = vmul.f32 %v3495, 0.5
      %v3512 = vmul.f32 %v3496, 0.5
      %v3513 = vmul.f32 %v3497, 0.5
      %v3514 = vmul.f32 %v3498, 0.5
      %v3515 = vmul.f32 %v3499, 0.5
      %v3516 = vmul.f32 %v3500, 0.5
      %v3517 = vmul.f32 %v3501, 0.5
      %v3518 = vmul.f32 %v3502, 0.5
      %v3519 = vmul.f32 %v3503, 0.5
      %v3520 = vmul.f32 %v3504, 0.5
      %v3521 = vmul.f32 %v3505, 0.5
      %v3522 = vmul.f32 %v3506, 0.5
      %v3523 = vmul.f32 %v3507, 0.5
      %v3524 = vmul.f32 %v3508, 0.5
      %v3525 = vadd.f32 %v3509, 0.5
      %v3526 = vadd.f32 %v3510, 0.5
      %v3527 = vadd.f32 %v3511, 0.5
      %v3528 = vadd.f32 %v3512, 0.5
      %v3529 = vadd.f32 %v3513, 0.5
      %v3530 = vadd.f32 %v3514, 0.5
      %v3531 = vadd.f32 %v3515, 0.5
      %v3532 = vadd.f32 %v3516, 0.5
      %v3533 = vadd.f32 %v3517, 0.5
      %v3534 = vadd.f32 %v3518, 0.5
      %v3535 = vadd.f32 %v3519, 0.5
      %v3536 = vadd.f32 %v3520, 0.5
      %v3537 = vadd.f32 %v3521, 0.5
      %v3538 = vadd.f32 %v3522, 0.5
      %v3539 = vadd.f32 %v3523, 0.5
      %v3540 = vadd.f32 %v3524, 0.5
      %v3541 = vmul.f32 %v3461, %v3525
      %v3542 = vmul.f32 %v3462, %v3526
      %v3543 = vmul.f32 %v3463, %v3527
      %v3544 = vmul.f32 %v3464, %v3528
      %v3545 = vmul.f32 %v3465, %v3529
      %v3546 = vmul.f32 %v3466, %v3530
      %v3547 = vmul.f32 %v3467, %v3531
      %v3548 = vmul.f32 %v3468, %v3532
      %v3549 = vmul.f32 %v3469, %v3533
      %v3550 = vmul.f32 %v3470, %v3534
      %v3551 = vmul.f32 %v3471, %v3535
      %v3552 = vmul.f32 %v3472, %v3536
      %v3553 = vmul.f32 %v3473, %v3537
      %v3554 = vmul.f32 %v3474, %v3538
      %v3555 = vmul.f32 %v3475, %v3539
      %v3556 = vmul.f32 %v3476, %v3540
      %v3557 = vunpack.c.l.bf16 %v503
      %v3558 = vunpack.c.l.bf16 %v504
      %v3559 = vunpack.c.l.bf16 %v505
      %v3560 = vunpack.c.l.bf16 %v506
      %v3561 = vunpack.c.l.bf16 %v507
      %v3562 = vunpack.c.l.bf16 %v508
      %v3563 = vunpack.c.l.bf16 %v509
      %v3564 = vunpack.c.l.bf16 %v510
      %v3565 = vunpack.c.l.bf16 %v511
      %v3566 = vunpack.c.l.bf16 %v512
      %v3567 = vunpack.c.l.bf16 %v513
      %v3568 = vunpack.c.l.bf16 %v514
      %v3569 = vunpack.c.l.bf16 %v515
      %v3570 = vunpack.c.l.bf16 %v516
      %v3571 = vunpack.c.l.bf16 %v517
      %v3572 = vunpack.c.l.bf16 %v518
      %v3573 = vadd.f32 %v3541, %v3557
      %v3574 = vadd.f32 %v3542, %v3558
      %v3575 = vadd.f32 %v3543, %v3559
      %v3576 = vadd.f32 %v3544, %v3560
      %v3577 = vadd.f32 %v3545, %v3561
      %v3578 = vadd.f32 %v3546, %v3562
      %v3579 = vadd.f32 %v3547, %v3563
      %v3580 = vadd.f32 %v3548, %v3564
      %v3581 = vadd.f32 %v3549, %v3565
      %v3582 = vadd.f32 %v3550, %v3566
      %v3583 = vadd.f32 %v3551, %v3567
      %v3584 = vadd.f32 %v3552, %v3568
      %v3585 = vadd.f32 %v3553, %v3569
      %v3586 = vadd.f32 %v3554, %v3570
      %v3587 = vadd.f32 %v3555, %v3571
      %v3588 = vadd.f32 %v3556, %v3572
      %v3589 = vpack.c.bf16 %v3573, %v3573
      %v3590 = vpack.c.bf16 %v3574, %v3574
      %v3591 = vpack.c.bf16 %v3575, %v3575
      %v3592 = vpack.c.bf16 %v3576, %v3576
      %v3593 = vpack.c.bf16 %v3577, %v3577
      %v3594 = vpack.c.bf16 %v3578, %v3578
      %v3595 = vpack.c.bf16 %v3579, %v3579
      %v3596 = vpack.c.bf16 %v3580, %v3580
      %v3597 = vpack.c.bf16 %v3581, %v3581
      %v3598 = vpack.c.bf16 %v3582, %v3582
      %v3599 = vpack.c.bf16 %v3583, %v3583
      %v3600 = vpack.c.bf16 %v3584, %v3584
      %v3601 = vpack.c.bf16 %v3585, %v3585
      %v3602 = vpack.c.bf16 %v3586, %v3586
      %v3603 = vpack.c.bf16 %v3587, %v3587
      %v3604 = vpack.c.bf16 %v3588, %v3588
      %3605 = vst.msk [vmem:[%s496] sm:$0xf] %vm1243, %v3589
      %3606 = vst.msk [vmem:[%s496 + $0x4] sm:$0xf] %vm1243, %v3590
      %3607 = vst.msk [vmem:[%s496 + $0x8] sm:$0xf] %vm1243, %v3591
      %3608 = vst.msk [vmem:[%s496 + $0xc] sm:$0xf] %vm1243, %v3592
      %3609 = vst.msk [vmem:[%s496 + $0x10] sm:$0xf] %vm1243, %v3593
      %3610 = vst.msk [vmem:[%s496 + $0x14] sm:$0xf] %vm1243, %v3594
      %3611 = vst.msk [vmem:[%s496 + $0x18] sm:$0xf] %vm1243, %v3595
      %3612 = vst.msk [vmem:[%s496 + $0x1c] sm:$0xf] %vm1243, %v3596
      %3613 = vst.msk [vmem:[%s496 + $0x20] sm:$0xf] %vm1243, %v3597
      %3614 = vst.msk [vmem:[%s496 + $0x24] sm:$0xf] %vm1243, %v3598
      %3615 = vst.msk [vmem:[%s496 + $0x28] sm:$0xf] %vm1243, %v3599
      %3616 = vst.msk [vmem:[%s496 + $0x2c] sm:$0xf] %vm1243, %v3600
      %3617 = vst.msk [vmem:[%s496 + $0x30] sm:$0xf] %vm1243, %v3601
      %3618 = vst.msk [vmem:[%s496 + $0x34] sm:$0xf] %vm1243, %v3602
      %3619 = vst.msk [vmem:[%s496 + $0x38] sm:$0xf] %vm1243, %v3603
      %3620 = vst.msk [vmem:[%s496 + $0x3c] sm:$0xf] %vm1243, %v3604
      %3621 = vst.msk [vmem:[%s496] sm:$0xf] %vm1818, %v503
      %3622 = vst.msk [vmem:[%s496 + $0x4] sm:$0xf] %vm1818, %v504
      %3623 = vst.msk [vmem:[%s496 + $0x8] sm:$0xf] %vm1818, %v505
      %3624 = vst.msk [vmem:[%s496 + $0xc] sm:$0xf] %vm1818, %v506
      %3625 = vst.msk [vmem:[%s496 + $0x10] sm:$0xf] %vm1818, %v507
      %3626 = vst.msk [vmem:[%s496 + $0x14] sm:$0xf] %vm1818, %v508
      %3627 = vst.msk [vmem:[%s496 + $0x18] sm:$0xf] %vm1818, %v509
      %3628 = vst.msk [vmem:[%s496 + $0x1c] sm:$0xf] %vm1818, %v510
      %3629 = vst.msk [vmem:[%s496 + $0x20] sm:$0xf] %vm1818, %v511
      %3630 = vst.msk [vmem:[%s496 + $0x24] sm:$0xf] %vm1818, %v512
      %3631 = vst.msk [vmem:[%s496 + $0x28] sm:$0xf] %vm1818, %v513
      %3632 = vst.msk [vmem:[%s496 + $0x2c] sm:$0xf] %vm1818, %v514
      %3633 = vst.msk [vmem:[%s496 + $0x30] sm:$0xf] %vm1818, %v515
      %3634 = vst.msk [vmem:[%s496 + $0x34] sm:$0xf] %vm1818, %v516
      %3635 = vst.msk [vmem:[%s496 + $0x38] sm:$0xf] %vm1818, %v517
      %3636 = vst.msk [vmem:[%s496 + $0x3c] sm:$0xf] %vm1818, %v518
      %s3637 = smul.u32 %s24, 2
      %s3638 = sadd.s32 %s3637, %s25
      %s3639 = smul.u32 16, %s3638
      %p3640 = scmp.lt.s32.totalorder %s3639, 63
      %s3641 = scalar_select %p3640, %s3639, 63
      %s3642 = smul.addr %s3641, 4
      %s3643 = scalar_lea.vmem %s9, %s3642
      // Predicated region
      $region57: #{autoshape_forward.4} parent=55 // pred_check
        %p3644 = pneg %p286
      $region58: #{autoshape_forward.4} parent=55 // pred_check_branch
        %3646 = sbr.rel (%p3644) target = $region60
      $region59: #{autoshape_forward.4} parent=55 // pred_region
        %s3647 = smul.u32 %s24, 2
        %s3648 = sadd.s32 %s3647, %s25
        %s3649 = smul.u32 16, %s3648
      $region60: #{autoshape_forward.4} parent=55 // pred_fallthru
        _
    $region56: #{autoshape_forward.4} parent=5 // pred_fallthru
      _
    %p3650 = scmp.le.s32.totalorder 2, %s15
    // Predicated region
    $region61: #{autoshape_forward.4} parent=5 // pred_check
      %p3651 = pneg %p3650
    $region62: #{autoshape_forward.4} parent=5 // pred_check_branch
      %3653 = sbr.rel (%p3651) target = $region64
    $region63: #{autoshape_forward.4} parent=5 // pred_region
      %s3654 = ssub.s32 %s15, 2
      // Predicated region
      $region65: #{autoshape_forward.4} parent=63 // pred_check
        %p3655 = pneg %p292
      $region66: #{autoshape_forward.4} parent=63 // pred_check_branch
        %3657 = sbr.rel (%p3655) target = $region68
      $region67: #{autoshape_forward.4} parent=63 // pred_region
        %s3658 = smul.u32 %s26, 2
        %s3659 = sadd.s32 %s3658, %s27
        %s3660 = smul.u32 16, %s3659
        %p3661 = scmp.lt.s32.totalorder %s3660, 63
        %s3662 = scalar_select %p3661, %s3660, 63
        %s3663 = smul.addr %s3662, 4
        %s3664 = scalar_lea.vmem %s9, %s3663
      $region68: #{autoshape_forward.4} parent=63 // pred_fallthru
        _
    $region64: #{autoshape_forward.4} parent=5 // pred_fallthru
      _
  $region6: #{autoshape_forward.4} parent=0 // loop_footer
    %s19 = sadd.s32 1, %s15
  $region7: #{autoshape_forward.4} parent=0 // loop_footer_branch
    %14 = sbr.rel target = $region3
  $region8: #{autoshape_forward.4} parent=0 // loop_exit
    _

</llo_original>
